<compile_context>
chip_gen: v7x
topology: tpu7x:2x2x1
jax: 0.10.0
libtpu: 0.0.40
codegen_flags: <defaults>
</compile_context>

<pallas_src>
import jax
import jax.numpy as jnp
from jax.experimental import pallas as pl
from jax.experimental.pallas import tpu as pltpu

# ----------------------------- "cfg" ----------------------------------------
NUM_STREAM = 4
FILTER1, FILTER2, FILTER3, FILTER4 = 8, 16, 16, 8
SEQ_LEN = 16
BATCH = 2
FC1, FC2, FC3 = 64, 32, 16
NUM_CLASSES = 5
FEATDIM_CONCAT = NUM_STREAM * FILTER4 * SEQ_LEN
BN_EPS = 1e-5


# ----------------------------- fused kernel ---------------------------------
def mscnn_kernel(x_ref, sp_ref, sn_ref,
                 w1_ref, s1_ref, b1_ref,
                 w2_ref, s2_ref, b2_ref,
                 w3_ref, s3_ref, b3_ref,
                 w4_ref, s4_ref, b4_ref,
                 fw1_ref, fb1_ref, fw2_ref, fb2_ref,
                 fw3_ref, fb3_ref, fwo_ref, fbo_ref,
                 o_ref, xbuf_ref, feat_ref):
    # x_ref:   [B, 1, ns, L]                (original torch layout)
    # wK_ref:  block-diag conv weights      k=3 -> [3, ns*F, ns*C], k=1 -> [ns*F, ns*C]
    # sK/bK:   folded BN scale/bias         [ns*F, 1]
    # sp/sn:   block-diag +-1 shift mats    [B*L, B*L]
    # fw*/fb*: FC weights (BN scale folded) / biases
    # o_ref:   [B, num_classes]
    # xbuf:    VMEM scratch [ns, B*L]       packed conv input
    # feat:    VMEM scratch [B, ns*f4*L]    concatenated feature (torch order)
    B = x_ref.shape[0]
    L = x_ref.shape[3]

    def mm(a, b):
        return jnp.dot(a, b, preferred_element_type=jnp.float32)

    # ---- pack input: [B, 1, ns, L] -> [ns, B*L]  (lane k = b*L + l) ----
    for b in range(B):
        xbuf_ref[:, b * L:(b + 1) * L] = x_ref[b, 0]
    x0 = xbuf_ref[...]                                     # [ns, B*L]

    sp = sp_ref[...]                                       # shift to "previous" position
    sn = sn_ref[...]                                       # shift to "next" position

    def conv3(h, w_ref, s_ref, bias_ref):                  # k=3, pad=1, stride=1
        y = mm(w_ref[0], mm(h, sp)) + mm(w_ref[1], h) + mm(w_ref[2], mm(h, sn))
        return jnp.maximum(y * s_ref[...] + bias_ref[...], 0.0)

    def conv1(h, w_ref, s_ref, bias_ref):                  # k=1
        return jnp.maximum(mm(w_ref[...], h) * s_ref[...] + bias_ref[...], 0.0)

    h1 = conv3(x0, w1_ref, s1_ref, b1_ref)                 # [ns*f1, B*L]
    h2 = conv3(h1, w2_ref, s2_ref, b2_ref)                 # [ns*f2, B*L]
    h3 = conv1(h2, w3_ref, s3_ref, b3_ref)                 # [ns*f3, B*L]
    h4 = conv1(h3, w4_ref, s4_ref, b4_ref)                 # [ns*f4, B*L]
    # Dropout: identity at inference.

    # ---- feature concat in torch order: feat[b, r*L + l] = h4[r, b*L + l] ----
    # (row r = s*f4 + f, so feat index = s*f4*L + f*L + l, exactly view+cat order)
    R = h4.shape[0]
    for r in range(R):
        for b in range(B):
            feat_ref[b:b + 1, r * L:(r + 1) * L] = h4[r:r + 1, b * L:(b + 1) * L]

    feat = feat_ref[...]                                   # [B, ns*f4*L]
    g = jnp.maximum(mm(feat, fw1_ref[...]) + fb1_ref[...], 0.0)
    g = jnp.maximum(mm(g, fw2_ref[...]) + fb2_ref[...], 0.0)
    g = jnp.maximum(mm(g, fw3_ref[...]) + fb3_ref[...], 0.0)
    o_ref[...] = mm(g, fwo_ref[...]) + fbo_ref[...]


def _mscnn_forward(x, kparams):
    B = x.shape[0]
    ns, L = x.shape[2], x.shape[3]
    f4 = kparams[11].shape[0] // ns          # w4bd: [ns*f4, ns*f3]
    nc = kparams[-1].shape[1]
    return pl.pallas_call(
        mscnn_kernel,
        out_shape=jax.ShapeDtypeStruct((B, nc), jnp.float32),
        scratch_shapes=[
            pltpu.VMEM((ns, B * L), jnp.float32),        # packed conv input
            pltpu.VMEM((B, ns * f4 * L), jnp.float32),   # concatenated feature
        ],
    )(x, *kparams)


mscnn_forward = jax.jit(_mscnn_forward)


# ------------------------ host-side parameter packing -----------------------
def _block_diag(blocks):
    rows = sum(b.shape[0] for b in blocks)
    cols = sum(b.shape[1] for b in blocks)
    out = jnp.zeros((rows, cols), jnp.float32)
    r = c = 0
    for blk in blocks:
        out = out.at[r:r + blk.shape[0], c:c + blk.shape[1]].set(blk)
        r += blk.shape[0]
        c += blk.shape[1]
    return out


def _shift_mats(batch, seq):
    # lanes k = b*seq + l ; shifts never cross a per-batch sequence boundary
    k = batch * seq
    i = jnp.arange(k)[:, None]
    j = jnp.arange(k)[None, :]
    same = (i // seq) == (j // seq)
    s_prev = ((j == i + 1) & same).astype(jnp.float32)   # (h @ s_prev)[:, l] = h[:, l-1]
    s_next = ((j == i - 1) & same).astype(jnp.float32)   # (h @ s_next)[:, l] = h[:, l+1]
    return s_prev, s_next


def pack_params(conv_params, fc_params, batch, seq):
    (w1, s1, b1, w2, s2, b2, w3, s3, b3, w4, s4, b4) = conv_params
    (fw1, fs1, fb1, fw2, fs2, fb2, fw3, fs3, fb3, fwo, fbo) = fc_params
    ns = w1.shape[0]

    def bd3(w):   # [ns, 3, F, C] -> [3, ns*F, ns*C]
        return jnp.stack([_block_diag([w[s, t] for s in range(ns)]) for t in range(3)])

    def bd1(w):   # [ns, F, C] -> [ns*F, ns*C]
        return _block_diag([w[s] for s in range(ns)])

    def col(v):   # [ns, F, 1] -> [ns*F, 1]
        return v.reshape(-1, 1)

    sp, sn = _shift_mats(batch, seq)
    return (sp, sn,
            bd3(w1), col(s1), col(b1),
            bd3(w2), col(s2), col(b2),
            bd1(w3), col(s3), col(b3),
            bd1(w4), col(s4), col(b4),
            fw1 * fs1, fb1, fw2 * fs2, fb2, fw3 * fs3, fb3, fwo, fbo)


# --------------------------- parameter init ---------------------------------
def init_conv_stack(key, cin, cout, ksize):
    kw, kb, kg, kbe, km, kv = jax.random.split(key, 6)
    w = jax.random.normal(kw, (NUM_STREAM, ksize, cout, cin), jnp.float32) / jnp.sqrt(cin * ksize)
    b = 0.1 * jax.random.normal(kb, (NUM_STREAM, cout), jnp.float32)
    gamma = jax.random.uniform(kg, (NUM_STREAM, cout), jnp.float32, 0.5, 1.5)
    beta = 0.1 * jax.random.normal(kbe, (NUM_STREAM, cout), jnp.float32)
    rmean = 0.1 * jax.random.normal(km, (NUM_STREAM, cout), jnp.float32)
    rvar = jax.random.uniform(kv, (NUM_STREAM, cout), jnp.float32, 0.5, 1.5)
    scale = gamma / jnp.sqrt(rvar + BN_EPS)
    bias = (b - rmean) * scale + beta            # fold conv bias + BN(eval)
    if ksize == 1:
        w = w[:, 0]                              # [ns, cout, cin]
    return w, scale[:, :, None], bias[:, :, None]


def init_fc(key, fin, fout, with_bn):
    kw, kb, kg, kbe, km, kv = jax.random.split(key, 6)
    w = jax.random.normal(kw, (fin, fout), jnp.float32) / jnp.sqrt(fin)
    b = 0.1 * jax.random.normal(kb, (fout,), jnp.float32)
    if not with_bn:
        return w, b[None, :]
    gamma = jax.random.uniform(kg, (fout,), jnp.float32, 0.5, 1.5)
    beta = 0.1 * jax.random.normal(kbe, (fout,), jnp.float32)
    rmean = 0.1 * jax.random.normal(km, (fout,), jnp.float32)
    rvar = jax.random.uniform(kv, (fout,), jnp.float32, 0.5, 1.5)
    scale = gamma / jnp.sqrt(rvar + BN_EPS)
    bias = (b - rmean) * scale + beta
    return w, scale[None, :], bias[None, :]


# ------------------------- plain-JAX reference ------------------------------
def reference_forward(x, conv_params, fc_params):
    (w1, s1, b1, w2, s2, b2, w3, s3, b3, w4, s4, b4) = conv_params
    (fw1, fs1, fb1, fw2, fs2, fb2, fw3, fs3, fb3, fwo, fbo) = fc_params
    B = x.shape[0]

    def c3(h, w):  # h: [B, C, L], w: [3, F, C]
        hp = jnp.pad(h, ((0, 0), (0, 0), (1, 1)))
        return (jnp.einsum('fc,bcl->bfl', w[0], hp[:, :, :-2])
                + jnp.einsum('fc,bcl->bfl', w[1], hp[:, :, 1:-1])
                + jnp.einsum('fc,bcl->bfl', w[2], hp[:, :, 2:]))

    outs = []
    for s in range(NUM_STREAM):
        h = x[:, :, s, :]                                    # [B, 1, L]
        h = jnp.maximum(c3(h, w1[s]) * s1[s][None] + b1[s][None], 0.0)
        h = jnp.maximum(c3(h, w2[s]) * s2[s][None] + b2[s][None], 0.0)
        h = jnp.maximum(jnp.einsum('fc,bcl->bfl', w3[s], h) * s3[s][None] + b3[s][None], 0.0)
        h = jnp.maximum(jnp.einsum('fc,bcl->bfl', w4[s], h) * s4[s][None] + b4[s][None], 0.0)
        outs.append(h.reshape(B, -1))
    feat = jnp.concatenate(outs, axis=1)
    h = jnp.maximum(feat @ fw1 * fs1 + fb1, 0.0)
    h = jnp.maximum(h @ fw2 * fs2 + fb2, 0.0)
    h = jnp.maximum(h @ fw3 * fs3 + fb3, 0.0)
    return h @ fwo + fbo


# --------------------------------- main --------------------------------------
if __name__ == "__main__":
    root = jax.random.PRNGKey(0)
    kx, k1, k2, k3, k4, kf1, kf2, kf3, ko = jax.random.split(root, 9)

    x = jax.random.normal(kx, (BATCH, 1, NUM_STREAM, SEQ_LEN), jnp.float32)

    conv_params = (*init_conv_stack(k1, 1, FILTER1, 3),
                   *init_conv_stack(k2, FILTER1, FILTER2, 3),
                   *init_conv_stack(k3, FILTER2, FILTER3, 1),
                   *init_conv_stack(k4, FILTER3, FILTER4, 1))
    fc_params = (*init_fc(kf1, FEATDIM_CONCAT, FC1, True),
                 *init_fc(kf2, FC1, FC2, True),
                 *init_fc(kf3, FC2, FC3, True),
                 *init_fc(ko, FC3, NUM_CLASSES, False))

    kparams = pack_params(conv_params, fc_params, BATCH, SEQ_LEN)

    out = jax.block_until_ready(mscnn_forward(x, kparams))
    ref = reference_forward(x, conv_params, fc_params)

    assert out.shape == (BATCH, NUM_CLASSES), out.shape
    assert jnp.allclose(out, ref, rtol=1e-2, atol=1e-2), (out, ref)
    print("KERNEL_OK")
</pallas_src>

<mosaic_0001>
module attributes {stable_mosaic.version = 11 : i64} {
  func.func @mscnn_kernel(%arg0: memref<2x1x4x16xf32, #tpu.memory_space<vmem>>, %arg1: memref<32x32xf32, #tpu.memory_space<vmem>>, %arg2: memref<32x32xf32, #tpu.memory_space<vmem>>, %arg3: memref<3x32x4xf32, #tpu.memory_space<vmem>>, %arg4: memref<32x1xf32, #tpu.memory_space<vmem>>, %arg5: memref<32x1xf32, #tpu.memory_space<vmem>>, %arg6: memref<3x64x32xf32, #tpu.memory_space<vmem>>, %arg7: memref<64x1xf32, #tpu.memory_space<vmem>>, %arg8: memref<64x1xf32, #tpu.memory_space<vmem>>, %arg9: memref<64x64xf32, #tpu.memory_space<vmem>>, %arg10: memref<64x1xf32, #tpu.memory_space<vmem>>, %arg11: memref<64x1xf32, #tpu.memory_space<vmem>>, %arg12: memref<32x64xf32, #tpu.memory_space<vmem>>, %arg13: memref<32x1xf32, #tpu.memory_space<vmem>>, %arg14: memref<32x1xf32, #tpu.memory_space<vmem>>, %arg15: memref<512x64xf32, #tpu.memory_space<vmem>>, %arg16: memref<1x64xf32, #tpu.memory_space<vmem>>, %arg17: memref<64x32xf32, #tpu.memory_space<vmem>>, %arg18: memref<1x32xf32, #tpu.memory_space<vmem>>, %arg19: memref<32x16xf32, #tpu.memory_space<vmem>>, %arg20: memref<1x16xf32, #tpu.memory_space<vmem>>, %arg21: memref<16x5xf32, #tpu.memory_space<vmem>>, %arg22: memref<1x5xf32, #tpu.memory_space<vmem>>, %arg23: memref<2x5xf32, #tpu.memory_space<vmem>>, %arg24: memref<4x32xf32, #tpu.memory_space<vmem>>, %arg25: memref<2x512xf32, #tpu.memory_space<vmem>>) attributes {dimension_semantics = [], scalar_prefetch = 0 : i64, scratch_operands = 2 : i64, tpu.core_type = #tpu.core_type<tc>} {
    %c0 = arith.constant 0 : index
    %c0_0 = arith.constant 0 : index
    %c0_1 = arith.constant 0 : index
    %c0_2 = arith.constant 0 : index
    %0 = vector.load %arg0[%c0, %c0_0, %c0_1, %c0_2] : memref<2x1x4x16xf32, #tpu.memory_space<vmem>>, vector<1x1x4x16xf32>
    %1 = vector.shape_cast %0 : vector<1x1x4x16xf32> to vector<4x16xf32>
    %c0_3 = arith.constant 0 : index
    %c0_4 = arith.constant 0 : index
    %2 = vector.load %arg24[%c0_3, %c0_4] : memref<4x32xf32, #tpu.memory_space<vmem>>, vector<4x16xf32>
    tpu.vector_store %arg24[%c0_3, %c0_4], %1 {strides = array<i32>} : memref<4x32xf32, #tpu.memory_space<vmem>>, vector<4x16xf32>,
    %c1 = arith.constant 1 : index
    %c0_5 = arith.constant 0 : index
    %c0_6 = arith.constant 0 : index
    %c0_7 = arith.constant 0 : index
    %3 = vector.load %arg0[%c1, %c0_5, %c0_6, %c0_7] : memref<2x1x4x16xf32, #tpu.memory_space<vmem>>, vector<1x1x4x16xf32>
    %4 = vector.shape_cast %3 : vector<1x1x4x16xf32> to vector<4x16xf32>
    %c0_8 = arith.constant 0 : index
    %c16 = arith.constant 16 : index
    %5 = vector.load %arg24[%c0_8, %c16] : memref<4x32xf32, #tpu.memory_space<vmem>>, vector<4x16xf32>
    tpu.vector_store %arg24[%c0_8, %c16], %4 {strides = array<i32>} : memref<4x32xf32, #tpu.memory_space<vmem>>, vector<4x16xf32>,
    %c0_9 = arith.constant 0 : index
    %c0_10 = arith.constant 0 : index
    %6 = vector.load %arg24[%c0_9, %c0_10] : memref<4x32xf32, #tpu.memory_space<vmem>>, vector<4x32xf32>
    %c0_11 = arith.constant 0 : index
    %c0_12 = arith.constant 0 : index
    %7 = vector.load %arg1[%c0_11, %c0_12] : memref<32x32xf32, #tpu.memory_space<vmem>>, vector<32x32xf32>
    %c0_13 = arith.constant 0 : index
    %c0_14 = arith.constant 0 : index
    %8 = vector.load %arg2[%c0_13, %c0_14] : memref<32x32xf32, #tpu.memory_space<vmem>>, vector<32x32xf32>
    %c0_15 = arith.constant 0 : index
    %c0_16 = arith.constant 0 : index
    %c0_17 = arith.constant 0 : index
    %9 = vector.load %arg3[%c0_15, %c0_16, %c0_17] : memref<3x32x4xf32, #tpu.memory_space<vmem>>, vector<1x32x4xf32>
    %10 = vector.shape_cast %9 : vector<1x32x4xf32> to vector<32x4xf32>
    %cst = arith.constant dense<0.000000e+00> : vector<4x32xf32>
    %11 = tpu.matmul %6, %7, %cst {dimension_numbers = #tpu.dot_dimension_numbers<[1], [0], [0], [1], [0, 0, 1, 1], [], []>} : vector<4x32xf32>, vector<32x32xf32>, vector<4x32xf32> -> vector<4x32xf32>
    %cst_18 = arith.constant dense<0.000000e+00> : vector<32x32xf32>
    %12 = tpu.matmul %10, %11, %cst_18 {dimension_numbers = #tpu.dot_dimension_numbers<[1], [0], [0], [1], [0, 0, 1, 1], [], []>} : vector<32x4xf32>, vector<4x32xf32>, vector<32x32xf32> -> vector<32x32xf32>
    %c1_19 = arith.constant 1 : index
    %c0_20 = arith.constant 0 : index
    %c0_21 = arith.constant 0 : index
    %13 = vector.load %arg3[%c1_19, %c0_20, %c0_21] : memref<3x32x4xf32, #tpu.memory_space<vmem>>, vector<1x32x4xf32>
    %14 = vector.shape_cast %13 : vector<1x32x4xf32> to vector<32x4xf32>
    %cst_22 = arith.constant dense<0.000000e+00> : vector<32x32xf32>
    %15 = tpu.matmul %14, %6, %cst_22 {dimension_numbers = #tpu.dot_dimension_numbers<[1], [0], [0], [1], [0, 0, 1, 1], [], []>} : vector<32x4xf32>, vector<4x32xf32>, vector<32x32xf32> -> vector<32x32xf32>
    %16 = arith.addf %12, %15 : vector<32x32xf32>
    %c2 = arith.constant 2 : index
    %c0_23 = arith.constant 0 : index
    %c0_24 = arith.constant 0 : index
    %17 = vector.load %arg3[%c2, %c0_23, %c0_24] : memref<3x32x4xf32, #tpu.memory_space<vmem>>, vector<1x32x4xf32>
    %18 = vector.shape_cast %17 : vector<1x32x4xf32> to vector<32x4xf32>
    %cst_25 = arith.constant dense<0.000000e+00> : vector<4x32xf32>
    %19 = tpu.matmul %6, %8, %cst_25 {dimension_numbers = #tpu.dot_dimension_numbers<[1], [0], [0], [1], [0, 0, 1, 1], [], []>} : vector<4x32xf32>, vector<32x32xf32>, vector<4x32xf32> -> vector<4x32xf32>
    %cst_26 = arith.constant dense<0.000000e+00> : vector<32x32xf32>
    %20 = tpu.matmul %18, %19, %cst_26 {dimension_numbers = #tpu.dot_dimension_numbers<[1], [0], [0], [1], [0, 0, 1, 1], [], []>} : vector<32x4xf32>, vector<4x32xf32>, vector<32x32xf32> -> vector<32x32xf32>
    %21 = arith.addf %16, %20 : vector<32x32xf32>
    %c0_27 = arith.constant 0 : index
    %c0_28 = arith.constant 0 : index
    %22 = vector.load %arg4[%c0_27, %c0_28] : memref<32x1xf32, #tpu.memory_space<vmem>>, vector<32x1xf32>
    %23 = vector.broadcast %22 : vector<32x1xf32> to vector<32x32xf32>
    %24 = arith.mulf %21, %23 : vector<32x32xf32>
    %c0_29 = arith.constant 0 : index
    %c0_30 = arith.constant 0 : index
    %25 = vector.load %arg5[%c0_29, %c0_30] : memref<32x1xf32, #tpu.memory_space<vmem>>, vector<32x1xf32>
    %26 = vector.broadcast %25 : vector<32x1xf32> to vector<32x32xf32>
    %27 = arith.addf %24, %26 : vector<32x32xf32>
    %cst_31 = arith.constant 0.000000e+00 : f32
    %28 = vector.broadcast %cst_31 : f32 to vector<32x32xf32>
    %29 = arith.maximumf %27, %28 : vector<32x32xf32>
    %c0_32 = arith.constant 0 : index
    %c0_33 = arith.constant 0 : index
    %c0_34 = arith.constant 0 : index
    %30 = vector.load %arg6[%c0_32, %c0_33, %c0_34] : memref<3x64x32xf32, #tpu.memory_space<vmem>>, vector<1x64x32xf32>
    %31 = vector.shape_cast %30 : vector<1x64x32xf32> to vector<64x32xf32>
    %cst_35 = arith.constant dense<0.000000e+00> : vector<32x32xf32>
    %32 = tpu.matmul %29, %7, %cst_35 {dimension_numbers = #tpu.dot_dimension_numbers<[1], [0], [0], [1], [0, 0, 1, 1], [], []>} : vector<32x32xf32>, vector<32x32xf32>, vector<32x32xf32> -> vector<32x32xf32>
    %cst_36 = arith.constant dense<0.000000e+00> : vector<64x32xf32>
    %33 = tpu.matmul %31, %32, %cst_36 {dimension_numbers = #tpu.dot_dimension_numbers<[1], [0], [0], [1], [0, 0, 1, 1], [], []>} : vector<64x32xf32>, vector<32x32xf32>, vector<64x32xf32> -> vector<64x32xf32>
    %c1_37 = arith.constant 1 : index
    %c0_38 = arith.constant 0 : index
    %c0_39 = arith.constant 0 : index
    %34 = vector.load %arg6[%c1_37, %c0_38, %c0_39] : memref<3x64x32xf32, #tpu.memory_space<vmem>>, vector<1x64x32xf32>
    %35 = vector.shape_cast %34 : vector<1x64x32xf32> to vector<64x32xf32>
    %cst_40 = arith.constant dense<0.000000e+00> : vector<64x32xf32>
    %36 = tpu.matmul %35, %29, %cst_40 {dimension_numbers = #tpu.dot_dimension_numbers<[1], [0], [0], [1], [0, 0, 1, 1], [], []>} : vector<64x32xf32>, vector<32x32xf32>, vector<64x32xf32> -> vector<64x32xf32>
    %37 = arith.addf %33, %36 : vector<64x32xf32>
    %c2_41 = arith.constant 2 : index
    %c0_42 = arith.constant 0 : index
    %c0_43 = arith.constant 0 : index
    %38 = vector.load %arg6[%c2_41, %c0_42, %c0_43] : memref<3x64x32xf32, #tpu.memory_space<vmem>>, vector<1x64x32xf32>
    %39 = vector.shape_cast %38 : vector<1x64x32xf32> to vector<64x32xf32>
    %cst_44 = arith.constant dense<0.000000e+00> : vector<32x32xf32>
    %40 = tpu.matmul %29, %8, %cst_44 {dimension_numbers = #tpu.dot_dimension_numbers<[1], [0], [0], [1], [0, 0, 1, 1], [], []>} : vector<32x32xf32>, vector<32x32xf32>, vector<32x32xf32> -> vector<32x32xf32>
    %cst_45 = arith.constant dense<0.000000e+00> : vector<64x32xf32>
    %41 = tpu.matmul %39, %40, %cst_45 {dimension_numbers = #tpu.dot_dimension_numbers<[1], [0], [0], [1], [0, 0, 1, 1], [], []>} : vector<64x32xf32>, vector<32x32xf32>, vector<64x32xf32> -> vector<64x32xf32>
    %42 = arith.addf %37, %41 : vector<64x32xf32>
    %c0_46 = arith.constant 0 : index
    %c0_47 = arith.constant 0 : index
    %43 = vector.load %arg7[%c0_46, %c0_47] : memref<64x1xf32, #tpu.memory_space<vmem>>, vector<64x1xf32>
    %44 = vector.broadcast %43 : vector<64x1xf32> to vector<64x32xf32>
    %45 = arith.mulf %42, %44 : vector<64x32xf32>
    %c0_48 = arith.constant 0 : index
    %c0_49 = arith.constant 0 : index
    %46 = vector.load %arg8[%c0_48, %c0_49] : memref<64x1xf32, #tpu.memory_space<vmem>>, vector<64x1xf32>
    %47 = vector.broadcast %46 : vector<64x1xf32> to vector<64x32xf32>
    %48 = arith.addf %45, %47 : vector<64x32xf32>
    %cst_50 = arith.constant 0.000000e+00 : f32
    %49 = vector.broadcast %cst_50 : f32 to vector<64x32xf32>
    %50 = arith.maximumf %48, %49 : vector<64x32xf32>
    %c0_51 = arith.constant 0 : index
    %c0_52 = arith.constant 0 : index
    %51 = vector.load %arg9[%c0_51, %c0_52] : memref<64x64xf32, #tpu.memory_space<vmem>>, vector<64x64xf32>
    %cst_53 = arith.constant dense<0.000000e+00> : vector<64x32xf32>
    %52 = tpu.matmul %51, %50, %cst_53 {dimension_numbers = #tpu.dot_dimension_numbers<[1], [0], [0], [1], [0, 0, 1, 1], [], []>} : vector<64x64xf32>, vector<64x32xf32>, vector<64x32xf32> -> vector<64x32xf32>
    %c0_54 = arith.constant 0 : index
    %c0_55 = arith.constant 0 : index
    %53 = vector.load %arg10[%c0_54, %c0_55] : memref<64x1xf32, #tpu.memory_space<vmem>>, vector<64x1xf32>
    %54 = vector.broadcast %53 : vector<64x1xf32> to vector<64x32xf32>
    %55 = arith.mulf %52, %54 : vector<64x32xf32>
    %c0_56 = arith.constant 0 : index
    %c0_57 = arith.constant 0 : index
    %56 = vector.load %arg11[%c0_56, %c0_57] : memref<64x1xf32, #tpu.memory_space<vmem>>, vector<64x1xf32>
    %57 = vector.broadcast %56 : vector<64x1xf32> to vector<64x32xf32>
    %58 = arith.addf %55, %57 : vector<64x32xf32>
    %cst_58 = arith.constant 0.000000e+00 : f32
    %59 = vector.broadcast %cst_58 : f32 to vector<64x32xf32>
    %60 = arith.maximumf %58, %59 : vector<64x32xf32>
    %c0_59 = arith.constant 0 : index
    %c0_60 = arith.constant 0 : index
    %61 = vector.load %arg12[%c0_59, %c0_60] : memref<32x64xf32, #tpu.memory_space<vmem>>, vector<32x64xf32>
    %cst_61 = arith.constant dense<0.000000e+00> : vector<32x32xf32>
    %62 = tpu.matmul %61, %60, %cst_61 {dimension_numbers = #tpu.dot_dimension_numbers<[1], [0], [0], [1], [0, 0, 1, 1], [], []>} : vector<32x64xf32>, vector<64x32xf32>, vector<32x32xf32> -> vector<32x32xf32>
    %c0_62 = arith.constant 0 : index
    %c0_63 = arith.constant 0 : index
    %63 = vector.load %arg13[%c0_62, %c0_63] : memref<32x1xf32, #tpu.memory_space<vmem>>, vector<32x1xf32>
    %64 = vector.broadcast %63 : vector<32x1xf32> to vector<32x32xf32>
    %65 = arith.mulf %62, %64 : vector<32x32xf32>
    %c0_64 = arith.constant 0 : index
    %c0_65 = arith.constant 0 : index
    %66 = vector.load %arg14[%c0_64, %c0_65] : memref<32x1xf32, #tpu.memory_space<vmem>>, vector<32x1xf32>
    %67 = vector.broadcast %66 : vector<32x1xf32> to vector<32x32xf32>
    %68 = arith.addf %65, %67 : vector<32x32xf32>
    %cst_66 = arith.constant 0.000000e+00 : f32
    %69 = vector.broadcast %cst_66 : f32 to vector<32x32xf32>
    %70 = arith.maximumf %68, %69 : vector<32x32xf32>
    %71 = vector.extract_strided_slice %70 {offsets = [0, 0], sizes = [1, 16], strides = [1, 1]} : vector<32x32xf32> to vector<1x16xf32>
    %c0_67 = arith.constant 0 : index
    %c0_68 = arith.constant 0 : index
    %72 = vector.load %arg25[%c0_67, %c0_68] : memref<2x512xf32, #tpu.memory_space<vmem>>, vector<1x16xf32>
    tpu.vector_store %arg25[%c0_67, %c0_68], %71 {strides = array<i32>} : memref<2x512xf32, #tpu.memory_space<vmem>>, vector<1x16xf32>,
    %73 = vector.extract_strided_slice %70 {offsets = [0, 16], sizes = [1, 16], strides = [1, 1]} : vector<32x32xf32> to vector<1x16xf32>
    %c1_69 = arith.constant 1 : index
    %c0_70 = arith.constant 0 : index
    %74 = vector.load %arg25[%c1_69, %c0_70] : memref<2x512xf32, #tpu.memory_space<vmem>>, vector<1x16xf32>
    tpu.vector_store %arg25[%c1_69, %c0_70], %73 {strides = array<i32>} : memref<2x512xf32, #tpu.memory_space<vmem>>, vector<1x16xf32>,
    %75 = vector.extract_strided_slice %70 {offsets = [1, 0], sizes = [1, 16], strides = [1, 1]} : vector<32x32xf32> to vector<1x16xf32>
    %c0_71 = arith.constant 0 : index
    %c16_72 = arith.constant 16 : index
    %76 = vector.load %arg25[%c0_71, %c16_72] : memref<2x512xf32, #tpu.memory_space<vmem>>, vector<1x16xf32>
    tpu.vector_store %arg25[%c0_71, %c16_72], %75 {strides = array<i32>} : memref<2x512xf32, #tpu.memory_space<vmem>>, vector<1x16xf32>,
    %77 = vector.extract_strided_slice %70 {offsets = [1, 16], sizes = [1, 16], strides = [1, 1]} : vector<32x32xf32> to vector<1x16xf32>
    %c1_73 = arith.constant 1 : index
    %c16_74 = arith.constant 16 : index
    %78 = vector.load %arg25[%c1_73, %c16_74] : memref<2x512xf32, #tpu.memory_space<vmem>>, vector<1x16xf32>
    tpu.vector_store %arg25[%c1_73, %c16_74], %77 {strides = array<i32>} : memref<2x512xf32, #tpu.memory_space<vmem>>, vector<1x16xf32>,
    %79 = vector.extract_strided_slice %70 {offsets = [2, 0], sizes = [1, 16], strides = [1, 1]} : vector<32x32xf32> to vector<1x16xf32>
    %c0_75 = arith.constant 0 : index
    %c32 = arith.constant 32 : index
    %80 = vector.load %arg25[%c0_75, %c32] : memref<2x512xf32, #tpu.memory_space<vmem>>, vector<1x16xf32>
    tpu.vector_store %arg25[%c0_75, %c32], %79 {strides = array<i32>} : memref<2x512xf32, #tpu.memory_space<vmem>>, vector<1x16xf32>,
    %81 = vector.extract_strided_slice %70 {offsets = [2, 16], sizes = [1, 16], strides = [1, 1]} : vector<32x32xf32> to vector<1x16xf32>
    %c1_76 = arith.constant 1 : index
    %c32_77 = arith.constant 32 : index
    %82 = vector.load %arg25[%c1_76, %c32_77] : memref<2x512xf32, #tpu.memory_space<vmem>>, vector<1x16xf32>
    tpu.vector_store %arg25[%c1_76, %c32_77], %81 {strides = array<i32>} : memref<2x512xf32, #tpu.memory_space<vmem>>, vector<1x16xf32>,
    %83 = vector.extract_strided_slice %70 {offsets = [3, 0], sizes = [1, 16], strides = [1, 1]} : vector<32x32xf32> to vector<1x16xf32>
    %c0_78 = arith.constant 0 : index
    %c48 = arith.constant 48 : index
    %84 = vector.load %arg25[%c0_78, %c48] : memref<2x512xf32, #tpu.memory_space<vmem>>, vector<1x16xf32>
    tpu.vector_store %arg25[%c0_78, %c48], %83 {strides = array<i32>} : memref<2x512xf32, #tpu.memory_space<vmem>>, vector<1x16xf32>,
    %85 = vector.extract_strided_slice %70 {offsets = [3, 16], sizes = [1, 16], strides = [1, 1]} : vector<32x32xf32> to vector<1x16xf32>
    %c1_79 = arith.constant 1 : index
    %c48_80 = arith.constant 48 : index
    %86 = vector.load %arg25[%c1_79, %c48_80] : memref<2x512xf32, #tpu.memory_space<vmem>>, vector<1x16xf32>
    tpu.vector_store %arg25[%c1_79, %c48_80], %85 {strides = array<i32>} : memref<2x512xf32, #tpu.memory_space<vmem>>, vector<1x16xf32>,
    %87 = vector.extract_strided_slice %70 {offsets = [4, 0], sizes = [1, 16], strides = [1, 1]} : vector<32x32xf32> to vector<1x16xf32>
    %c0_81 = arith.constant 0 : index
    %c64 = arith.constant 64 : index
    %88 = vector.load %arg25[%c0_81, %c64] : memref<2x512xf32, #tpu.memory_space<vmem>>, vector<1x16xf32>
    tpu.vector_store %arg25[%c0_81, %c64], %87 {strides = array<i32>} : memref<2x512xf32, #tpu.memory_space<vmem>>, vector<1x16xf32>,
    %89 = vector.extract_strided_slice %70 {offsets = [4, 16], sizes = [1, 16], strides = [1, 1]} : vector<32x32xf32> to vector<1x16xf32>
    %c1_82 = arith.constant 1 : index
    %c64_83 = arith.constant 64 : index
    %90 = vector.load %arg25[%c1_82, %c64_83] : memref<2x512xf32, #tpu.memory_space<vmem>>, vector<1x16xf32>
    tpu.vector_store %arg25[%c1_82, %c64_83], %89 {strides = array<i32>} : memref<2x512xf32, #tpu.memory_space<vmem>>, vector<1x16xf32>,
    %91 = vector.extract_strided_slice %70 {offsets = [5, 0], sizes = [1, 16], strides = [1, 1]} : vector<32x32xf32> to vector<1x16xf32>
    %c0_84 = arith.constant 0 : index
    %c80 = arith.constant 80 : index
    %92 = vector.load %arg25[%c0_84, %c80] : memref<2x512xf32, #tpu.memory_space<vmem>>, vector<1x16xf32>
    tpu.vector_store %arg25[%c0_84, %c80], %91 {strides = array<i32>} : memref<2x512xf32, #tpu.memory_space<vmem>>, vector<1x16xf32>,
    %93 = vector.extract_strided_slice %70 {offsets = [5, 16], sizes = [1, 16], strides = [1, 1]} : vector<32x32xf32> to vector<1x16xf32>
    %c1_85 = arith.constant 1 : index
    %c80_86 = arith.constant 80 : index
    %94 = vector.load %arg25[%c1_85, %c80_86] : memref<2x512xf32, #tpu.memory_space<vmem>>, vector<1x16xf32>
    tpu.vector_store %arg25[%c1_85, %c80_86], %93 {strides = array<i32>} : memref<2x512xf32, #tpu.memory_space<vmem>>, vector<1x16xf32>,
    %95 = vector.extract_strided_slice %70 {offsets = [6, 0], sizes = [1, 16], strides = [1, 1]} : vector<32x32xf32> to vector<1x16xf32>
    %c0_87 = arith.constant 0 : index
    %c96 = arith.constant 96 : index
    %96 = vector.load %arg25[%c0_87, %c96] : memref<2x512xf32, #tpu.memory_space<vmem>>, vector<1x16xf32>
    tpu.vector_store %arg25[%c0_87, %c96], %95 {strides = array<i32>} : memref<2x512xf32, #tpu.memory_space<vmem>>, vector<1x16xf32>,
    %97 = vector.extract_strided_slice %70 {offsets = [6, 16], sizes = [1, 16], strides = [1, 1]} : vector<32x32xf32> to vector<1x16xf32>
    %c1_88 = arith.constant 1 : index
    %c96_89 = arith.constant 96 : index
    %98 = vector.load %arg25[%c1_88, %c96_89] : memref<2x512xf32, #tpu.memory_space<vmem>>, vector<1x16xf32>
    tpu.vector_store %arg25[%c1_88, %c96_89], %97 {strides = array<i32>} : memref<2x512xf32, #tpu.memory_space<vmem>>, vector<1x16xf32>,
    %99 = vector.extract_strided_slice %70 {offsets = [7, 0], sizes = [1, 16], strides = [1, 1]} : vector<32x32xf32> to vector<1x16xf32>
    %c0_90 = arith.constant 0 : index
    %c112 = arith.constant 112 : index
    %100 = vector.load %arg25[%c0_90, %c112] : memref<2x512xf32, #tpu.memory_space<vmem>>, vector<1x16xf32>
    tpu.vector_store %arg25[%c0_90, %c112], %99 {strides = array<i32>} : memref<2x512xf32, #tpu.memory_space<vmem>>, vector<1x16xf32>,
    %101 = vector.extract_strided_slice %70 {offsets = [7, 16], sizes = [1, 16], strides = [1, 1]} : vector<32x32xf32> to vector<1x16xf32>
    %c1_91 = arith.constant 1 : index
    %c112_92 = arith.constant 112 : index
    %102 = vector.load %arg25[%c1_91, %c112_92] : memref<2x512xf32, #tpu.memory_space<vmem>>, vector<1x16xf32>
    tpu.vector_store %arg25[%c1_91, %c112_92], %101 {strides = array<i32>} : memref<2x512xf32, #tpu.memory_space<vmem>>, vector<1x16xf32>,
    %103 = vector.extract_strided_slice %70 {offsets = [8, 0], sizes = [1, 16], strides = [1, 1]} : vector<32x32xf32> to vector<1x16xf32>
    %c0_93 = arith.constant 0 : index
    %c128 = arith.constant 128 : index
    %104 = vector.load %arg25[%c0_93, %c128] : memref<2x512xf32, #tpu.memory_space<vmem>>, vector<1x16xf32>
    tpu.vector_store %arg25[%c0_93, %c128], %103 {strides = array<i32>} : memref<2x512xf32, #tpu.memory_space<vmem>>, vector<1x16xf32>,
    %105 = vector.extract_strided_slice %70 {offsets = [8, 16], sizes = [1, 16], strides = [1, 1]} : vector<32x32xf32> to vector<1x16xf32>
    %c1_94 = arith.constant 1 : index
    %c128_95 = arith.constant 128 : index
    %106 = vector.load %arg25[%c1_94, %c128_95] : memref<2x512xf32, #tpu.memory_space<vmem>>, vector<1x16xf32>
    tpu.vector_store %arg25[%c1_94, %c128_95], %105 {strides = array<i32>} : memref<2x512xf32, #tpu.memory_space<vmem>>, vector<1x16xf32>,
    %107 = vector.extract_strided_slice %70 {offsets = [9, 0], sizes = [1, 16], strides = [1, 1]} : vector<32x32xf32> to vector<1x16xf32>
    %c0_96 = arith.constant 0 : index
    %c144 = arith.constant 144 : index
    %108 = vector.load %arg25[%c0_96, %c144] : memref<2x512xf32, #tpu.memory_space<vmem>>, vector<1x16xf32>
    tpu.vector_store %arg25[%c0_96, %c144], %107 {strides = array<i32>} : memref<2x512xf32, #tpu.memory_space<vmem>>, vector<1x16xf32>,
    %109 = vector.extract_strided_slice %70 {offsets = [9, 16], sizes = [1, 16], strides = [1, 1]} : vector<32x32xf32> to vector<1x16xf32>
    %c1_97 = arith.constant 1 : index
    %c144_98 = arith.constant 144 : index
    %110 = vector.load %arg25[%c1_97, %c144_98] : memref<2x512xf32, #tpu.memory_space<vmem>>, vector<1x16xf32>
    tpu.vector_store %arg25[%c1_97, %c144_98], %109 {strides = array<i32>} : memref<2x512xf32, #tpu.memory_space<vmem>>, vector<1x16xf32>,
    %111 = vector.extract_strided_slice %70 {offsets = [10, 0], sizes = [1, 16], strides = [1, 1]} : vector<32x32xf32> to vector<1x16xf32>
    %c0_99 = arith.constant 0 : index
    %c160 = arith.constant 160 : index
    %112 = vector.load %arg25[%c0_99, %c160] : memref<2x512xf32, #tpu.memory_space<vmem>>, vector<1x16xf32>
    tpu.vector_store %arg25[%c0_99, %c160], %111 {strides = array<i32>} : memref<2x512xf32, #tpu.memory_space<vmem>>, vector<1x16xf32>,
    %113 = vector.extract_strided_slice %70 {offsets = [10, 16], sizes = [1, 16], strides = [1, 1]} : vector<32x32xf32> to vector<1x16xf32>
    %c1_100 = arith.constant 1 : index
    %c160_101 = arith.constant 160 : index
    %114 = vector.load %arg25[%c1_100, %c160_101] : memref<2x512xf32, #tpu.memory_space<vmem>>, vector<1x16xf32>
    tpu.vector_store %arg25[%c1_100, %c160_101], %113 {strides = array<i32>} : memref<2x512xf32, #tpu.memory_space<vmem>>, vector<1x16xf32>,
    %115 = vector.extract_strided_slice %70 {offsets = [11, 0], sizes = [1, 16], strides = [1, 1]} : vector<32x32xf32> to vector<1x16xf32>
    %c0_102 = arith.constant 0 : index
    %c176 = arith.constant 176 : index
    %116 = vector.load %arg25[%c0_102, %c176] : memref<2x512xf32, #tpu.memory_space<vmem>>, vector<1x16xf32>
    tpu.vector_store %arg25[%c0_102, %c176], %115 {strides = array<i32>} : memref<2x512xf32, #tpu.memory_space<vmem>>, vector<1x16xf32>,
    %117 = vector.extract_strided_slice %70 {offsets = [11, 16], sizes = [1, 16], strides = [1, 1]} : vector<32x32xf32> to vector<1x16xf32>
    %c1_103 = arith.constant 1 : index
    %c176_104 = arith.constant 176 : index
    %118 = vector.load %arg25[%c1_103, %c176_104] : memref<2x512xf32, #tpu.memory_space<vmem>>, vector<1x16xf32>
    tpu.vector_store %arg25[%c1_103, %c176_104], %117 {strides = array<i32>} : memref<2x512xf32, #tpu.memory_space<vmem>>, vector<1x16xf32>,
    %119 = vector.extract_strided_slice %70 {offsets = [12, 0], sizes = [1, 16], strides = [1, 1]} : vector<32x32xf32> to vector<1x16xf32>
    %c0_105 = arith.constant 0 : index
    %c192 = arith.constant 192 : index
    %120 = vector.load %arg25[%c0_105, %c192] : memref<2x512xf32, #tpu.memory_space<vmem>>, vector<1x16xf32>
    tpu.vector_store %arg25[%c0_105, %c192], %119 {strides = array<i32>} : memref<2x512xf32, #tpu.memory_space<vmem>>, vector<1x16xf32>,
    %121 = vector.extract_strided_slice %70 {offsets = [12, 16], sizes = [1, 16], strides = [1, 1]} : vector<32x32xf32> to vector<1x16xf32>
    %c1_106 = arith.constant 1 : index
    %c192_107 = arith.constant 192 : index
    %122 = vector.load %arg25[%c1_106, %c192_107] : memref<2x512xf32, #tpu.memory_space<vmem>>, vector<1x16xf32>
    tpu.vector_store %arg25[%c1_106, %c192_107], %121 {strides = array<i32>} : memref<2x512xf32, #tpu.memory_space<vmem>>, vector<1x16xf32>,
    %123 = vector.extract_strided_slice %70 {offsets = [13, 0], sizes = [1, 16], strides = [1, 1]} : vector<32x32xf32> to vector<1x16xf32>
    %c0_108 = arith.constant 0 : index
    %c208 = arith.constant 208 : index
    %124 = vector.load %arg25[%c0_108, %c208] : memref<2x512xf32, #tpu.memory_space<vmem>>, vector<1x16xf32>
    tpu.vector_store %arg25[%c0_108, %c208], %123 {strides = array<i32>} : memref<2x512xf32, #tpu.memory_space<vmem>>, vector<1x16xf32>,
    %125 = vector.extract_strided_slice %70 {offsets = [13, 16], sizes = [1, 16], strides = [1, 1]} : vector<32x32xf32> to vector<1x16xf32>
    %c1_109 = arith.constant 1 : index
    %c208_110 = arith.constant 208 : index
    %126 = vector.load %arg25[%c1_109, %c208_110] : memref<2x512xf32, #tpu.memory_space<vmem>>, vector<1x16xf32>
    tpu.vector_store %arg25[%c1_109, %c208_110], %125 {strides = array<i32>} : memref<2x512xf32, #tpu.memory_space<vmem>>, vector<1x16xf32>,
    %127 = vector.extract_strided_slice %70 {offsets = [14, 0], sizes = [1, 16], strides = [1, 1]} : vector<32x32xf32> to vector<1x16xf32>
    %c0_111 = arith.constant 0 : index
    %c224 = arith.constant 224 : index
    %128 = vector.load %arg25[%c0_111, %c224] : memref<2x512xf32, #tpu.memory_space<vmem>>, vector<1x16xf32>
    tpu.vector_store %arg25[%c0_111, %c224], %127 {strides = array<i32>} : memref<2x512xf32, #tpu.memory_space<vmem>>, vector<1x16xf32>,
    %129 = vector.extract_strided_slice %70 {offsets = [14, 16], sizes = [1, 16], strides = [1, 1]} : vector<32x32xf32> to vector<1x16xf32>
    %c1_112 = arith.constant 1 : index
    %c224_113 = arith.constant 224 : index
    %130 = vector.load %arg25[%c1_112, %c224_113] : memref<2x512xf32, #tpu.memory_space<vmem>>, vector<1x16xf32>
    tpu.vector_store %arg25[%c1_112, %c224_113], %129 {strides = array<i32>} : memref<2x512xf32, #tpu.memory_space<vmem>>, vector<1x16xf32>,
    %131 = vector.extract_strided_slice %70 {offsets = [15, 0], sizes = [1, 16], strides = [1, 1]} : vector<32x32xf32> to vector<1x16xf32>
    %c0_114 = arith.constant 0 : index
    %c240 = arith.constant 240 : index
    %132 = vector.load %arg25[%c0_114, %c240] : memref<2x512xf32, #tpu.memory_space<vmem>>, vector<1x16xf32>
    tpu.vector_store %arg25[%c0_114, %c240], %131 {strides = array<i32>} : memref<2x512xf32, #tpu.memory_space<vmem>>, vector<1x16xf32>,
    %133 = vector.extract_strided_slice %70 {offsets = [15, 16], sizes = [1, 16], strides = [1, 1]} : vector<32x32xf32> to vector<1x16xf32>
    %c1_115 = arith.constant 1 : index
    %c240_116 = arith.constant 240 : index
    %134 = vector.load %arg25[%c1_115, %c240_116] : memref<2x512xf32, #tpu.memory_space<vmem>>, vector<1x16xf32>
    tpu.vector_store %arg25[%c1_115, %c240_116], %133 {strides = array<i32>} : memref<2x512xf32, #tpu.memory_space<vmem>>, vector<1x16xf32>,
    %135 = vector.extract_strided_slice %70 {offsets = [16, 0], sizes = [1, 16], strides = [1, 1]} : vector<32x32xf32> to vector<1x16xf32>
    %c0_117 = arith.constant 0 : index
    %c256 = arith.constant 256 : index
    %136 = vector.load %arg25[%c0_117, %c256] : memref<2x512xf32, #tpu.memory_space<vmem>>, vector<1x16xf32>
    tpu.vector_store %arg25[%c0_117, %c256], %135 {strides = array<i32>} : memref<2x512xf32, #tpu.memory_space<vmem>>, vector<1x16xf32>,
    %137 = vector.extract_strided_slice %70 {offsets = [16, 16], sizes = [1, 16], strides = [1, 1]} : vector<32x32xf32> to vector<1x16xf32>
    %c1_118 = arith.constant 1 : index
    %c256_119 = arith.constant 256 : index
    %138 = vector.load %arg25[%c1_118, %c256_119] : memref<2x512xf32, #tpu.memory_space<vmem>>, vector<1x16xf32>
    tpu.vector_store %arg25[%c1_118, %c256_119], %137 {strides = array<i32>} : memref<2x512xf32, #tpu.memory_space<vmem>>, vector<1x16xf32>,
    %139 = vector.extract_strided_slice %70 {offsets = [17, 0], sizes = [1, 16], strides = [1, 1]} : vector<32x32xf32> to vector<1x16xf32>
    %c0_120 = arith.constant 0 : index
    %c272 = arith.constant 272 : index
    %140 = vector.load %arg25[%c0_120, %c272] : memref<2x512xf32, #tpu.memory_space<vmem>>, vector<1x16xf32>
    tpu.vector_store %arg25[%c0_120, %c272], %139 {strides = array<i32>} : memref<2x512xf32, #tpu.memory_space<vmem>>, vector<1x16xf32>,
    %141 = vector.extract_strided_slice %70 {offsets = [17, 16], sizes = [1, 16], strides = [1, 1]} : vector<32x32xf32> to vector<1x16xf32>
    %c1_121 = arith.constant 1 : index
    %c272_122 = arith.constant 272 : index
    %142 = vector.load %arg25[%c1_121, %c272_122] : memref<2x512xf32, #tpu.memory_space<vmem>>, vector<1x16xf32>
    tpu.vector_store %arg25[%c1_121, %c272_122], %141 {strides = array<i32>} : memref<2x512xf32, #tpu.memory_space<vmem>>, vector<1x16xf32>,
    %143 = vector.extract_strided_slice %70 {offsets = [18, 0], sizes = [1, 16], strides = [1, 1]} : vector<32x32xf32> to vector<1x16xf32>
    %c0_123 = arith.constant 0 : index
    %c288 = arith.constant 288 : index
    %144 = vector.load %arg25[%c0_123, %c288] : memref<2x512xf32, #tpu.memory_space<vmem>>, vector<1x16xf32>
    tpu.vector_store %arg25[%c0_123, %c288], %143 {strides = array<i32>} : memref<2x512xf32, #tpu.memory_space<vmem>>, vector<1x16xf32>,
    %145 = vector.extract_strided_slice %70 {offsets = [18, 16], sizes = [1, 16], strides = [1, 1]} : vector<32x32xf32> to vector<1x16xf32>
    %c1_124 = arith.constant 1 : index
    %c288_125 = arith.constant 288 : index
    %146 = vector.load %arg25[%c1_124, %c288_125] : memref<2x512xf32, #tpu.memory_space<vmem>>, vector<1x16xf32>
    tpu.vector_store %arg25[%c1_124, %c288_125], %145 {strides = array<i32>} : memref<2x512xf32, #tpu.memory_space<vmem>>, vector<1x16xf32>,
    %147 = vector.extract_strided_slice %70 {offsets = [19, 0], sizes = [1, 16], strides = [1, 1]} : vector<32x32xf32> to vector<1x16xf32>
    %c0_126 = arith.constant 0 : index
    %c304 = arith.constant 304 : index
    %148 = vector.load %arg25[%c0_126, %c304] : memref<2x512xf32, #tpu.memory_space<vmem>>, vector<1x16xf32>
    tpu.vector_store %arg25[%c0_126, %c304], %147 {strides = array<i32>} : memref<2x512xf32, #tpu.memory_space<vmem>>, vector<1x16xf32>,
    %149 = vector.extract_strided_slice %70 {offsets = [19, 16], sizes = [1, 16], strides = [1, 1]} : vector<32x32xf32> to vector<1x16xf32>
    %c1_127 = arith.constant 1 : index
    %c304_128 = arith.constant 304 : index
    %150 = vector.load %arg25[%c1_127, %c304_128] : memref<2x512xf32, #tpu.memory_space<vmem>>, vector<1x16xf32>
    tpu.vector_store %arg25[%c1_127, %c304_128], %149 {strides = array<i32>} : memref<2x512xf32, #tpu.memory_space<vmem>>, vector<1x16xf32>,
    %151 = vector.extract_strided_slice %70 {offsets = [20, 0], sizes = [1, 16], strides = [1, 1]} : vector<32x32xf32> to vector<1x16xf32>
    %c0_129 = arith.constant 0 : index
    %c320 = arith.constant 320 : index
    %152 = vector.load %arg25[%c0_129, %c320] : memref<2x512xf32, #tpu.memory_space<vmem>>, vector<1x16xf32>
    tpu.vector_store %arg25[%c0_129, %c320], %151 {strides = array<i32>} : memref<2x512xf32, #tpu.memory_space<vmem>>, vector<1x16xf32>,
    %153 = vector.extract_strided_slice %70 {offsets = [20, 16], sizes = [1, 16], strides = [1, 1]} : vector<32x32xf32> to vector<1x16xf32>
    %c1_130 = arith.constant 1 : index
    %c320_131 = arith.constant 320 : index
    %154 = vector.load %arg25[%c1_130, %c320_131] : memref<2x512xf32, #tpu.memory_space<vmem>>, vector<1x16xf32>
    tpu.vector_store %arg25[%c1_130, %c320_131], %153 {strides = array<i32>} : memref<2x512xf32, #tpu.memory_space<vmem>>, vector<1x16xf32>,
    %155 = vector.extract_strided_slice %70 {offsets = [21, 0], sizes = [1, 16], strides = [1, 1]} : vector<32x32xf32> to vector<1x16xf32>
    %c0_132 = arith.constant 0 : index
    %c336 = arith.constant 336 : index
    %156 = vector.load %arg25[%c0_132, %c336] : memref<2x512xf32, #tpu.memory_space<vmem>>, vector<1x16xf32>
    tpu.vector_store %arg25[%c0_132, %c336], %155 {strides = array<i32>} : memref<2x512xf32, #tpu.memory_space<vmem>>, vector<1x16xf32>,
    %157 = vector.extract_strided_slice %70 {offsets = [21, 16], sizes = [1, 16], strides = [1, 1]} : vector<32x32xf32> to vector<1x16xf32>
    %c1_133 = arith.constant 1 : index
    %c336_134 = arith.constant 336 : index
    %158 = vector.load %arg25[%c1_133, %c336_134] : memref<2x512xf32, #tpu.memory_space<vmem>>, vector<1x16xf32>
    tpu.vector_store %arg25[%c1_133, %c336_134], %157 {strides = array<i32>} : memref<2x512xf32, #tpu.memory_space<vmem>>, vector<1x16xf32>,
    %159 = vector.extract_strided_slice %70 {offsets = [22, 0], sizes = [1, 16], strides = [1, 1]} : vector<32x32xf32> to vector<1x16xf32>
    %c0_135 = arith.constant 0 : index
    %c352 = arith.constant 352 : index
    %160 = vector.load %arg25[%c0_135, %c352] : memref<2x512xf32, #tpu.memory_space<vmem>>, vector<1x16xf32>
    tpu.vector_store %arg25[%c0_135, %c352], %159 {strides = array<i32>} : memref<2x512xf32, #tpu.memory_space<vmem>>, vector<1x16xf32>,
    %161 = vector.extract_strided_slice %70 {offsets = [22, 16], sizes = [1, 16], strides = [1, 1]} : vector<32x32xf32> to vector<1x16xf32>
    %c1_136 = arith.constant 1 : index
    %c352_137 = arith.constant 352 : index
    %162 = vector.load %arg25[%c1_136, %c352_137] : memref<2x512xf32, #tpu.memory_space<vmem>>, vector<1x16xf32>
    tpu.vector_store %arg25[%c1_136, %c352_137], %161 {strides = array<i32>} : memref<2x512xf32, #tpu.memory_space<vmem>>, vector<1x16xf32>,
    %163 = vector.extract_strided_slice %70 {offsets = [23, 0], sizes = [1, 16], strides = [1, 1]} : vector<32x32xf32> to vector<1x16xf32>
    %c0_138 = arith.constant 0 : index
    %c368 = arith.constant 368 : index
    %164 = vector.load %arg25[%c0_138, %c368] : memref<2x512xf32, #tpu.memory_space<vmem>>, vector<1x16xf32>
    tpu.vector_store %arg25[%c0_138, %c368], %163 {strides = array<i32>} : memref<2x512xf32, #tpu.memory_space<vmem>>, vector<1x16xf32>,
    %165 = vector.extract_strided_slice %70 {offsets = [23, 16], sizes = [1, 16], strides = [1, 1]} : vector<32x32xf32> to vector<1x16xf32>
    %c1_139 = arith.constant 1 : index
    %c368_140 = arith.constant 368 : index
    %166 = vector.load %arg25[%c1_139, %c368_140] : memref<2x512xf32, #tpu.memory_space<vmem>>, vector<1x16xf32>
    tpu.vector_store %arg25[%c1_139, %c368_140], %165 {strides = array<i32>} : memref<2x512xf32, #tpu.memory_space<vmem>>, vector<1x16xf32>,
    %167 = vector.extract_strided_slice %70 {offsets = [24, 0], sizes = [1, 16], strides = [1, 1]} : vector<32x32xf32> to vector<1x16xf32>
    %c0_141 = arith.constant 0 : index
    %c384 = arith.constant 384 : index
    %168 = vector.load %arg25[%c0_141, %c384] : memref<2x512xf32, #tpu.memory_space<vmem>>, vector<1x16xf32>
    tpu.vector_store %arg25[%c0_141, %c384], %167 {strides = array<i32>} : memref<2x512xf32, #tpu.memory_space<vmem>>, vector<1x16xf32>,
    %169 = vector.extract_strided_slice %70 {offsets = [24, 16], sizes = [1, 16], strides = [1, 1]} : vector<32x32xf32> to vector<1x16xf32>
    %c1_142 = arith.constant 1 : index
    %c384_143 = arith.constant 384 : index
    %170 = vector.load %arg25[%c1_142, %c384_143] : memref<2x512xf32, #tpu.memory_space<vmem>>, vector<1x16xf32>
    tpu.vector_store %arg25[%c1_142, %c384_143], %169 {strides = array<i32>} : memref<2x512xf32, #tpu.memory_space<vmem>>, vector<1x16xf32>,
    %171 = vector.extract_strided_slice %70 {offsets = [25, 0], sizes = [1, 16], strides = [1, 1]} : vector<32x32xf32> to vector<1x16xf32>
    %c0_144 = arith.constant 0 : index
    %c400 = arith.constant 400 : index
    %172 = vector.load %arg25[%c0_144, %c400] : memref<2x512xf32, #tpu.memory_space<vmem>>, vector<1x16xf32>
    tpu.vector_store %arg25[%c0_144, %c400], %171 {strides = array<i32>} : memref<2x512xf32, #tpu.memory_space<vmem>>, vector<1x16xf32>,
    %173 = vector.extract_strided_slice %70 {offsets = [25, 16], sizes = [1, 16], strides = [1, 1]} : vector<32x32xf32> to vector<1x16xf32>
    %c1_145 = arith.constant 1 : index
    %c400_146 = arith.constant 400 : index
    %174 = vector.load %arg25[%c1_145, %c400_146] : memref<2x512xf32, #tpu.memory_space<vmem>>, vector<1x16xf32>
    tpu.vector_store %arg25[%c1_145, %c400_146], %173 {strides = array<i32>} : memref<2x512xf32, #tpu.memory_space<vmem>>, vector<1x16xf32>,
    %175 = vector.extract_strided_slice %70 {offsets = [26, 0], sizes = [1, 16], strides = [1, 1]} : vector<32x32xf32> to vector<1x16xf32>
    %c0_147 = arith.constant 0 : index
    %c416 = arith.constant 416 : index
    %176 = vector.load %arg25[%c0_147, %c416] : memref<2x512xf32, #tpu.memory_space<vmem>>, vector<1x16xf32>
    tpu.vector_store %arg25[%c0_147, %c416], %175 {strides = array<i32>} : memref<2x512xf32, #tpu.memory_space<vmem>>, vector<1x16xf32>,
    %177 = vector.extract_strided_slice %70 {offsets = [26, 16], sizes = [1, 16], strides = [1, 1]} : vector<32x32xf32> to vector<1x16xf32>
    %c1_148 = arith.constant 1 : index
    %c416_149 = arith.constant 416 : index
    %178 = vector.load %arg25[%c1_148, %c416_149] : memref<2x512xf32, #tpu.memory_space<vmem>>, vector<1x16xf32>
    tpu.vector_store %arg25[%c1_148, %c416_149], %177 {strides = array<i32>} : memref<2x512xf32, #tpu.memory_space<vmem>>, vector<1x16xf32>,
    %179 = vector.extract_strided_slice %70 {offsets = [27, 0], sizes = [1, 16], strides = [1, 1]} : vector<32x32xf32> to vector<1x16xf32>
    %c0_150 = arith.constant 0 : index
    %c432 = arith.constant 432 : index
    %180 = vector.load %arg25[%c0_150, %c432] : memref<2x512xf32, #tpu.memory_space<vmem>>, vector<1x16xf32>
    tpu.vector_store %arg25[%c0_150, %c432], %179 {strides = array<i32>} : memref<2x512xf32, #tpu.memory_space<vmem>>, vector<1x16xf32>,
    %181 = vector.extract_strided_slice %70 {offsets = [27, 16], sizes = [1, 16], strides = [1, 1]} : vector<32x32xf32> to vector<1x16xf32>
    %c1_151 = arith.constant 1 : index
    %c432_152 = arith.constant 432 : index
    %182 = vector.load %arg25[%c1_151, %c432_152] : memref<2x512xf32, #tpu.memory_space<vmem>>, vector<1x16xf32>
    tpu.vector_store %arg25[%c1_151, %c432_152], %181 {strides = array<i32>} : memref<2x512xf32, #tpu.memory_space<vmem>>, vector<1x16xf32>,
    %183 = vector.extract_strided_slice %70 {offsets = [28, 0], sizes = [1, 16], strides = [1, 1]} : vector<32x32xf32> to vector<1x16xf32>
    %c0_153 = arith.constant 0 : index
    %c448 = arith.constant 448 : index
    %184 = vector.load %arg25[%c0_153, %c448] : memref<2x512xf32, #tpu.memory_space<vmem>>, vector<1x16xf32>
    tpu.vector_store %arg25[%c0_153, %c448], %183 {strides = array<i32>} : memref<2x512xf32, #tpu.memory_space<vmem>>, vector<1x16xf32>,
    %185 = vector.extract_strided_slice %70 {offsets = [28, 16], sizes = [1, 16], strides = [1, 1]} : vector<32x32xf32> to vector<1x16xf32>
    %c1_154 = arith.constant 1 : index
    %c448_155 = arith.constant 448 : index
    %186 = vector.load %arg25[%c1_154, %c448_155] : memref<2x512xf32, #tpu.memory_space<vmem>>, vector<1x16xf32>
    tpu.vector_store %arg25[%c1_154, %c448_155], %185 {strides = array<i32>} : memref<2x512xf32, #tpu.memory_space<vmem>>, vector<1x16xf32>,
    %187 = vector.extract_strided_slice %70 {offsets = [29, 0], sizes = [1, 16], strides = [1, 1]} : vector<32x32xf32> to vector<1x16xf32>
    %c0_156 = arith.constant 0 : index
    %c464 = arith.constant 464 : index
    %188 = vector.load %arg25[%c0_156, %c464] : memref<2x512xf32, #tpu.memory_space<vmem>>, vector<1x16xf32>
    tpu.vector_store %arg25[%c0_156, %c464], %187 {strides = array<i32>} : memref<2x512xf32, #tpu.memory_space<vmem>>, vector<1x16xf32>,
    %189 = vector.extract_strided_slice %70 {offsets = [29, 16], sizes = [1, 16], strides = [1, 1]} : vector<32x32xf32> to vector<1x16xf32>
    %c1_157 = arith.constant 1 : index
    %c464_158 = arith.constant 464 : index
    %190 = vector.load %arg25[%c1_157, %c464_158] : memref<2x512xf32, #tpu.memory_space<vmem>>, vector<1x16xf32>
    tpu.vector_store %arg25[%c1_157, %c464_158], %189 {strides = array<i32>} : memref<2x512xf32, #tpu.memory_space<vmem>>, vector<1x16xf32>,
    %191 = vector.extract_strided_slice %70 {offsets = [30, 0], sizes = [1, 16], strides = [1, 1]} : vector<32x32xf32> to vector<1x16xf32>
    %c0_159 = arith.constant 0 : index
    %c480 = arith.constant 480 : index
    %192 = vector.load %arg25[%c0_159, %c480] : memref<2x512xf32, #tpu.memory_space<vmem>>, vector<1x16xf32>
    tpu.vector_store %arg25[%c0_159, %c480], %191 {strides = array<i32>} : memref<2x512xf32, #tpu.memory_space<vmem>>, vector<1x16xf32>,
    %193 = vector.extract_strided_slice %70 {offsets = [30, 16], sizes = [1, 16], strides = [1, 1]} : vector<32x32xf32> to vector<1x16xf32>
    %c1_160 = arith.constant 1 : index
    %c480_161 = arith.constant 480 : index
    %194 = vector.load %arg25[%c1_160, %c480_161] : memref<2x512xf32, #tpu.memory_space<vmem>>, vector<1x16xf32>
    tpu.vector_store %arg25[%c1_160, %c480_161], %193 {strides = array<i32>} : memref<2x512xf32, #tpu.memory_space<vmem>>, vector<1x16xf32>,
    %195 = vector.extract_strided_slice %70 {offsets = [31, 0], sizes = [1, 16], strides = [1, 1]} : vector<32x32xf32> to vector<1x16xf32>
    %c0_162 = arith.constant 0 : index
    %c496 = arith.constant 496 : index
    %196 = vector.load %arg25[%c0_162, %c496] : memref<2x512xf32, #tpu.memory_space<vmem>>, vector<1x16xf32>
    tpu.vector_store %arg25[%c0_162, %c496], %195 {strides = array<i32>} : memref<2x512xf32, #tpu.memory_space<vmem>>, vector<1x16xf32>,
    %197 = vector.extract_strided_slice %70 {offsets = [31, 16], sizes = [1, 16], strides = [1, 1]} : vector<32x32xf32> to vector<1x16xf32>
    %c1_163 = arith.constant 1 : index
    %c496_164 = arith.constant 496 : index
    %198 = vector.load %arg25[%c1_163, %c496_164] : memref<2x512xf32, #tpu.memory_space<vmem>>, vector<1x16xf32>
    tpu.vector_store %arg25[%c1_163, %c496_164], %197 {strides = array<i32>} : memref<2x512xf32, #tpu.memory_space<vmem>>, vector<1x16xf32>,
    %c0_165 = arith.constant 0 : index
    %c0_166 = arith.constant 0 : index
    %199 = vector.load %arg25[%c0_165, %c0_166] : memref<2x512xf32, #tpu.memory_space<vmem>>, vector<2x512xf32>
    %c0_167 = arith.constant 0 : index
    %c0_168 = arith.constant 0 : index
    %200 = vector.load %arg15[%c0_167, %c0_168] : memref<512x64xf32, #tpu.memory_space<vmem>>, vector<512x64xf32>
    %cst_169 = arith.constant dense<0.000000e+00> : vector<2x64xf32>
    %201 = tpu.matmul %199, %200, %cst_169 {dimension_numbers = #tpu.dot_dimension_numbers<[1], [0], [0], [1], [0, 0, 1, 1], [], []>} : vector<2x512xf32>, vector<512x64xf32>, vector<2x64xf32> -> vector<2x64xf32>
    %c0_170 = arith.constant 0 : index
    %c0_171 = arith.constant 0 : index
    %202 = vector.load %arg16[%c0_170, %c0_171] : memref<1x64xf32, #tpu.memory_space<vmem>>, vector<1x64xf32>
    %203 = vector.broadcast %202 : vector<1x64xf32> to vector<2x64xf32>
    %204 = arith.addf %201, %203 : vector<2x64xf32>
    %cst_172 = arith.constant 0.000000e+00 : f32
    %205 = vector.broadcast %cst_172 : f32 to vector<2x64xf32>
    %206 = arith.maximumf %204, %205 : vector<2x64xf32>
    %c0_173 = arith.constant 0 : index
    %c0_174 = arith.constant 0 : index
    %207 = vector.load %arg17[%c0_173, %c0_174] : memref<64x32xf32, #tpu.memory_space<vmem>>, vector<64x32xf32>
    %cst_175 = arith.constant dense<0.000000e+00> : vector<2x32xf32>
    %208 = tpu.matmul %206, %207, %cst_175 {dimension_numbers = #tpu.dot_dimension_numbers<[1], [0], [0], [1], [0, 0, 1, 1], [], []>} : vector<2x64xf32>, vector<64x32xf32>, vector<2x32xf32> -> vector<2x32xf32>
    %c0_176 = arith.constant 0 : index
    %c0_177 = arith.constant 0 : index
    %209 = vector.load %arg18[%c0_176, %c0_177] : memref<1x32xf32, #tpu.memory_space<vmem>>, vector<1x32xf32>
    %210 = vector.broadcast %209 : vector<1x32xf32> to vector<2x32xf32>
    %211 = arith.addf %208, %210 : vector<2x32xf32>
    %cst_178 = arith.constant 0.000000e+00 : f32
    %212 = vector.broadcast %cst_178 : f32 to vector<2x32xf32>
    %213 = arith.maximumf %211, %212 : vector<2x32xf32>
    %c0_179 = arith.constant 0 : index
    %c0_180 = arith.constant 0 : index
    %214 = vector.load %arg19[%c0_179, %c0_180] : memref<32x16xf32, #tpu.memory_space<vmem>>, vector<32x16xf32>
    %cst_181 = arith.constant dense<0.000000e+00> : vector<2x16xf32>
    %215 = tpu.matmul %213, %214, %cst_181 {dimension_numbers = #tpu.dot_dimension_numbers<[1], [0], [0], [1], [0, 0, 1, 1], [], []>} : vector<2x32xf32>, vector<32x16xf32>, vector<2x16xf32> -> vector<2x16xf32>
    %c0_182 = arith.constant 0 : index
    %c0_183 = arith.constant 0 : index
    %216 = vector.load %arg20[%c0_182, %c0_183] : memref<1x16xf32, #tpu.memory_space<vmem>>, vector<1x16xf32>
    %217 = vector.broadcast %216 : vector<1x16xf32> to vector<2x16xf32>
    %218 = arith.addf %215, %217 : vector<2x16xf32>
    %cst_184 = arith.constant 0.000000e+00 : f32
    %219 = vector.broadcast %cst_184 : f32 to vector<2x16xf32>
    %220 = arith.maximumf %218, %219 : vector<2x16xf32>
    %c0_185 = arith.constant 0 : index
    %c0_186 = arith.constant 0 : index
    %221 = vector.load %arg21[%c0_185, %c0_186] : memref<16x5xf32, #tpu.memory_space<vmem>>, vector<16x5xf32>
    %cst_187 = arith.constant dense<0.000000e+00> : vector<2x5xf32>
    %222 = tpu.matmul %220, %221, %cst_187 {dimension_numbers = #tpu.dot_dimension_numbers<[1], [0], [0], [1], [0, 0, 1, 1], [], []>} : vector<2x16xf32>, vector<16x5xf32>, vector<2x5xf32> -> vector<2x5xf32>
    %c0_188 = arith.constant 0 : index
    %c0_189 = arith.constant 0 : index
    %223 = vector.load %arg22[%c0_188, %c0_189] : memref<1x5xf32, #tpu.memory_space<vmem>>, vector<1x5xf32>
    %224 = vector.broadcast %223 : vector<1x5xf32> to vector<2x5xf32>
    %225 = arith.addf %222, %224 : vector<2x5xf32>
    %c0_190 = arith.constant 0 : index
    %c0_191 = arith.constant 0 : index
    %226 = vector.load %arg23[%c0_190, %c0_191] : memref<2x5xf32, #tpu.memory_space<vmem>>, vector<2x5xf32>
    tpu.vector_store %arg23[%c0_190, %c0_191], %225 {strides = array<i32>} : memref<2x5xf32, #tpu.memory_space<vmem>>, vector<2x5xf32>,
    return
  }
}

</mosaic_0001>

<llo_original>
// kernel: _mscnn_forward.1
$region0: #{_mscnn_forward.1}
  #allocation0 [shape = 'u32[]', space=smem, size = 0x4, offset = 0x4, fixed_abs, tag = 'smem constant byte address 0x4 - core index']
  #allocation1 [shape = 'u32[144,128]{1,0:T(1,128)}', space=vmem, size = 0x12000, scoped, tag = 'internal scratch']
  #allocation2 [shape = 'f32[4,32]{1,0:T(4,128)}', space=vmem, size = 0x800, scoped, tag = 'scratch operand']
  #allocation3 [shape = 'f32[2,512]{1,0:T(2,128)}', space=vmem, size = 0x1000, scoped, tag = 'scratch operand']
  %s0 = inlined_call_operand.vmem [shape: f32[2,1,4,16], index: 0, kind: input, shape index: {}]
  %s1 = inlined_call_operand.vmem [shape: f32[32,32], index: 1, kind: input, shape index: {}]
  %s2 = inlined_call_operand.vmem [shape: f32[32,32], index: 2, kind: input, shape index: {}]
  %s3 = inlined_call_operand.vmem [shape: f32[3,32,4], index: 3, kind: input, shape index: {}]
  %s4 = inlined_call_operand.vmem [shape: f32[32,1], index: 4, kind: input, shape index: {}]
  %s5 = inlined_call_operand.vmem [shape: f32[32,1], index: 5, kind: input, shape index: {}]
  %s6 = inlined_call_operand.vmem [shape: f32[3,64,32], index: 6, kind: input, shape index: {}]
  %s7 = inlined_call_operand.vmem [shape: f32[64,1], index: 7, kind: input, shape index: {}]
  %s8 = inlined_call_operand.vmem [shape: f32[64,1], index: 8, kind: input, shape index: {}]
  %s9 = inlined_call_operand.vmem [shape: f32[64,64], index: 9, kind: input, shape index: {}]
  %s10 = inlined_call_operand.vmem [shape: f32[64,1], index: 10, kind: input, shape index: {}]
  %s11 = inlined_call_operand.vmem [shape: f32[64,1], index: 11, kind: input, shape index: {}]
  %s12 = inlined_call_operand.vmem [shape: f32[32,64], index: 12, kind: input, shape index: {}]
  %s13 = inlined_call_operand.vmem [shape: f32[32,1], index: 13, kind: input, shape index: {}]
  %s14 = inlined_call_operand.vmem [shape: f32[32,1], index: 14, kind: input, shape index: {}]
  %s15 = inlined_call_operand.vmem [shape: f32[512,64], index: 15, kind: input, shape index: {}]
  %s16 = inlined_call_operand.vmem [shape: f32[1,64], index: 16, kind: input, shape index: {}]
  %s17 = inlined_call_operand.vmem [shape: f32[64,32], index: 17, kind: input, shape index: {}]
  %s18 = inlined_call_operand.vmem [shape: f32[1,32], index: 18, kind: input, shape index: {}]
  %s19 = inlined_call_operand.vmem [shape: f32[32,16], index: 19, kind: input, shape index: {}]
  %s20 = inlined_call_operand.vmem [shape: f32[1,16], index: 20, kind: input, shape index: {}]
  %s21 = inlined_call_operand.vmem [shape: f32[16,5], index: 21, kind: input, shape index: {}]
  %s22 = inlined_call_operand.vmem [shape: f32[1,5], index: 22, kind: input, shape index: {}]
  %s23 = inlined_call_operand.hbm [shape: f32[2,5], index: 23, kind: output, shape index: {}]
  %s24 = sld [smem:[#allocation0]]
  $region102: #{_mscnn_forward.1} parent=0
    _
  %s26 = ssub.s32 1, %s24
  %s27 = scalar_select 0, %s26, %s24
  $region1: #{_mscnn_forward.1} parent=0
    #allocation4 [shape = 'u8[1024]{0}', space=vmem, size = 0x400, scoped, tag = 'output window, operand 0, single buffered']
    #allocation5 [shape = 's32[1]{0}', space=sflag, size = 0x4, scoped, tag = 'scoped memory for _mscnn_forward.1']
    %28 = vsyncpa [#allocation5], 0
    // Predicated region
    $region2: #{_mscnn_forward.1} parent=1 // pred_check
      _
    $region3: #{_mscnn_forward.1} parent=1 // pred_check_branch
      %30 = sbr.rel (0) target = $region5
    $region4: #{_mscnn_forward.1} parent=1 // pred_region
      _
    $region5: #{_mscnn_forward.1} parent=1 // pred_fallthru
      _
    // Predicated region
    $region6: #{_mscnn_forward.1} parent=1 // pred_check
      _
    $region7: #{_mscnn_forward.1} parent=1 // pred_check_branch
      %32 = sbr.rel (0) target = $region9
    $region8: #{_mscnn_forward.1} parent=1 // pred_region
      _
    $region9: #{_mscnn_forward.1} parent=1 // pred_fallthru
      _
    // Predicated region
    $region10: #{_mscnn_forward.1} parent=1 // pred_check
      _
    $region11: #{_mscnn_forward.1} parent=1 // pred_check_branch
      %34 = sbr.rel (0) target = $region13
    $region12: #{_mscnn_forward.1} parent=1 // pred_region
      _
    $region13: #{_mscnn_forward.1} parent=1 // pred_fallthru
      _
    // Predicated region
    $region14: #{_mscnn_forward.1} parent=1 // pred_check
      _
    $region15: #{_mscnn_forward.1} parent=1 // pred_check_branch
      %36 = sbr.rel (0) target = $region17
    $region16: #{_mscnn_forward.1} parent=1 // pred_region
      _
    $region17: #{_mscnn_forward.1} parent=1 // pred_fallthru
      _
    // Predicated region
    $region18: #{_mscnn_forward.1} parent=1 // pred_check
      _
    $region19: #{_mscnn_forward.1} parent=1 // pred_check_branch
      %38 = sbr.rel (0) target = $region21
    $region20: #{_mscnn_forward.1} parent=1 // pred_region
      _
    $region21: #{_mscnn_forward.1} parent=1 // pred_fallthru
      _
    // Predicated region
    $region22: #{_mscnn_forward.1} parent=1 // pred_check
      _
    $region23: #{_mscnn_forward.1} parent=1 // pred_check_branch
      %40 = sbr.rel (0) target = $region25
    $region24: #{_mscnn_forward.1} parent=1 // pred_region
      _
    $region25: #{_mscnn_forward.1} parent=1 // pred_fallthru
      _
    // Predicated region
    $region26: #{_mscnn_forward.1} parent=1 // pred_check
      _
    $region27: #{_mscnn_forward.1} parent=1 // pred_check_branch
      %42 = sbr.rel (0) target = $region29
    $region28: #{_mscnn_forward.1} parent=1 // pred_region
      _
    $region29: #{_mscnn_forward.1} parent=1 // pred_fallthru
      _
    // Predicated region
    $region30: #{_mscnn_forward.1} parent=1 // pred_check
      _
    $region31: #{_mscnn_forward.1} parent=1 // pred_check_branch
      %44 = sbr.rel (0) target = $region33
    $region32: #{_mscnn_forward.1} parent=1 // pred_region
      _
    $region33: #{_mscnn_forward.1} parent=1 // pred_fallthru
      _
    // Predicated region
    $region34: #{_mscnn_forward.1} parent=1 // pred_check
      _
    $region35: #{_mscnn_forward.1} parent=1 // pred_check_branch
      %46 = sbr.rel (0) target = $region37
    $region36: #{_mscnn_forward.1} parent=1 // pred_region
      _
    $region37: #{_mscnn_forward.1} parent=1 // pred_fallthru
      _
    // Predicated region
    $region38: #{_mscnn_forward.1} parent=1 // pred_check
      _
    $region39: #{_mscnn_forward.1} parent=1 // pred_check_branch
      %48 = sbr.rel (0) target = $region41
    $region40: #{_mscnn_forward.1} parent=1 // pred_region
      _
    $region41: #{_mscnn_forward.1} parent=1 // pred_fallthru
      _
    // Predicated region
    $region42: #{_mscnn_forward.1} parent=1 // pred_check
      _
    $region43: #{_mscnn_forward.1} parent=1 // pred_check_branch
      %50 = sbr.rel (0) target = $region45
    $region44: #{_mscnn_forward.1} parent=1 // pred_region
      _
    $region45: #{_mscnn_forward.1} parent=1 // pred_fallthru
      _
    // Predicated region
    $region46: #{_mscnn_forward.1} parent=1 // pred_check
      _
    $region47: #{_mscnn_forward.1} parent=1 // pred_check_branch
      %52 = sbr.rel (0) target = $region49
    $region48: #{_mscnn_forward.1} parent=1 // pred_region
      _
    $region49: #{_mscnn_forward.1} parent=1 // pred_fallthru
      _
    // Predicated region
    $region50: #{_mscnn_forward.1} parent=1 // pred_check
      _
    $region51: #{_mscnn_forward.1} parent=1 // pred_check_branch
      %54 = sbr.rel (0) target = $region53
    $region52: #{_mscnn_forward.1} parent=1 // pred_region
      _
    $region53: #{_mscnn_forward.1} parent=1 // pred_fallthru
      _
    // Predicated region
    $region54: #{_mscnn_forward.1} parent=1 // pred_check
      _
    $region55: #{_mscnn_forward.1} parent=1 // pred_check_branch
      %56 = sbr.rel (0) target = $region57
    $region56: #{_mscnn_forward.1} parent=1 // pred_region
      _
    $region57: #{_mscnn_forward.1} parent=1 // pred_fallthru
      _
    // Predicated region
    $region58: #{_mscnn_forward.1} parent=1 // pred_check
      _
    $region59: #{_mscnn_forward.1} parent=1 // pred_check_branch
      %58 = sbr.rel (0) target = $region61
    $region60: #{_mscnn_forward.1} parent=1 // pred_region
      _
    $region61: #{_mscnn_forward.1} parent=1 // pred_fallthru
      _
    // Predicated region
    $region62: #{_mscnn_forward.1} parent=1 // pred_check
      _
    $region63: #{_mscnn_forward.1} parent=1 // pred_check_branch
      %60 = sbr.rel (0) target = $region65
    $region64: #{_mscnn_forward.1} parent=1 // pred_region
      _
    $region65: #{_mscnn_forward.1} parent=1 // pred_fallthru
      _
    // Predicated region
    $region66: #{_mscnn_forward.1} parent=1 // pred_check
      _
    $region67: #{_mscnn_forward.1} parent=1 // pred_check_branch
      %62 = sbr.rel (0) target = $region69
    $region68: #{_mscnn_forward.1} parent=1 // pred_region
      _
    $region69: #{_mscnn_forward.1} parent=1 // pred_fallthru
      _
    // Predicated region
    $region70: #{_mscnn_forward.1} parent=1 // pred_check
      _
    $region71: #{_mscnn_forward.1} parent=1 // pred_check_branch
      %64 = sbr.rel (0) target = $region73
    $region72: #{_mscnn_forward.1} parent=1 // pred_region
      _
    $region73: #{_mscnn_forward.1} parent=1 // pred_fallthru
      _
    // Predicated region
    $region74: #{_mscnn_forward.1} parent=1 // pred_check
      _
    $region75: #{_mscnn_forward.1} parent=1 // pred_check_branch
      %66 = sbr.rel (0) target = $region77
    $region76: #{_mscnn_forward.1} parent=1 // pred_region
      _
    $region77: #{_mscnn_forward.1} parent=1 // pred_fallthru
      _
    // Predicated region
    $region78: #{_mscnn_forward.1} parent=1 // pred_check
      _
    $region79: #{_mscnn_forward.1} parent=1 // pred_check_branch
      %68 = sbr.rel (0) target = $region81
    $region80: #{_mscnn_forward.1} parent=1 // pred_region
      _
    $region81: #{_mscnn_forward.1} parent=1 // pred_fallthru
      _
    // Predicated region
    $region82: #{_mscnn_forward.1} parent=1 // pred_check
      _
    $region83: #{_mscnn_forward.1} parent=1 // pred_check_branch
      %70 = sbr.rel (0) target = $region85
    $region84: #{_mscnn_forward.1} parent=1 // pred_region
      _
    $region85: #{_mscnn_forward.1} parent=1 // pred_fallthru
      _
    // Predicated region
    $region86: #{_mscnn_forward.1} parent=1 // pred_check
      _
    $region87: #{_mscnn_forward.1} parent=1 // pred_check_branch
      %72 = sbr.rel (0) target = $region89
    $region88: #{_mscnn_forward.1} parent=1 // pred_region
      _
    $region89: #{_mscnn_forward.1} parent=1 // pred_fallthru
      _
    // Predicated region
    $region90: #{_mscnn_forward.1} parent=1 // pred_check
      _
    $region91: #{_mscnn_forward.1} parent=1 // pred_check_branch
      %74 = sbr.rel (0) target = $region93
    $region92: #{_mscnn_forward.1} parent=1 // pred_region
      _
    $region93: #{_mscnn_forward.1} parent=1 // pred_fallthru
      _
    %v75 = vld [vmem:[%s0] sm:$0xf]
    %vm76 = vcmask 125952
    %77 = vst.msk [vmem:[#allocation2] sm:$0xf] %vm76, %v75
    %s78 = scalar_lea.vmem %s0, 4
    %v79 = vld [vmem:[%s78] sm:$0xf]
    %81 = vrot.lane.b32.xlu0 %v79, 16
    %v82 = vpop.permute.xlu0 %81
    %vm84 = vcmask 257152
    %85 = vst.msk [vmem:[#allocation2] sm:$0xf] %vm84, %v82
    %v86 = vld [vmem:[#allocation2] sm:$0xf]
    %v87 = vld [vmem:[%s1] sm:$0xff]
    %v88 = vld [vmem:[%s1 + $0x8] sm:$0xff]
    %v89 = vld [vmem:[%s1 + $0x10] sm:$0xff]
    %v90 = vld [vmem:[%s1 + $0x18] sm:$0xff]
    %v91 = vld [vmem:[%s2] sm:$0xff]
    %v92 = vld [vmem:[%s2 + $0x8] sm:$0xff]
    %v93 = vld [vmem:[%s2 + $0x10] sm:$0xff]
    %v94 = vld [vmem:[%s2 + $0x18] sm:$0xff]
    %v95 = vld [vmem:[%s3] sm:$0xff]
    %v96 = vld [vmem:[%s3 + $0x8] sm:$0xff]
    %v97 = vld [vmem:[%s3 + $0x10] sm:$0xff]
    %v98 = vld [vmem:[%s3 + $0x18] sm:$0xff]
    %vm99 = vcmask 261120
    %v101 = vsel %vm99, %v86, 0
    %103 = vmatprep.subr.mxu0 0.0
    %104 = vmatpush1.msra.mxu0 %v87
    %105 = vmatprep.subr.mxu0 0.0
    %106 = vmatpush1.msra.mxu0 %v88
    %107 = vmatprep.subr.mxu0 0.0
    %108 = vmatpush1.msra.mxu0 %v89
    %109 = vmatprep.subr.mxu0 0.0
    %110 = vmatpush1.msra.mxu0 %v90
    %111 = vmatprep.subr.mxu0 0.0
    %112 = vmatpush1.msra.mxu0 0.0
    %113 = vmatprep.subr.mxu0 0.0
    %114 = vmatpush1.msra.mxu0 0.0
    %115 = vmatprep.subr.mxu0 0.0
    %116 = vmatpush1.msra.mxu0 0.0
    %117 = vmatprep.subr.mxu0 0.0
    %118 = vmatpush1.msra.mxu0 0.0
    %119 = vmatprep.subr.mxu0 0.0
    %120 = vmatpush1.msra.mxu0 0.0
    %121 = vmatprep.subr.mxu0 0.0
    %122 = vmatpush1.msra.mxu0 0.0
    %123 = vmatprep.subr.mxu0 0.0
    %124 = vmatpush1.msra.mxu0 0.0
    %125 = vmatprep.subr.mxu0 0.0
    %126 = vmatpush1.msra.mxu0 0.0
    %127 = vmatprep.subr.mxu0 0.0
    %128 = vmatpush1.msra.mxu0 0.0
    %129 = vmatprep.subr.mxu0 0.0
    %130 = vmatpush1.msra.mxu0 0.0
    %131 = vmatprep.subr.mxu0 0.0
    %132 = vmatpush1.msra.mxu0 0.0
    %133 = vmatprep.subr.mxu0 0.0
    %134 = vmatpush1.msra.mxu0 0.0
    %135 = vmatprep.subr.mxu0 0.0
    %136 = vmatpush1.msra.mxu0 0.0
    %137 = vmatprep.subr.mxu0 0.0
    %138 = vmatpush1.msra.mxu0 0.0
    %139 = vmatprep.subr.mxu0 0.0
    %140 = vmatpush1.msra.mxu0 0.0
    %141 = vmatprep.subr.mxu0 0.0
    %142 = vmatpush1.msra.mxu0 0.0
    %143 = vmatprep.subr.mxu0 0.0
    %144 = vmatpush1.msra.mxu0 0.0
    %145 = vmatprep.subr.mxu0 0.0
    %146 = vmatpush1.msra.mxu0 0.0
    %147 = vmatprep.subr.mxu0 0.0
    %148 = vmatpush1.msra.mxu0 0.0
    %149 = vmatprep.subr.mxu0 0.0
    %150 = vmatpush1.msra.mxu0 0.0
    %151 = vmatprep.subr.mxu0 0.0
    %152 = vmatpush1.msra.mxu0 0.0
    %153 = vmatprep.subr.mxu0 0.0
    %154 = vmatpush1.msra.mxu0 0.0
    %155 = vmatprep.subr.mxu0 0.0
    %156 = vmatpush1.msra.mxu0 0.0
    %157 = vmatprep.subr.mxu0 0.0
    %158 = vmatpush1.msra.mxu0 0.0
    %159 = vmatprep.subr.mxu0 0.0
    %160 = vmatpush1.msra.mxu0 0.0
    %161 = vmatprep.subr.mxu0 0.0
    %162 = vmatpush1.msra.mxu0 0.0
    %163 = vmatprep.subr.mxu0 0.0
    %164 = vmatpush1.msra.mxu0 0.0
    %165 = vmatprep.subr.mxu0 0.0
    %166 = vmatpush1.msra.mxu0 0.0
    %167 = vmatprep.mubr.f32.mxu0 0.0
    %168 = vmatmul.mubr.f32.gmra.mrb[0].mxu0 %v101
    %v169 = vpop.f32.mrb[0].mxu0
    %v170 = vadd.f32 0.0, %v169
    %v171 = vpop.f32.mrb[0].mxu0
    %172 = vdwg.mxu0
    %s173 = scalar_lea.vmem %s3, 32
    %v174 = vld [vmem:[%s173] sm:$0xff]
    %v175 = vld [vmem:[%s173 + $0x8] sm:$0xff]
    %v176 = vld [vmem:[%s173 + $0x10] sm:$0xff]
    %v177 = vld [vmem:[%s173 + $0x18] sm:$0xff]
    %vm178 = vcmask 31744
    %v180 = vsel %vm178, %v174, 0
    %v183 = vsel %vm178, %v175, 0
    %v186 = vsel %vm178, %v176, 0
    %v189 = vsel %vm178, %v177, 0
    %vm191 = vcmask 1043456
    %v192 = vsel %vm191, %v86, 0
    %194 = vmatprep.subr.mxu0 0.0
    %195 = vmatpush1.msra.mxu0 %v192
    %196 = vmatprep.subr.mxu0 0.0
    %197 = vmatpush1.msra.mxu0 0.0
    %198 = vmatprep.subr.mxu0 0.0
    %199 = vmatpush1.msra.mxu0 0.0
    %200 = vmatprep.subr.mxu0 0.0
    %201 = vmatpush1.msra.mxu0 0.0
    %202 = vmatprep.subr.mxu0 0.0
    %203 = vmatpush1.msra.mxu0 0.0
    %204 = vmatprep.subr.mxu0 0.0
    %205 = vmatpush1.msra.mxu0 0.0
    %206 = vmatprep.subr.mxu0 0.0
    %207 = vmatpush1.msra.mxu0 0.0
    %208 = vmatprep.subr.mxu0 0.0
    %209 = vmatpush1.msra.mxu0 0.0
    %210 = vmatprep.subr.mxu0 0.0
    %211 = vmatpush1.msra.mxu0 0.0
    %212 = vmatprep.subr.mxu0 0.0
    %213 = vmatpush1.msra.mxu0 0.0
    %214 = vmatprep.subr.mxu0 0.0
    %215 = vmatpush1.msra.mxu0 0.0
    %216 = vmatprep.subr.mxu0 0.0
    %217 = vmatpush1.msra.mxu0 0.0
    %218 = vmatprep.subr.mxu0 0.0
    %219 = vmatpush1.msra.mxu0 0.0
    %220 = vmatprep.subr.mxu0 0.0
    %221 = vmatpush1.msra.mxu0 0.0
    %222 = vmatprep.subr.mxu0 0.0
    %223 = vmatpush1.msra.mxu0 0.0
    %224 = vmatprep.subr.mxu0 0.0
    %225 = vmatpush1.msra.mxu0 0.0
    %226 = vmatprep.subr.mxu0 0.0
    %227 = vmatpush1.msra.mxu0 0.0
    %228 = vmatprep.subr.mxu0 0.0
    %229 = vmatpush1.msra.mxu0 0.0
    %230 = vmatprep.subr.mxu0 0.0
    %231 = vmatpush1.msra.mxu0 0.0
    %232 = vmatprep.subr.mxu0 0.0
    %233 = vmatpush1.msra.mxu0 0.0
    %234 = vmatprep.subr.mxu0 0.0
    %235 = vmatpush1.msra.mxu0 0.0
    %236 = vmatprep.subr.mxu0 0.0
    %237 = vmatpush1.msra.mxu0 0.0
    %238 = vmatprep.subr.mxu0 0.0
    %239 = vmatpush1.msra.mxu0 0.0
    %240 = vmatprep.subr.mxu0 0.0
    %241 = vmatpush1.msra.mxu0 0.0
    %242 = vmatprep.subr.mxu0 0.0
    %243 = vmatpush1.msra.mxu0 0.0
    %244 = vmatprep.subr.mxu0 0.0
    %245 = vmatpush1.msra.mxu0 0.0
    %246 = vmatprep.subr.mxu0 0.0
    %247 = vmatpush1.msra.mxu0 0.0
    %248 = vmatprep.subr.mxu0 0.0
    %249 = vmatpush1.msra.mxu0 0.0
    %250 = vmatprep.subr.mxu0 0.0
    %251 = vmatpush1.msra.mxu0 0.0
    %252 = vmatprep.subr.mxu0 0.0
    %253 = vmatpush1.msra.mxu0 0.0
    %254 = vmatprep.subr.mxu0 0.0
    %255 = vmatpush1.msra.mxu0 0.0
    %256 = vmatprep.subr.mxu0 0.0
    %257 = vmatpush1.msra.mxu0 0.0
    %258 = vmatprep.mubr.f32.mxu0 0.0
    %259 = vmatmul.mubr.f32.gmra.mrb[0].mxu0 %v180
    %v260 = vpop.f32.mrb[0].mxu0
    %v261 = vadd.f32 0.0, %v260
    %v262 = vpop.f32.mrb[0].mxu0
    %263 = vmatprep.mubr.f32.mxu0 0.0
    %264 = vmatmul.mubr.f32.gmra.mrb[0].mxu0 %v183
    %v265 = vpop.f32.mrb[0].mxu0
    %v266 = vadd.f32 0.0, %v265
    %v267 = vpop.f32.mrb[0].mxu0
    %268 = vmatprep.mubr.f32.mxu0 0.0
    %269 = vmatmul.mubr.f32.gmra.mrb[0].mxu0 %v186
    %v270 = vpop.f32.mrb[0].mxu0
    %v271 = vadd.f32 0.0, %v270
    %v272 = vpop.f32.mrb[0].mxu0
    %273 = vmatprep.mubr.f32.mxu0 0.0
    %274 = vmatmul.mubr.f32.gmra.mrb[0].mxu0 %v189
    %v275 = vpop.f32.mrb[0].mxu0
    %v276 = vadd.f32 0.0, %v275
    %v277 = vpop.f32.mrb[0].mxu0
    %278 = vdwg.mxu0
    %v280 = vsel %vm178, %v95, 0
    %v283 = vsel %vm178, %v96, 0
    %v286 = vsel %vm178, %v97, 0
    %v289 = vsel %vm178, %v98, 0
    %v292 = vsel %vm191, %v170, 0
    %294 = vmatprep.subr.mxu0 0.0
    %295 = vmatpush1.msra.mxu0 %v292
    %296 = vmatprep.subr.mxu0 0.0
    %297 = vmatpush1.msra.mxu0 0.0
    %298 = vmatprep.subr.mxu0 0.0
    %299 = vmatpush1.msra.mxu0 0.0
    %300 = vmatprep.subr.mxu0 0.0
    %301 = vmatpush1.msra.mxu0 0.0
    %302 = vmatprep.subr.mxu0 0.0
    %303 = vmatpush1.msra.mxu0 0.0
    %304 = vmatprep.subr.mxu0 0.0
    %305 = vmatpush1.msra.mxu0 0.0
    %306 = vmatprep.subr.mxu0 0.0
    %307 = vmatpush1.msra.mxu0 0.0
    %308 = vmatprep.subr.mxu0 0.0
    %309 = vmatpush1.msra.mxu0 0.0
    %310 = vmatprep.subr.mxu0 0.0
    %311 = vmatpush1.msra.mxu0 0.0
    %312 = vmatprep.subr.mxu0 0.0
    %313 = vmatpush1.msra.mxu0 0.0
    %314 = vmatprep.subr.mxu0 0.0
    %315 = vmatpush1.msra.mxu0 0.0
    %316 = vmatprep.subr.mxu0 0.0
    %317 = vmatpush1.msra.mxu0 0.0
    %318 = vmatprep.subr.mxu0 0.0
    %319 = vmatpush1.msra.mxu0 0.0
    %320 = vmatprep.subr.mxu0 0.0
    %321 = vmatpush1.msra.mxu0 0.0
    %322 = vmatprep.subr.mxu0 0.0
    %323 = vmatpush1.msra.mxu0 0.0
    %324 = vmatprep.subr.mxu0 0.0
    %325 = vmatpush1.msra.mxu0 0.0
    %326 = vmatprep.subr.mxu0 0.0
    %327 = vmatpush1.msra.mxu0 0.0
    %328 = vmatprep.subr.mxu0 0.0
    %329 = vmatpush1.msra.mxu0 0.0
    %330 = vmatprep.subr.mxu0 0.0
    %331 = vmatpush1.msra.mxu0 0.0
    %332 = vmatprep.subr.mxu0 0.0
    %333 = vmatpush1.msra.mxu0 0.0
    %334 = vmatprep.subr.mxu0 0.0
    %335 = vmatpush1.msra.mxu0 0.0
    %336 = vmatprep.subr.mxu0 0.0
    %337 = vmatpush1.msra.mxu0 0.0
    %338 = vmatprep.subr.mxu0 0.0
    %339 = vmatpush1.msra.mxu0 0.0
    %340 = vmatprep.subr.mxu0 0.0
    %341 = vmatpush1.msra.mxu0 0.0
    %342 = vmatprep.subr.mxu0 0.0
    %343 = vmatpush1.msra.mxu0 0.0
    %344 = vmatprep.subr.mxu0 0.0
    %345 = vmatpush1.msra.mxu0 0.0
    %346 = vmatprep.subr.mxu0 0.0
    %347 = vmatpush1.msra.mxu0 0.0
    %348 = vmatprep.subr.mxu0 0.0
    %349 = vmatpush1.msra.mxu0 0.0
    %350 = vmatprep.subr.mxu0 0.0
    %351 = vmatpush1.msra.mxu0 0.0
    %352 = vmatprep.subr.mxu0 0.0
    %353 = vmatpush1.msra.mxu0 0.0
    %354 = vmatprep.subr.mxu0 0.0
    %355 = vmatpush1.msra.mxu0 0.0
    %356 = vmatprep.subr.mxu0 0.0
    %357 = vmatpush1.msra.mxu0 0.0
    %358 = vmatprep.mubr.f32.mxu0 0.0
    %359 = vmatmul.mubr.f32.gmra.mrb[0].mxu0 %v280
    %v360 = vpop.f32.mrb[0].mxu0
    %v361 = vadd.f32 %v261, %v360
    %v362 = vpop.f32.mrb[0].mxu0
    %363 = vmatprep.mubr.f32.mxu0 0.0
    %364 = vmatmul.mubr.f32.gmra.mrb[0].mxu0 %v283
    %v365 = vpop.f32.mrb[0].mxu0
    %v366 = vadd.f32 %v266, %v365
    %v367 = vpop.f32.mrb[0].mxu0
    %368 = vmatprep.mubr.f32.mxu0 0.0
    %369 = vmatmul.mubr.f32.gmra.mrb[0].mxu0 %v286
    %v370 = vpop.f32.mrb[0].mxu0
    %v371 = vadd.f32 %v271, %v370
    %v372 = vpop.f32.mrb[0].mxu0
    %373 = vmatprep.mubr.f32.mxu0 0.0
    %374 = vmatmul.mubr.f32.gmra.mrb[0].mxu0 %v289
    %v375 = vpop.f32.mrb[0].mxu0
    %v376 = vadd.f32 %v276, %v375
    %v377 = vpop.f32.mrb[0].mxu0
    %378 = vdwg.mxu0
    %s379 = scalar_lea.vmem %s3, 64
    %v380 = vld [vmem:[%s379] sm:$0xff]
    %v381 = vld [vmem:[%s379 + $0x8] sm:$0xff]
    %v382 = vld [vmem:[%s379 + $0x10] sm:$0xff]
    %v383 = vld [vmem:[%s379 + $0x18] sm:$0xff]
    %384 = vmatprep.subr.mxu0 0.0
    %385 = vmatpush1.msra.mxu0 %v91
    %386 = vmatprep.subr.mxu0 0.0
    %387 = vmatpush1.msra.mxu0 %v92
    %388 = vmatprep.subr.mxu0 0.0
    %389 = vmatpush1.msra.mxu0 %v93
    %390 = vmatprep.subr.mxu0 0.0
    %391 = vmatpush1.msra.mxu0 %v94
    %392 = vmatprep.subr.mxu0 0.0
    %393 = vmatpush1.msra.mxu0 0.0
    %394 = vmatprep.subr.mxu0 0.0
    %395 = vmatpush1.msra.mxu0 0.0
    %396 = vmatprep.subr.mxu0 0.0
    %397 = vmatpush1.msra.mxu0 0.0
    %398 = vmatprep.subr.mxu0 0.0
    %399 = vmatpush1.msra.mxu0 0.0
    %400 = vmatprep.subr.mxu0 0.0
    %401 = vmatpush1.msra.mxu0 0.0
    %402 = vmatprep.subr.mxu0 0.0
    %403 = vmatpush1.msra.mxu0 0.0
    %404 = vmatprep.subr.mxu0 0.0
    %405 = vmatpush1.msra.mxu0 0.0
    %406 = vmatprep.subr.mxu0 0.0
    %407 = vmatpush1.msra.mxu0 0.0
    %408 = vmatprep.subr.mxu0 0.0
    %409 = vmatpush1.msra.mxu0 0.0
    %410 = vmatprep.subr.mxu0 0.0
    %411 = vmatpush1.msra.mxu0 0.0
    %412 = vmatprep.subr.mxu0 0.0
    %413 = vmatpush1.msra.mxu0 0.0
    %414 = vmatprep.subr.mxu0 0.0
    %415 = vmatpush1.msra.mxu0 0.0
    %416 = vmatprep.subr.mxu0 0.0
    %417 = vmatpush1.msra.mxu0 0.0
    %418 = vmatprep.subr.mxu0 0.0
    %419 = vmatpush1.msra.mxu0 0.0
    %420 = vmatprep.subr.mxu0 0.0
    %421 = vmatpush1.msra.mxu0 0.0
    %422 = vmatprep.subr.mxu0 0.0
    %423 = vmatpush1.msra.mxu0 0.0
    %424 = vmatprep.subr.mxu0 0.0
    %425 = vmatpush1.msra.mxu0 0.0
    %426 = vmatprep.subr.mxu0 0.0
    %427 = vmatpush1.msra.mxu0 0.0
    %428 = vmatprep.subr.mxu0 0.0
    %429 = vmatpush1.msra.mxu0 0.0
    %430 = vmatprep.subr.mxu0 0.0
    %431 = vmatpush1.msra.mxu0 0.0
    %432 = vmatprep.subr.mxu0 0.0
    %433 = vmatpush1.msra.mxu0 0.0
    %434 = vmatprep.subr.mxu0 0.0
    %435 = vmatpush1.msra.mxu0 0.0
    %436 = vmatprep.subr.mxu0 0.0
    %437 = vmatpush1.msra.mxu0 0.0
    %438 = vmatprep.subr.mxu0 0.0
    %439 = vmatpush1.msra.mxu0 0.0
    %440 = vmatprep.subr.mxu0 0.0
    %441 = vmatpush1.msra.mxu0 0.0
    %442 = vmatprep.subr.mxu0 0.0
    %443 = vmatpush1.msra.mxu0 0.0
    %444 = vmatprep.subr.mxu0 0.0
    %445 = vmatpush1.msra.mxu0 0.0
    %446 = vmatprep.subr.mxu0 0.0
    %447 = vmatpush1.msra.mxu0 0.0
    %448 = vmatprep.mubr.f32.mxu0 0.0
    %449 = vmatmul.mubr.f32.gmra.mrb[0].mxu0 %v101
    %v450 = vpop.f32.mrb[0].mxu0
    %v451 = vadd.f32 0.0, %v450
    %v452 = vpop.f32.mrb[0].mxu0
    %453 = vdwg.mxu0
    %v455 = vsel %vm178, %v380, 0
    %v458 = vsel %vm178, %v381, 0
    %v461 = vsel %vm178, %v382, 0
    %v464 = vsel %vm178, %v383, 0
    %v467 = vsel %vm191, %v451, 0
    %469 = vmatprep.subr.mxu0 0.0
    %470 = vmatpush1.msra.mxu0 %v467
    %471 = vmatprep.subr.mxu0 0.0
    %472 = vmatpush1.msra.mxu0 0.0
    %473 = vmatprep.subr.mxu0 0.0
    %474 = vmatpush1.msra.mxu0 0.0
    %475 = vmatprep.subr.mxu0 0.0
    %476 = vmatpush1.msra.mxu0 0.0
    %477 = vmatprep.subr.mxu0 0.0
    %478 = vmatpush1.msra.mxu0 0.0
    %479 = vmatprep.subr.mxu0 0.0
    %480 = vmatpush1.msra.mxu0 0.0
    %481 = vmatprep.subr.mxu0 0.0
    %482 = vmatpush1.msra.mxu0 0.0
    %483 = vmatprep.subr.mxu0 0.0
    %484 = vmatpush1.msra.mxu0 0.0
    %485 = vmatprep.subr.mxu0 0.0
    %486 = vmatpush1.msra.mxu0 0.0
    %487 = vmatprep.subr.mxu0 0.0
    %488 = vmatpush1.msra.mxu0 0.0
    %489 = vmatprep.subr.mxu0 0.0
    %490 = vmatpush1.msra.mxu0 0.0
    %491 = vmatprep.subr.mxu0 0.0
    %492 = vmatpush1.msra.mxu0 0.0
    %493 = vmatprep.subr.mxu0 0.0
    %494 = vmatpush1.msra.mxu0 0.0
    %495 = vmatprep.subr.mxu0 0.0
    %496 = vmatpush1.msra.mxu0 0.0
    %497 = vmatprep.subr.mxu0 0.0
    %498 = vmatpush1.msra.mxu0 0.0
    %499 = vmatprep.subr.mxu0 0.0
    %500 = vmatpush1.msra.mxu0 0.0
    %501 = vmatprep.subr.mxu0 0.0
    %502 = vmatpush1.msra.mxu0 0.0
    %503 = vmatprep.subr.mxu0 0.0
    %504 = vmatpush1.msra.mxu0 0.0
    %505 = vmatprep.subr.mxu0 0.0
    %506 = vmatpush1.msra.mxu0 0.0
    %507 = vmatprep.subr.mxu0 0.0
    %508 = vmatpush1.msra.mxu0 0.0
    %509 = vmatprep.subr.mxu0 0.0
    %510 = vmatpush1.msra.mxu0 0.0
    %511 = vmatprep.subr.mxu0 0.0
    %512 = vmatpush1.msra.mxu0 0.0
    %513 = vmatprep.subr.mxu0 0.0
    %514 = vmatpush1.msra.mxu0 0.0
    %515 = vmatprep.subr.mxu0 0.0
    %516 = vmatpush1.msra.mxu0 0.0
    %517 = vmatprep.subr.mxu0 0.0
    %518 = vmatpush1.msra.mxu0 0.0
    %519 = vmatprep.subr.mxu0 0.0
    %520 = vmatpush1.msra.mxu0 0.0
    %521 = vmatprep.subr.mxu0 0.0
    %522 = vmatpush1.msra.mxu0 0.0
    %523 = vmatprep.subr.mxu0 0.0
    %524 = vmatpush1.msra.mxu0 0.0
    %525 = vmatprep.subr.mxu0 0.0
    %526 = vmatpush1.msra.mxu0 0.0
    %527 = vmatprep.subr.mxu0 0.0
    %528 = vmatpush1.msra.mxu0 0.0
    %529 = vmatprep.subr.mxu0 0.0
    %530 = vmatpush1.msra.mxu0 0.0
    %531 = vmatprep.subr.mxu0 0.0
    %532 = vmatpush1.msra.mxu0 0.0
    %533 = vmatprep.mubr.f32.mxu0 0.0
    %534 = vmatmul.mubr.f32.gmra.mrb[0].mxu0 %v455
    %v535 = vpop.f32.mrb[0].mxu0
    %v536 = vadd.f32 0.0, %v535
    %v537 = vpop.f32.mrb[0].mxu0
    %538 = vmatprep.mubr.f32.mxu0 0.0
    %539 = vmatmul.mubr.f32.gmra.mrb[0].mxu0 %v458
    %v540 = vpop.f32.mrb[0].mxu0
    %v541 = vadd.f32 0.0, %v540
    %v542 = vpop.f32.mrb[0].mxu0
    %543 = vmatprep.mubr.f32.mxu0 0.0
    %544 = vmatmul.mubr.f32.gmra.mrb[0].mxu0 %v461
    %v545 = vpop.f32.mrb[0].mxu0
    %v546 = vadd.f32 0.0, %v545
    %v547 = vpop.f32.mrb[0].mxu0
    %548 = vmatprep.mubr.f32.mxu0 0.0
    %549 = vmatmul.mubr.f32.gmra.mrb[0].mxu0 %v464
    %v550 = vpop.f32.mrb[0].mxu0
    %v551 = vadd.f32 0.0, %v550
    %v552 = vpop.f32.mrb[0].mxu0
    %553 = vdwg.mxu0
    %v554 = vadd.f32 %v361, %v536
    %v555 = vadd.f32 %v366, %v541
    %v556 = vadd.f32 %v371, %v546
    %v557 = vadd.f32 %v376, %v551
    %v558 = vld [vmem:[%s4] sm:$0xff]
    %v559 = vld [vmem:[%s4 + $0x8] sm:$0xff]
    %v560 = vld [vmem:[%s4 + $0x10] sm:$0xff]
    %v561 = vld [vmem:[%s4 + $0x18] sm:$0xff]
    %563 = vset.pattern.permute.xlu0 0
    %564 = vperm.xlu0 %563, %v558
    %v565 = vpop.permute.xlu0 %564
    %568 = vset.pattern.permute.xlu0 0
    %569 = vperm.xlu0 %568, %v559
    %v570 = vpop.permute.xlu0 %569
    %573 = vset.pattern.permute.xlu0 0
    %574 = vperm.xlu0 %573, %v560
    %v575 = vpop.permute.xlu0 %574
    %578 = vset.pattern.permute.xlu0 0
    %579 = vperm.xlu0 %578, %v561
    %v580 = vpop.permute.xlu0 %579
    %v582 = vmul.f32 %v554, %v565
    %v583 = vmul.f32 %v555, %v570
    %v584 = vmul.f32 %v556, %v575
    %v585 = vmul.f32 %v557, %v580
    %v586 = vld [vmem:[%s5] sm:$0xff]
    %v587 = vld [vmem:[%s5 + $0x8] sm:$0xff]
    %v588 = vld [vmem:[%s5 + $0x10] sm:$0xff]
    %v589 = vld [vmem:[%s5 + $0x18] sm:$0xff]
    %591 = vset.pattern.permute.xlu0 0
    %592 = vperm.xlu0 %591, %v586
    %v593 = vpop.permute.xlu0 %592
    %596 = vset.pattern.permute.xlu0 0
    %597 = vperm.xlu0 %596, %v587
    %v598 = vpop.permute.xlu0 %597
    %601 = vset.pattern.permute.xlu0 0
    %602 = vperm.xlu0 %601, %v588
    %v603 = vpop.permute.xlu0 %602
    %606 = vset.pattern.permute.xlu0 0
    %607 = vperm.xlu0 %606, %v589
    %v608 = vpop.permute.xlu0 %607
    %v610 = vadd.f32 %v582, %v593
    %v611 = vadd.f32 %v583, %v598
    %v612 = vadd.f32 %v584, %v603
    %v613 = vadd.f32 %v585, %v608
    %v614 = vmax.f32 %v610, 0.0
    %v615 = vmax.f32 %v611, 0.0
    %v616 = vmax.f32 %v612, 0.0
    %v617 = vmax.f32 %v613, 0.0
    %v618 = vld [vmem:[%s6] sm:$0xff]
    %v619 = vld [vmem:[%s6 + $0x8] sm:$0xff]
    %v620 = vld [vmem:[%s6 + $0x10] sm:$0xff]
    %v621 = vld [vmem:[%s6 + $0x18] sm:$0xff]
    %v622 = vld [vmem:[%s6 + $0x20] sm:$0xff]
    %v623 = vld [vmem:[%s6 + $0x28] sm:$0xff]
    %v624 = vld [vmem:[%s6 + $0x30] sm:$0xff]
    %v625 = vld [vmem:[%s6 + $0x38] sm:$0xff]
    %v627 = vsel %vm99, %v614, 0
    %v630 = vsel %vm99, %v615, 0
    %v633 = vsel %vm99, %v616, 0
    %v636 = vsel %vm99, %v617, 0
    %638 = vmatprep.subr.mxu0 0.0
    %639 = vmatpush1.msra.mxu0 %v87
    %640 = vmatprep.subr.mxu0 0.0
    %641 = vmatpush1.msra.mxu0 %v88
    %642 = vmatprep.subr.mxu0 0.0
    %643 = vmatpush1.msra.mxu0 %v89
    %644 = vmatprep.subr.mxu0 0.0
    %645 = vmatpush1.msra.mxu0 %v90
    %646 = vmatprep.subr.mxu0 0.0
    %647 = vmatpush1.msra.mxu0 0.0
    %648 = vmatprep.subr.mxu0 0.0
    %649 = vmatpush1.msra.mxu0 0.0
    %650 = vmatprep.subr.mxu0 0.0
    %651 = vmatpush1.msra.mxu0 0.0
    %652 = vmatprep.subr.mxu0 0.0
    %653 = vmatpush1.msra.mxu0 0.0
    %654 = vmatprep.subr.mxu0 0.0
    %655 = vmatpush1.msra.mxu0 0.0
    %656 = vmatprep.subr.mxu0 0.0
    %657 = vmatpush1.msra.mxu0 0.0
    %658 = vmatprep.subr.mxu0 0.0
    %659 = vmatpush1.msra.mxu0 0.0
    %660 = vmatprep.subr.mxu0 0.0
    %661 = vmatpush1.msra.mxu0 0.0
    %662 = vmatprep.subr.mxu0 0.0
    %663 = vmatpush1.msra.mxu0 0.0
    %664 = vmatprep.subr.mxu0 0.0
    %665 = vmatpush1.msra.mxu0 0.0
    %666 = vmatprep.subr.mxu0 0.0
    %667 = vmatpush1.msra.mxu0 0.0
    %668 = vmatprep.subr.mxu0 0.0
    %669 = vmatpush1.msra.mxu0 0.0
    %670 = vmatprep.subr.mxu0 0.0
    %671 = vmatpush1.msra.mxu0 0.0
    %672 = vmatprep.subr.mxu0 0.0
    %673 = vmatpush1.msra.mxu0 0.0
    %674 = vmatprep.subr.mxu0 0.0
    %675 = vmatpush1.msra.mxu0 0.0
    %676 = vmatprep.subr.mxu0 0.0
    %677 = vmatpush1.msra.mxu0 0.0
    %678 = vmatprep.subr.mxu0 0.0
    %679 = vmatpush1.msra.mxu0 0.0
    %680 = vmatprep.subr.mxu0 0.0
    %681 = vmatpush1.msra.mxu0 0.0
    %682 = vmatprep.subr.mxu0 0.0
    %683 = vmatpush1.msra.mxu0 0.0
    %684 = vmatprep.subr.mxu0 0.0
    %685 = vmatpush1.msra.mxu0 0.0
    %686 = vmatprep.subr.mxu0 0.0
    %687 = vmatpush1.msra.mxu0 0.0
    %688 = vmatprep.subr.mxu0 0.0
    %689 = vmatpush1.msra.mxu0 0.0
    %690 = vmatprep.subr.mxu0 0.0
    %691 = vmatpush1.msra.mxu0 0.0
    %692 = vmatprep.subr.mxu0 0.0
    %693 = vmatpush1.msra.mxu0 0.0
    %694 = vmatprep.subr.mxu0 0.0
    %695 = vmatpush1.msra.mxu0 0.0
    %696 = vmatprep.subr.mxu0 0.0
    %697 = vmatpush1.msra.mxu0 0.0
    %698 = vmatprep.subr.mxu0 0.0
    %699 = vmatpush1.msra.mxu0 0.0
    %700 = vmatprep.subr.mxu0 0.0
    %701 = vmatpush1.msra.mxu0 0.0
    %702 = vmatprep.mubr.f32.mxu0 0.0
    %703 = vmatmul.mubr.f32.gmra.mrb[0].mxu0 %v627
    %v704 = vpop.f32.mrb[0].mxu0
    %v705 = vadd.f32 0.0, %v704
    %v706 = vpop.f32.mrb[0].mxu0
    %707 = vmatprep.mubr.f32.mxu0 0.0
    %708 = vmatmul.mubr.f32.gmra.mrb[0].mxu0 %v630
    %v709 = vpop.f32.mrb[0].mxu0
    %v710 = vadd.f32 0.0, %v709
    %v711 = vpop.f32.mrb[0].mxu0
    %712 = vmatprep.mubr.f32.mxu0 0.0
    %713 = vmatmul.mubr.f32.gmra.mrb[0].mxu0 %v633
    %v714 = vpop.f32.mrb[0].mxu0
    %v715 = vadd.f32 0.0, %v714
    %v716 = vpop.f32.mrb[0].mxu0
    %717 = vmatprep.mubr.f32.mxu0 0.0
    %718 = vmatmul.mubr.f32.gmra.mrb[0].mxu0 %v636
    %v719 = vpop.f32.mrb[0].mxu0
    %v720 = vadd.f32 0.0, %v719
    %v721 = vpop.f32.mrb[0].mxu0
    %722 = vdwg.mxu0
    %s723 = scalar_lea.vmem %s6, 64
    %v724 = vld [vmem:[%s723] sm:$0xff]
    %v725 = vld [vmem:[%s723 + $0x8] sm:$0xff]
    %v726 = vld [vmem:[%s723 + $0x10] sm:$0xff]
    %v727 = vld [vmem:[%s723 + $0x18] sm:$0xff]
    %v728 = vld [vmem:[%s723 + $0x20] sm:$0xff]
    %v729 = vld [vmem:[%s723 + $0x28] sm:$0xff]
    %v730 = vld [vmem:[%s723 + $0x30] sm:$0xff]
    %v731 = vld [vmem:[%s723 + $0x38] sm:$0xff]
    %v733 = vsel %vm99, %v724, 0
    %v736 = vsel %vm99, %v725, 0
    %v739 = vsel %vm99, %v726, 0
    %v742 = vsel %vm99, %v727, 0
    %v745 = vsel %vm99, %v728, 0
    %v748 = vsel %vm99, %v729, 0
    %v751 = vsel %vm99, %v730, 0
    %v754 = vsel %vm99, %v731, 0
    %756 = vmatprep.subr.mxu0 0.0
    %757 = vmatpush1.msra.mxu0 %v614
    %758 = vmatprep.subr.mxu0 0.0
    %759 = vmatpush1.msra.mxu0 %v615
    %760 = vmatprep.subr.mxu0 0.0
    %761 = vmatpush1.msra.mxu0 %v616
    %762 = vmatprep.subr.mxu0 0.0
    %763 = vmatpush1.msra.mxu0 %v617
    %764 = vmatprep.subr.mxu0 0.0
    %765 = vmatpush1.msra.mxu0 0.0
    %766 = vmatprep.subr.mxu0 0.0
    %767 = vmatpush1.msra.mxu0 0.0
    %768 = vmatprep.subr.mxu0 0.0
    %769 = vmatpush1.msra.mxu0 0.0
    %770 = vmatprep.subr.mxu0 0.0
    %771 = vmatpush1.msra.mxu0 0.0
    %772 = vmatprep.subr.mxu0 0.0
    %773 = vmatpush1.msra.mxu0 0.0
    %774 = vmatprep.subr.mxu0 0.0
    %775 = vmatpush1.msra.mxu0 0.0
    %776 = vmatprep.subr.mxu0 0.0
    %777 = vmatpush1.msra.mxu0 0.0
    %778 = vmatprep.subr.mxu0 0.0
    %779 = vmatpush1.msra.mxu0 0.0
    %780 = vmatprep.subr.mxu0 0.0
    %781 = vmatpush1.msra.mxu0 0.0
    %782 = vmatprep.subr.mxu0 0.0
    %783 = vmatpush1.msra.mxu0 0.0
    %784 = vmatprep.subr.mxu0 0.0
    %785 = vmatpush1.msra.mxu0 0.0
    %786 = vmatprep.subr.mxu0 0.0
    %787 = vmatpush1.msra.mxu0 0.0
    %788 = vmatprep.subr.mxu0 0.0
    %789 = vmatpush1.msra.mxu0 0.0
    %790 = vmatprep.subr.mxu0 0.0
    %791 = vmatpush1.msra.mxu0 0.0
    %792 = vmatprep.subr.mxu0 0.0
    %793 = vmatpush1.msra.mxu0 0.0
    %794 = vmatprep.subr.mxu0 0.0
    %795 = vmatpush1.msra.mxu0 0.0
    %796 = vmatprep.subr.mxu0 0.0
    %797 = vmatpush1.msra.mxu0 0.0
    %798 = vmatprep.subr.mxu0 0.0
    %799 = vmatpush1.msra.mxu0 0.0
    %800 = vmatprep.subr.mxu0 0.0
    %801 = vmatpush1.msra.mxu0 0.0
    %802 = vmatprep.subr.mxu0 0.0
    %803 = vmatpush1.msra.mxu0 0.0
    %804 = vmatprep.subr.mxu0 0.0
    %805 = vmatpush1.msra.mxu0 0.0
    %806 = vmatprep.subr.mxu0 0.0
    %807 = vmatpush1.msra.mxu0 0.0
    %808 = vmatprep.subr.mxu0 0.0
    %809 = vmatpush1.msra.mxu0 0.0
    %810 = vmatprep.subr.mxu0 0.0
    %811 = vmatpush1.msra.mxu0 0.0
    %812 = vmatprep.subr.mxu0 0.0
    %813 = vmatpush1.msra.mxu0 0.0
    %814 = vmatprep.subr.mxu0 0.0
    %815 = vmatpush1.msra.mxu0 0.0
    %816 = vmatprep.subr.mxu0 0.0
    %817 = vmatpush1.msra.mxu0 0.0
    %818 = vmatprep.subr.mxu0 0.0
    %819 = vmatpush1.msra.mxu0 0.0
    %820 = vmatprep.mubr.f32.mxu0 0.0
    %821 = vmatmul.mubr.f32.gmra.mrb[0].mxu0 %v733
    %v822 = vpop.f32.mrb[0].mxu0
    %v823 = vadd.f32 0.0, %v822
    %v824 = vpop.f32.mrb[0].mxu0
    %825 = vmatprep.mubr.f32.mxu0 0.0
    %826 = vmatmul.mubr.f32.gmra.mrb[0].mxu0 %v736
    %v827 = vpop.f32.mrb[0].mxu0
    %v828 = vadd.f32 0.0, %v827
    %v829 = vpop.f32.mrb[0].mxu0
    %830 = vmatprep.mubr.f32.mxu0 0.0
    %831 = vmatmul.mubr.f32.gmra.mrb[0].mxu0 %v739
    %v832 = vpop.f32.mrb[0].mxu0
    %v833 = vadd.f32 0.0, %v832
    %v834 = vpop.f32.mrb[0].mxu0
    %835 = vmatprep.mubr.f32.mxu0 0.0
    %836 = vmatmul.mubr.f32.gmra.mrb[0].mxu0 %v742
    %v837 = vpop.f32.mrb[0].mxu0
    %v838 = vadd.f32 0.0, %v837
    %v839 = vpop.f32.mrb[0].mxu0
    %840 = vmatprep.mubr.f32.mxu0 0.0
    %841 = vmatmul.mubr.f32.gmra.mrb[0].mxu0 %v745
    %v842 = vpop.f32.mrb[0].mxu0
    %v843 = vadd.f32 0.0, %v842
    %v844 = vpop.f32.mrb[0].mxu0
    %845 = vmatprep.mubr.f32.mxu0 0.0
    %846 = vmatmul.mubr.f32.gmra.mrb[0].mxu0 %v748
    %v847 = vpop.f32.mrb[0].mxu0
    %v848 = vadd.f32 0.0, %v847
    %v849 = vpop.f32.mrb[0].mxu0
    %850 = vmatprep.mubr.f32.mxu0 0.0
    %851 = vmatmul.mubr.f32.gmra.mrb[0].mxu0 %v751
    %v852 = vpop.f32.mrb[0].mxu0
    %v853 = vadd.f32 0.0, %v852
    %v854 = vpop.f32.mrb[0].mxu0
    %855 = vmatprep.mubr.f32.mxu0 0.0
    %856 = vmatmul.mubr.f32.gmra.mrb[0].mxu0 %v754
    %v857 = vpop.f32.mrb[0].mxu0
    %v858 = vadd.f32 0.0, %v857
    %v859 = vpop.f32.mrb[0].mxu0
    %860 = vdwg.mxu0
    %v862 = vsel %vm99, %v618, 0
    %v865 = vsel %vm99, %v619, 0
    %v868 = vsel %vm99, %v620, 0
    %v871 = vsel %vm99, %v621, 0
    %v874 = vsel %vm99, %v622, 0
    %v877 = vsel %vm99, %v623, 0
    %v880 = vsel %vm99, %v624, 0
    %v883 = vsel %vm99, %v625, 0
    %885 = vmatprep.subr.mxu0 0.0
    %886 = vmatpush1.msra.mxu0 %v705
    %887 = vmatprep.subr.mxu0 0.0
    %888 = vmatpush1.msra.mxu0 %v710
    %889 = vmatprep.subr.mxu0 0.0
    %890 = vmatpush1.msra.mxu0 %v715
    %891 = vmatprep.subr.mxu0 0.0
    %892 = vmatpush1.msra.mxu0 %v720
    %893 = vmatprep.subr.mxu0 0.0
    %894 = vmatpush1.msra.mxu0 0.0
    %895 = vmatprep.subr.mxu0 0.0
    %896 = vmatpush1.msra.mxu0 0.0
    %897 = vmatprep.subr.mxu0 0.0
    %898 = vmatpush1.msra.mxu0 0.0
    %899 = vmatprep.subr.mxu0 0.0
    %900 = vmatpush1.msra.mxu0 0.0
    %901 = vmatprep.subr.mxu0 0.0
    %902 = vmatpush1.msra.mxu0 0.0
    %903 = vmatprep.subr.mxu0 0.0
    %904 = vmatpush1.msra.mxu0 0.0
    %905 = vmatprep.subr.mxu0 0.0
    %906 = vmatpush1.msra.mxu0 0.0
    %907 = vmatprep.subr.mxu0 0.0
    %908 = vmatpush1.msra.mxu0 0.0
    %909 = vmatprep.subr.mxu0 0.0
    %910 = vmatpush1.msra.mxu0 0.0
    %911 = vmatprep.subr.mxu0 0.0
    %912 = vmatpush1.msra.mxu0 0.0
    %913 = vmatprep.subr.mxu0 0.0
    %914 = vmatpush1.msra.mxu0 0.0
    %915 = vmatprep.subr.mxu0 0.0
    %916 = vmatpush1.msra.mxu0 0.0
    %917 = vmatprep.subr.mxu0 0.0
    %918 = vmatpush1.msra.mxu0 0.0
    %919 = vmatprep.subr.mxu0 0.0
    %920 = vmatpush1.msra.mxu0 0.0
    %921 = vmatprep.subr.mxu0 0.0
    %922 = vmatpush1.msra.mxu0 0.0
    %923 = vmatprep.subr.mxu0 0.0
    %924 = vmatpush1.msra.mxu0 0.0
    %925 = vmatprep.subr.mxu0 0.0
    %926 = vmatpush1.msra.mxu0 0.0
    %927 = vmatprep.subr.mxu0 0.0
    %928 = vmatpush1.msra.mxu0 0.0
    %929 = vmatprep.subr.mxu0 0.0
    %930 = vmatpush1.msra.mxu0 0.0
    %931 = vmatprep.subr.mxu0 0.0
    %932 = vmatpush1.msra.mxu0 0.0
    %933 = vmatprep.subr.mxu0 0.0
    %934 = vmatpush1.msra.mxu0 0.0
    %935 = vmatprep.subr.mxu0 0.0
    %936 = vmatpush1.msra.mxu0 0.0
    %937 = vmatprep.subr.mxu0 0.0
    %938 = vmatpush1.msra.mxu0 0.0
    %939 = vmatprep.subr.mxu0 0.0
    %940 = vmatpush1.msra.mxu0 0.0
    %941 = vmatprep.subr.mxu0 0.0
    %942 = vmatpush1.msra.mxu0 0.0
    %943 = vmatprep.subr.mxu0 0.0
    %944 = vmatpush1.msra.mxu0 0.0
    %945 = vmatprep.subr.mxu0 0.0
    %946 = vmatpush1.msra.mxu0 0.0
    %947 = vmatprep.subr.mxu0 0.0
    %948 = vmatpush1.msra.mxu0 0.0
    %949 = vmatprep.mubr.f32.mxu0 0.0
    %950 = vmatmul.mubr.f32.gmra.mrb[0].mxu0 %v862
    %v951 = vpop.f32.mrb[0].mxu0
    %v952 = vadd.f32 %v823, %v951
    %v953 = vpop.f32.mrb[0].mxu0
    %954 = vmatprep.mubr.f32.mxu0 0.0
    %955 = vmatmul.mubr.f32.gmra.mrb[0].mxu0 %v865
    %v956 = vpop.f32.mrb[0].mxu0
    %v957 = vadd.f32 %v828, %v956
    %v958 = vpop.f32.mrb[0].mxu0
    %959 = vmatprep.mubr.f32.mxu0 0.0
    %960 = vmatmul.mubr.f32.gmra.mrb[0].mxu0 %v868
    %v961 = vpop.f32.mrb[0].mxu0
    %v962 = vadd.f32 %v833, %v961
    %v963 = vpop.f32.mrb[0].mxu0
    %964 = vmatprep.mubr.f32.mxu0 0.0
    %965 = vmatmul.mubr.f32.gmra.mrb[0].mxu0 %v871
    %v966 = vpop.f32.mrb[0].mxu0
    %v967 = vadd.f32 %v838, %v966
    %v968 = vpop.f32.mrb[0].mxu0
    %969 = vmatprep.mubr.f32.mxu0 0.0
    %970 = vmatmul.mubr.f32.gmra.mrb[0].mxu0 %v874
    %v971 = vpop.f32.mrb[0].mxu0
    %v972 = vadd.f32 %v843, %v971
    %v973 = vpop.f32.mrb[0].mxu0
    %974 = vmatprep.mubr.f32.mxu0 0.0
    %975 = vmatmul.mubr.f32.gmra.mrb[0].mxu0 %v877
    %v976 = vpop.f32.mrb[0].mxu0
    %v977 = vadd.f32 %v848, %v976
    %v978 = vpop.f32.mrb[0].mxu0
    %979 = vmatprep.mubr.f32.mxu0 0.0
    %980 = vmatmul.mubr.f32.gmra.mrb[0].mxu0 %v880
    %v981 = vpop.f32.mrb[0].mxu0
    %v982 = vadd.f32 %v853, %v981
    %v983 = vpop.f32.mrb[0].mxu0
    %984 = vmatprep.mubr.f32.mxu0 0.0
    %985 = vmatmul.mubr.f32.gmra.mrb[0].mxu0 %v883
    %v986 = vpop.f32.mrb[0].mxu0
    %v987 = vadd.f32 %v858, %v986
    %v988 = vpop.f32.mrb[0].mxu0
    %989 = vdwg.mxu0
    %s990 = scalar_lea.vmem %s6, 128
    %v991 = vld [vmem:[%s990] sm:$0xff]
    %v992 = vld [vmem:[%s990 + $0x8] sm:$0xff]
    %v993 = vld [vmem:[%s990 + $0x10] sm:$0xff]
    %v994 = vld [vmem:[%s990 + $0x18] sm:$0xff]
    %v995 = vld [vmem:[%s990 + $0x20] sm:$0xff]
    %v996 = vld [vmem:[%s990 + $0x28] sm:$0xff]
    %v997 = vld [vmem:[%s990 + $0x30] sm:$0xff]
    %v998 = vld [vmem:[%s990 + $0x38] sm:$0xff]
    %999 = vmatprep.subr.mxu0 0.0
    %1000 = vmatpush1.msra.mxu0 %v91
    %1001 = vmatprep.subr.mxu0 0.0
    %1002 = vmatpush1.msra.mxu0 %v92
    %1003 = vmatprep.subr.mxu0 0.0
    %1004 = vmatpush1.msra.mxu0 %v93
    %1005 = vmatprep.subr.mxu0 0.0
    %1006 = vmatpush1.msra.mxu0 %v94
    %1007 = vmatprep.subr.mxu0 0.0
    %1008 = vmatpush1.msra.mxu0 0.0
    %1009 = vmatprep.subr.mxu0 0.0
    %1010 = vmatpush1.msra.mxu0 0.0
    %1011 = vmatprep.subr.mxu0 0.0
    %1012 = vmatpush1.msra.mxu0 0.0
    %1013 = vmatprep.subr.mxu0 0.0
    %1014 = vmatpush1.msra.mxu0 0.0
    %1015 = vmatprep.subr.mxu0 0.0
    %1016 = vmatpush1.msra.mxu0 0.0
    %1017 = vmatprep.subr.mxu0 0.0
    %1018 = vmatpush1.msra.mxu0 0.0
    %1019 = vmatprep.subr.mxu0 0.0
    %1020 = vmatpush1.msra.mxu0 0.0
    %1021 = vmatprep.subr.mxu0 0.0
    %1022 = vmatpush1.msra.mxu0 0.0
    %1023 = vmatprep.subr.mxu0 0.0
    %1024 = vmatpush1.msra.mxu0 0.0
    %1025 = vmatprep.subr.mxu0 0.0
    %1026 = vmatpush1.msra.mxu0 0.0
    %1027 = vmatprep.subr.mxu0 0.0
    %1028 = vmatpush1.msra.mxu0 0.0
    %1029 = vmatprep.subr.mxu0 0.0
    %1030 = vmatpush1.msra.mxu0 0.0
    %1031 = vmatprep.subr.mxu0 0.0
    %1032 = vmatpush1.msra.mxu0 0.0
    %1033 = vmatprep.subr.mxu0 0.0
    %1034 = vmatpush1.msra.mxu0 0.0
    %1035 = vmatprep.subr.mxu0 0.0
    %1036 = vmatpush1.msra.mxu0 0.0
    %1037 = vmatprep.subr.mxu0 0.0
    %1038 = vmatpush1.msra.mxu0 0.0
    %1039 = vmatprep.subr.mxu0 0.0
    %1040 = vmatpush1.msra.mxu0 0.0
    %1041 = vmatprep.subr.mxu0 0.0
    %1042 = vmatpush1.msra.mxu0 0.0
    %1043 = vmatprep.subr.mxu0 0.0
    %1044 = vmatpush1.msra.mxu0 0.0
    %1045 = vmatprep.subr.mxu0 0.0
    %1046 = vmatpush1.msra.mxu0 0.0
    %1047 = vmatprep.subr.mxu0 0.0
    %1048 = vmatpush1.msra.mxu0 0.0
    %1049 = vmatprep.subr.mxu0 0.0
    %1050 = vmatpush1.msra.mxu0 0.0
    %1051 = vmatprep.subr.mxu0 0.0
    %1052 = vmatpush1.msra.mxu0 0.0
    %1053 = vmatprep.subr.mxu0 0.0
    %1054 = vmatpush1.msra.mxu0 0.0
    %1055 = vmatprep.subr.mxu0 0.0
    %1056 = vmatpush1.msra.mxu0 0.0
    %1057 = vmatprep.subr.mxu0 0.0
    %1058 = vmatpush1.msra.mxu0 0.0
    %1059 = vmatprep.subr.mxu0 0.0
    %1060 = vmatpush1.msra.mxu0 0.0
    %1061 = vmatprep.subr.mxu0 0.0
    %1062 = vmatpush1.msra.mxu0 0.0
    %1063 = vmatprep.mubr.f32.mxu0 0.0
    %1064 = vmatmul.mubr.f32.gmra.mrb[0].mxu0 %v627
    %v1065 = vpop.f32.mrb[0].mxu0
    %v1066 = vadd.f32 0.0, %v1065
    %v1067 = vpop.f32.mrb[0].mxu0
    %1068 = vmatprep.mubr.f32.mxu0 0.0
    %1069 = vmatmul.mubr.f32.gmra.mrb[0].mxu0 %v630
    %v1070 = vpop.f32.mrb[0].mxu0
    %v1071 = vadd.f32 0.0, %v1070
    %v1072 = vpop.f32.mrb[0].mxu0
    %1073 = vmatprep.mubr.f32.mxu0 0.0
    %1074 = vmatmul.mubr.f32.gmra.mrb[0].mxu0 %v633
    %v1075 = vpop.f32.mrb[0].mxu0
    %v1076 = vadd.f32 0.0, %v1075
    %v1077 = vpop.f32.mrb[0].mxu0
    %1078 = vmatprep.mubr.f32.mxu0 0.0
    %1079 = vmatmul.mubr.f32.gmra.mrb[0].mxu0 %v636
    %v1080 = vpop.f32.mrb[0].mxu0
    %v1081 = vadd.f32 0.0, %v1080
    %v1082 = vpop.f32.mrb[0].mxu0
    %1083 = vdwg.mxu0
    %v1085 = vsel %vm99, %v991, 0
    %v1088 = vsel %vm99, %v992, 0
    %v1091 = vsel %vm99, %v993, 0
    %v1094 = vsel %vm99, %v994, 0
    %v1097 = vsel %vm99, %v995, 0
    %v1100 = vsel %vm99, %v996, 0
    %v1103 = vsel %vm99, %v997, 0
    %v1106 = vsel %vm99, %v998, 0
    %1108 = vmatprep.subr.mxu0 0.0
    %1109 = vmatpush1.msra.mxu0 %v1066
    %1110 = vmatprep.subr.mxu0 0.0
    %1111 = vmatpush1.msra.mxu0 %v1071
    %1112 = vmatprep.subr.mxu0 0.0
    %1113 = vmatpush1.msra.mxu0 %v1076
    %1114 = vmatprep.subr.mxu0 0.0
    %1115 = vmatpush1.msra.mxu0 %v1081
    %1116 = vmatprep.subr.mxu0 0.0
    %1117 = vmatpush1.msra.mxu0 0.0
    %1118 = vmatprep.subr.mxu0 0.0
    %1119 = vmatpush1.msra.mxu0 0.0
    %1120 = vmatprep.subr.mxu0 0.0
    %1121 = vmatpush1.msra.mxu0 0.0
    %1122 = vmatprep.subr.mxu0 0.0
    %1123 = vmatpush1.msra.mxu0 0.0
    %1124 = vmatprep.subr.mxu0 0.0
    %1125 = vmatpush1.msra.mxu0 0.0
    %1126 = vmatprep.subr.mxu0 0.0
    %1127 = vmatpush1.msra.mxu0 0.0
    %1128 = vmatprep.subr.mxu0 0.0
    %1129 = vmatpush1.msra.mxu0 0.0
    %1130 = vmatprep.subr.mxu0 0.0
    %1131 = vmatpush1.msra.mxu0 0.0
    %1132 = vmatprep.subr.mxu0 0.0
    %1133 = vmatpush1.msra.mxu0 0.0
    %1134 = vmatprep.subr.mxu0 0.0
    %1135 = vmatpush1.msra.mxu0 0.0
    %1136 = vmatprep.subr.mxu0 0.0
    %1137 = vmatpush1.msra.mxu0 0.0
    %1138 = vmatprep.subr.mxu0 0.0
    %1139 = vmatpush1.msra.mxu0 0.0
    %1140 = vmatprep.subr.mxu0 0.0
    %1141 = vmatpush1.msra.mxu0 0.0
    %1142 = vmatprep.subr.mxu0 0.0
    %1143 = vmatpush1.msra.mxu0 0.0
    %1144 = vmatprep.subr.mxu0 0.0
    %1145 = vmatpush1.msra.mxu0 0.0
    %1146 = vmatprep.subr.mxu0 0.0
    %1147 = vmatpush1.msra.mxu0 0.0
    %1148 = vmatprep.subr.mxu0 0.0
    %1149 = vmatpush1.msra.mxu0 0.0
    %1150 = vmatprep.subr.mxu0 0.0
    %1151 = vmatpush1.msra.mxu0 0.0
    %1152 = vmatprep.subr.mxu0 0.0
    %1153 = vmatpush1.msra.mxu0 0.0
    %1154 = vmatprep.subr.mxu0 0.0
    %1155 = vmatpush1.msra.mxu0 0.0
    %1156 = vmatprep.subr.mxu0 0.0
    %1157 = vmatpush1.msra.mxu0 0.0
    %1158 = vmatprep.subr.mxu0 0.0
    %1159 = vmatpush1.msra.mxu0 0.0
    %1160 = vmatprep.subr.mxu0 0.0
    %1161 = vmatpush1.msra.mxu0 0.0
    %1162 = vmatprep.subr.mxu0 0.0
    %1163 = vmatpush1.msra.mxu0 0.0
    %1164 = vmatprep.subr.mxu0 0.0
    %1165 = vmatpush1.msra.mxu0 0.0
    %1166 = vmatprep.subr.mxu0 0.0
    %1167 = vmatpush1.msra.mxu0 0.0
    %1168 = vmatprep.subr.mxu0 0.0
    %1169 = vmatpush1.msra.mxu0 0.0
    %1170 = vmatprep.subr.mxu0 0.0
    %1171 = vmatpush1.msra.mxu0 0.0
    %1172 = vmatprep.mubr.f32.mxu0 0.0
    %1173 = vmatmul.mubr.f32.gmra.mrb[0].mxu0 %v1085
    %v1174 = vpop.f32.mrb[0].mxu0
    %v1175 = vadd.f32 0.0, %v1174
    %v1176 = vpop.f32.mrb[0].mxu0
    %1177 = vmatprep.mubr.f32.mxu0 0.0
    %1178 = vmatmul.mubr.f32.gmra.mrb[0].mxu0 %v1088
    %v1179 = vpop.f32.mrb[0].mxu0
    %v1180 = vadd.f32 0.0, %v1179
    %v1181 = vpop.f32.mrb[0].mxu0
    %1182 = vmatprep.mubr.f32.mxu0 0.0
    %1183 = vmatmul.mubr.f32.gmra.mrb[0].mxu0 %v1091
    %v1184 = vpop.f32.mrb[0].mxu0
    %v1185 = vadd.f32 0.0, %v1184
    %v1186 = vpop.f32.mrb[0].mxu0
    %1187 = vmatprep.mubr.f32.mxu0 0.0
    %1188 = vmatmul.mubr.f32.gmra.mrb[0].mxu0 %v1094
    %v1189 = vpop.f32.mrb[0].mxu0
    %v1190 = vadd.f32 0.0, %v1189
    %v1191 = vpop.f32.mrb[0].mxu0
    %1192 = vmatprep.mubr.f32.mxu0 0.0
    %1193 = vmatmul.mubr.f32.gmra.mrb[0].mxu0 %v1097
    %v1194 = vpop.f32.mrb[0].mxu0
    %v1195 = vadd.f32 0.0, %v1194
    %v1196 = vpop.f32.mrb[0].mxu0
    %1197 = vmatprep.mubr.f32.mxu0 0.0
    %1198 = vmatmul.mubr.f32.gmra.mrb[0].mxu0 %v1100
    %v1199 = vpop.f32.mrb[0].mxu0
    %v1200 = vadd.f32 0.0, %v1199
    %v1201 = vpop.f32.mrb[0].mxu0
    %1202 = vmatprep.mubr.f32.mxu0 0.0
    %1203 = vmatmul.mubr.f32.gmra.mrb[0].mxu0 %v1103
    %v1204 = vpop.f32.mrb[0].mxu0
    %v1205 = vadd.f32 0.0, %v1204
    %v1206 = vpop.f32.mrb[0].mxu0
    %1207 = vmatprep.mubr.f32.mxu0 0.0
    %1208 = vmatmul.mubr.f32.gmra.mrb[0].mxu0 %v1106
    %v1209 = vpop.f32.mrb[0].mxu0
    %v1210 = vadd.f32 0.0, %v1209
    %v1211 = vpop.f32.mrb[0].mxu0
    %1212 = vdwg.mxu0
    %v1213 = vadd.f32 %v952, %v1175
    %v1214 = vadd.f32 %v957, %v1180
    %v1215 = vadd.f32 %v962, %v1185
    %v1216 = vadd.f32 %v967, %v1190
    %v1217 = vadd.f32 %v972, %v1195
    %v1218 = vadd.f32 %v977, %v1200
    %v1219 = vadd.f32 %v982, %v1205
    %v1220 = vadd.f32 %v987, %v1210
    %v1221 = vld [vmem:[%s7] sm:$0xff]
    %v1222 = vld [vmem:[%s7 + $0x8] sm:$0xff]
    %v1223 = vld [vmem:[%s7 + $0x10] sm:$0xff]
    %v1224 = vld [vmem:[%s7 + $0x18] sm:$0xff]
    %v1225 = vld [vmem:[%s7 + $0x20] sm:$0xff]
    %v1226 = vld [vmem:[%s7 + $0x28] sm:$0xff]
    %v1227 = vld [vmem:[%s7 + $0x30] sm:$0xff]
    %v1228 = vld [vmem:[%s7 + $0x38] sm:$0xff]
    %1230 = vset.pattern.permute.xlu0 0
    %1231 = vperm.xlu0 %1230, %v1221
    %v1232 = vpop.permute.xlu0 %1231
    %1235 = vset.pattern.permute.xlu0 0
    %1236 = vperm.xlu0 %1235, %v1222
    %v1237 = vpop.permute.xlu0 %1236
    %1240 = vset.pattern.permute.xlu0 0
    %1241 = vperm.xlu0 %1240, %v1223
    %v1242 = vpop.permute.xlu0 %1241
    %1245 = vset.pattern.permute.xlu0 0
    %1246 = vperm.xlu0 %1245, %v1224
    %v1247 = vpop.permute.xlu0 %1246
    %1250 = vset.pattern.permute.xlu0 0
    %1251 = vperm.xlu0 %1250, %v1225
    %v1252 = vpop.permute.xlu0 %1251
    %1255 = vset.pattern.permute.xlu0 0
    %1256 = vperm.xlu0 %1255, %v1226
    %v1257 = vpop.permute.xlu0 %1256
    %1260 = vset.pattern.permute.xlu0 0
    %1261 = vperm.xlu0 %1260, %v1227
    %v1262 = vpop.permute.xlu0 %1261
    %1265 = vset.pattern.permute.xlu0 0
    %1266 = vperm.xlu0 %1265, %v1228
    %v1267 = vpop.permute.xlu0 %1266
    %v1269 = vmul.f32 %v1213, %v1232
    %v1270 = vmul.f32 %v1214, %v1237
    %v1271 = vmul.f32 %v1215, %v1242
    %v1272 = vmul.f32 %v1216, %v1247
    %v1273 = vmul.f32 %v1217, %v1252
    %v1274 = vmul.f32 %v1218, %v1257
    %v1275 = vmul.f32 %v1219, %v1262
    %v1276 = vmul.f32 %v1220, %v1267
    %v1277 = vld [vmem:[%s8] sm:$0xff]
    %v1278 = vld [vmem:[%s8 + $0x8] sm:$0xff]
    %v1279 = vld [vmem:[%s8 + $0x10] sm:$0xff]
    %v1280 = vld [vmem:[%s8 + $0x18] sm:$0xff]
    %v1281 = vld [vmem:[%s8 + $0x20] sm:$0xff]
    %v1282 = vld [vmem:[%s8 + $0x28] sm:$0xff]
    %v1283 = vld [vmem:[%s8 + $0x30] sm:$0xff]
    %v1284 = vld [vmem:[%s8 + $0x38] sm:$0xff]
    %1286 = vset.pattern.permute.xlu0 0
    %1287 = vperm.xlu0 %1286, %v1277
    %v1288 = vpop.permute.xlu0 %1287
    %1291 = vset.pattern.permute.xlu0 0
    %1292 = vperm.xlu0 %1291, %v1278
    %v1293 = vpop.permute.xlu0 %1292
    %1296 = vset.pattern.permute.xlu0 0
    %1297 = vperm.xlu0 %1296, %v1279
    %v1298 = vpop.permute.xlu0 %1297
    %1301 = vset.pattern.permute.xlu0 0
    %1302 = vperm.xlu0 %1301, %v1280
    %v1303 = vpop.permute.xlu0 %1302
    %1306 = vset.pattern.permute.xlu0 0
    %1307 = vperm.xlu0 %1306, %v1281
    %v1308 = vpop.permute.xlu0 %1307
    %1311 = vset.pattern.permute.xlu0 0
    %1312 = vperm.xlu0 %1311, %v1282
    %v1313 = vpop.permute.xlu0 %1312
    %1316 = vset.pattern.permute.xlu0 0
    %1317 = vperm.xlu0 %1316, %v1283
    %v1318 = vpop.permute.xlu0 %1317
    %1321 = vset.pattern.permute.xlu0 0
    %1322 = vperm.xlu0 %1321, %v1284
    %v1323 = vpop.permute.xlu0 %1322
    %v1325 = vadd.f32 %v1269, %v1288
    %v1326 = vadd.f32 %v1270, %v1293
    %v1327 = vadd.f32 %v1271, %v1298
    %v1328 = vadd.f32 %v1272, %v1303
    %v1329 = vadd.f32 %v1273, %v1308
    %v1330 = vadd.f32 %v1274, %v1313
    %v1331 = vadd.f32 %v1275, %v1318
    %v1332 = vadd.f32 %v1276, %v1323
    %v1333 = vmax.f32 %v1325, 0.0
    %v1334 = vmax.f32 %v1326, 0.0
    %v1335 = vmax.f32 %v1327, 0.0
    %v1336 = vmax.f32 %v1328, 0.0
    %v1337 = vmax.f32 %v1329, 0.0
    %v1338 = vmax.f32 %v1330, 0.0
    %v1339 = vmax.f32 %v1331, 0.0
    %v1340 = vmax.f32 %v1332, 0.0
    %v1341 = vld [vmem:[%s9] sm:$0xff]
    %v1342 = vld [vmem:[%s9 + $0x8] sm:$0xff]
    %v1343 = vld [vmem:[%s9 + $0x10] sm:$0xff]
    %v1344 = vld [vmem:[%s9 + $0x18] sm:$0xff]
    %v1345 = vld [vmem:[%s9 + $0x20] sm:$0xff]
    %v1346 = vld [vmem:[%s9 + $0x28] sm:$0xff]
    %v1347 = vld [vmem:[%s9 + $0x30] sm:$0xff]
    %v1348 = vld [vmem:[%s9 + $0x38] sm:$0xff]
    %vm1349 = vcmask 523264
    %v1351 = vsel %vm1349, %v1341, 0
    %v1354 = vsel %vm1349, %v1342, 0
    %v1357 = vsel %vm1349, %v1343, 0
    %v1360 = vsel %vm1349, %v1344, 0
    %v1363 = vsel %vm1349, %v1345, 0
    %v1366 = vsel %vm1349, %v1346, 0
    %v1369 = vsel %vm1349, %v1347, 0
    %v1372 = vsel %vm1349, %v1348, 0
    %1374 = vmatprep.subr.mxu0 0.0
    %1375 = vmatpush1.msra.mxu0 %v1333
    %1376 = vmatprep.subr.mxu0 0.0
    %1377 = vmatpush1.msra.mxu0 %v1334
    %1378 = vmatprep.subr.mxu0 0.0
    %1379 = vmatpush1.msra.mxu0 %v1335
    %1380 = vmatprep.subr.mxu0 0.0
    %1381 = vmatpush1.msra.mxu0 %v1336
    %1382 = vmatprep.subr.mxu0 0.0
    %1383 = vmatpush1.msra.mxu0 %v1337
    %1384 = vmatprep.subr.mxu0 0.0
    %1385 = vmatpush1.msra.mxu0 %v1338
    %1386 = vmatprep.subr.mxu0 0.0
    %1387 = vmatpush1.msra.mxu0 %v1339
    %1388 = vmatprep.subr.mxu0 0.0
    %1389 = vmatpush1.msra.mxu0 %v1340
    %1390 = vmatprep.subr.mxu0 0.0
    %1391 = vmatpush1.msra.mxu0 0.0
    %1392 = vmatprep.subr.mxu0 0.0
    %1393 = vmatpush1.msra.mxu0 0.0
    %1394 = vmatprep.subr.mxu0 0.0
    %1395 = vmatpush1.msra.mxu0 0.0
    %1396 = vmatprep.subr.mxu0 0.0
    %1397 = vmatpush1.msra.mxu0 0.0
    %1398 = vmatprep.subr.mxu0 0.0
    %1399 = vmatpush1.msra.mxu0 0.0
    %1400 = vmatprep.subr.mxu0 0.0
    %1401 = vmatpush1.msra.mxu0 0.0
    %1402 = vmatprep.subr.mxu0 0.0
    %1403 = vmatpush1.msra.mxu0 0.0
    %1404 = vmatprep.subr.mxu0 0.0
    %1405 = vmatpush1.msra.mxu0 0.0
    %1406 = vmatprep.subr.mxu0 0.0
    %1407 = vmatpush1.msra.mxu0 0.0
    %1408 = vmatprep.subr.mxu0 0.0
    %1409 = vmatpush1.msra.mxu0 0.0
    %1410 = vmatprep.subr.mxu0 0.0
    %1411 = vmatpush1.msra.mxu0 0.0
    %1412 = vmatprep.subr.mxu0 0.0
    %1413 = vmatpush1.msra.mxu0 0.0
    %1414 = vmatprep.subr.mxu0 0.0
    %1415 = vmatpush1.msra.mxu0 0.0
    %1416 = vmatprep.subr.mxu0 0.0
    %1417 = vmatpush1.msra.mxu0 0.0
    %1418 = vmatprep.subr.mxu0 0.0
    %1419 = vmatpush1.msra.mxu0 0.0
    %1420 = vmatprep.subr.mxu0 0.0
    %1421 = vmatpush1.msra.mxu0 0.0
    %1422 = vmatprep.subr.mxu0 0.0
    %1423 = vmatpush1.msra.mxu0 0.0
    %1424 = vmatprep.subr.mxu0 0.0
    %1425 = vmatpush1.msra.mxu0 0.0
    %1426 = vmatprep.subr.mxu0 0.0
    %1427 = vmatpush1.msra.mxu0 0.0
    %1428 = vmatprep.subr.mxu0 0.0
    %1429 = vmatpush1.msra.mxu0 0.0
    %1430 = vmatprep.subr.mxu0 0.0
    %1431 = vmatpush1.msra.mxu0 0.0
    %1432 = vmatprep.subr.mxu0 0.0
    %1433 = vmatpush1.msra.mxu0 0.0
    %1434 = vmatprep.subr.mxu0 0.0
    %1435 = vmatpush1.msra.mxu0 0.0
    %1436 = vmatprep.subr.mxu0 0.0
    %1437 = vmatpush1.msra.mxu0 0.0
    %1438 = vmatprep.mubr.f32.mxu0 0.0
    %1439 = vmatmul.mubr.f32.gmra.mrb[0].mxu0 %v1351
    %v1440 = vpop.f32.mrb[0].mxu0
    %v1441 = vadd.f32 0.0, %v1440
    %v1442 = vpop.f32.mrb[0].mxu0
    %1443 = vmatprep.mubr.f32.mxu0 0.0
    %1444 = vmatmul.mubr.f32.gmra.mrb[0].mxu0 %v1354
    %v1445 = vpop.f32.mrb[0].mxu0
    %v1446 = vadd.f32 0.0, %v1445
    %v1447 = vpop.f32.mrb[0].mxu0
    %1448 = vmatprep.mubr.f32.mxu0 0.0
    %1449 = vmatmul.mubr.f32.gmra.mrb[0].mxu0 %v1357
    %v1450 = vpop.f32.mrb[0].mxu0
    %v1451 = vadd.f32 0.0, %v1450
    %v1452 = vpop.f32.mrb[0].mxu0
    %1453 = vmatprep.mubr.f32.mxu0 0.0
    %1454 = vmatmul.mubr.f32.gmra.mrb[0].mxu0 %v1360
    %v1455 = vpop.f32.mrb[0].mxu0
    %v1456 = vadd.f32 0.0, %v1455
    %v1457 = vpop.f32.mrb[0].mxu0
    %1458 = vmatprep.mubr.f32.mxu0 0.0
    %1459 = vmatmul.mubr.f32.gmra.mrb[0].mxu0 %v1363
    %v1460 = vpop.f32.mrb[0].mxu0
    %v1461 = vadd.f32 0.0, %v1460
    %v1462 = vpop.f32.mrb[0].mxu0
    %1463 = vmatprep.mubr.f32.mxu0 0.0
    %1464 = vmatmul.mubr.f32.gmra.mrb[0].mxu0 %v1366
    %v1465 = vpop.f32.mrb[0].mxu0
    %v1466 = vadd.f32 0.0, %v1465
    %v1467 = vpop.f32.mrb[0].mxu0
    %1468 = vmatprep.mubr.f32.mxu0 0.0
    %1469 = vmatmul.mubr.f32.gmra.mrb[0].mxu0 %v1369
    %v1470 = vpop.f32.mrb[0].mxu0
    %v1471 = vadd.f32 0.0, %v1470
    %v1472 = vpop.f32.mrb[0].mxu0
    %1473 = vmatprep.mubr.f32.mxu0 0.0
    %1474 = vmatmul.mubr.f32.gmra.mrb[0].mxu0 %v1372
    %v1475 = vpop.f32.mrb[0].mxu0
    %v1476 = vadd.f32 0.0, %v1475
    %v1477 = vpop.f32.mrb[0].mxu0
    %1478 = vdwg.mxu0
    %v1479 = vld [vmem:[%s10] sm:$0xff]
    %v1480 = vld [vmem:[%s10 + $0x8] sm:$0xff]
    %v1481 = vld [vmem:[%s10 + $0x10] sm:$0xff]
    %v1482 = vld [vmem:[%s10 + $0x18] sm:$0xff]
    %v1483 = vld [vmem:[%s10 + $0x20] sm:$0xff]
    %v1484 = vld [vmem:[%s10 + $0x28] sm:$0xff]
    %v1485 = vld [vmem:[%s10 + $0x30] sm:$0xff]
    %v1486 = vld [vmem:[%s10 + $0x38] sm:$0xff]
    %1488 = vset.pattern.permute.xlu0 0
    %1489 = vperm.xlu0 %1488, %v1479
    %v1490 = vpop.permute.xlu0 %1489
    %1493 = vset.pattern.permute.xlu0 0
    %1494 = vperm.xlu0 %1493, %v1480
    %v1495 = vpop.permute.xlu0 %1494
    %1498 = vset.pattern.permute.xlu0 0
    %1499 = vperm.xlu0 %1498, %v1481
    %v1500 = vpop.permute.xlu0 %1499
    %1503 = vset.pattern.permute.xlu0 0
    %1504 = vperm.xlu0 %1503, %v1482
    %v1505 = vpop.permute.xlu0 %1504
    %1508 = vset.pattern.permute.xlu0 0
    %1509 = vperm.xlu0 %1508, %v1483
    %v1510 = vpop.permute.xlu0 %1509
    %1513 = vset.pattern.permute.xlu0 0
    %1514 = vperm.xlu0 %1513, %v1484
    %v1515 = vpop.permute.xlu0 %1514
    %1518 = vset.pattern.permute.xlu0 0
    %1519 = vperm.xlu0 %1518, %v1485
    %v1520 = vpop.permute.xlu0 %1519
    %1523 = vset.pattern.permute.xlu0 0
    %1524 = vperm.xlu0 %1523, %v1486
    %v1525 = vpop.permute.xlu0 %1524
    %v1527 = vmul.f32 %v1441, %v1490
    %v1528 = vmul.f32 %v1446, %v1495
    %v1529 = vmul.f32 %v1451, %v1500
    %v1530 = vmul.f32 %v1456, %v1505
    %v1531 = vmul.f32 %v1461, %v1510
    %v1532 = vmul.f32 %v1466, %v1515
    %v1533 = vmul.f32 %v1471, %v1520
    %v1534 = vmul.f32 %v1476, %v1525
    %v1535 = vld [vmem:[%s11] sm:$0xff]
    %v1536 = vld [vmem:[%s11 + $0x8] sm:$0xff]
    %v1537 = vld [vmem:[%s11 + $0x10] sm:$0xff]
    %v1538 = vld [vmem:[%s11 + $0x18] sm:$0xff]
    %v1539 = vld [vmem:[%s11 + $0x20] sm:$0xff]
    %v1540 = vld [vmem:[%s11 + $0x28] sm:$0xff]
    %v1541 = vld [vmem:[%s11 + $0x30] sm:$0xff]
    %v1542 = vld [vmem:[%s11 + $0x38] sm:$0xff]
    %1544 = vset.pattern.permute.xlu0 0
    %1545 = vperm.xlu0 %1544, %v1535
    %v1546 = vpop.permute.xlu0 %1545
    %1549 = vset.pattern.permute.xlu0 0
    %1550 = vperm.xlu0 %1549, %v1536
    %v1551 = vpop.permute.xlu0 %1550
    %1554 = vset.pattern.permute.xlu0 0
    %1555 = vperm.xlu0 %1554, %v1537
    %v1556 = vpop.permute.xlu0 %1555
    %1559 = vset.pattern.permute.xlu0 0
    %1560 = vperm.xlu0 %1559, %v1538
    %v1561 = vpop.permute.xlu0 %1560
    %1564 = vset.pattern.permute.xlu0 0
    %1565 = vperm.xlu0 %1564, %v1539
    %v1566 = vpop.permute.xlu0 %1565
    %1569 = vset.pattern.permute.xlu0 0
    %1570 = vperm.xlu0 %1569, %v1540
    %v1571 = vpop.permute.xlu0 %1570
    %1574 = vset.pattern.permute.xlu0 0
    %1575 = vperm.xlu0 %1574, %v1541
    %v1576 = vpop.permute.xlu0 %1575
    %1579 = vset.pattern.permute.xlu0 0
    %1580 = vperm.xlu0 %1579, %v1542
    %v1581 = vpop.permute.xlu0 %1580
    %v1583 = vadd.f32 %v1527, %v1546
    %v1584 = vadd.f32 %v1528, %v1551
    %v1585 = vadd.f32 %v1529, %v1556
    %v1586 = vadd.f32 %v1530, %v1561
    %v1587 = vadd.f32 %v1531, %v1566
    %v1588 = vadd.f32 %v1532, %v1571
    %v1589 = vadd.f32 %v1533, %v1576
    %v1590 = vadd.f32 %v1534, %v1581
    %v1591 = vmax.f32 %v1583, 0.0
    %v1592 = vmax.f32 %v1584, 0.0
    %v1593 = vmax.f32 %v1585, 0.0
    %v1594 = vmax.f32 %v1586, 0.0
    %v1595 = vmax.f32 %v1587, 0.0
    %v1596 = vmax.f32 %v1588, 0.0
    %v1597 = vmax.f32 %v1589, 0.0
    %v1598 = vmax.f32 %v1590, 0.0
    %v1599 = vld [vmem:[%s12] sm:$0xff]
    %v1600 = vld [vmem:[%s12 + $0x8] sm:$0xff]
    %v1601 = vld [vmem:[%s12 + $0x10] sm:$0xff]
    %v1602 = vld [vmem:[%s12 + $0x18] sm:$0xff]
    %v1604 = vsel %vm1349, %v1599, 0
    %v1607 = vsel %vm1349, %v1600, 0
    %v1610 = vsel %vm1349, %v1601, 0
    %v1613 = vsel %vm1349, %v1602, 0
    %1615 = vmatprep.subr.mxu0 0.0
    %1616 = vmatpush1.msra.mxu0 %v1591
    %1617 = vmatprep.subr.mxu0 0.0
    %1618 = vmatpush1.msra.mxu0 %v1592
    %1619 = vmatprep.subr.mxu0 0.0
    %1620 = vmatpush1.msra.mxu0 %v1593
    %1621 = vmatprep.subr.mxu0 0.0
    %1622 = vmatpush1.msra.mxu0 %v1594
    %1623 = vmatprep.subr.mxu0 0.0
    %1624 = vmatpush1.msra.mxu0 %v1595
    %1625 = vmatprep.subr.mxu0 0.0
    %1626 = vmatpush1.msra.mxu0 %v1596
    %1627 = vmatprep.subr.mxu0 0.0
    %1628 = vmatpush1.msra.mxu0 %v1597
    %1629 = vmatprep.subr.mxu0 0.0
    %1630 = vmatpush1.msra.mxu0 %v1598
    %1631 = vmatprep.subr.mxu0 0.0
    %1632 = vmatpush1.msra.mxu0 0.0
    %1633 = vmatprep.subr.mxu0 0.0
    %1634 = vmatpush1.msra.mxu0 0.0
    %1635 = vmatprep.subr.mxu0 0.0
    %1636 = vmatpush1.msra.mxu0 0.0
    %1637 = vmatprep.subr.mxu0 0.0
    %1638 = vmatpush1.msra.mxu0 0.0
    %1639 = vmatprep.subr.mxu0 0.0
    %1640 = vmatpush1.msra.mxu0 0.0
    %1641 = vmatprep.subr.mxu0 0.0
    %1642 = vmatpush1.msra.mxu0 0.0
    %1643 = vmatprep.subr.mxu0 0.0
    %1644 = vmatpush1.msra.mxu0 0.0
    %1645 = vmatprep.subr.mxu0 0.0
    %1646 = vmatpush1.msra.mxu0 0.0
    %1647 = vmatprep.subr.mxu0 0.0
    %1648 = vmatpush1.msra.mxu0 0.0
    %1649 = vmatprep.subr.mxu0 0.0
    %1650 = vmatpush1.msra.mxu0 0.0
    %1651 = vmatprep.subr.mxu0 0.0
    %1652 = vmatpush1.msra.mxu0 0.0
    %1653 = vmatprep.subr.mxu0 0.0
    %1654 = vmatpush1.msra.mxu0 0.0
    %1655 = vmatprep.subr.mxu0 0.0
    %1656 = vmatpush1.msra.mxu0 0.0
    %1657 = vmatprep.subr.mxu0 0.0
    %1658 = vmatpush1.msra.mxu0 0.0
    %1659 = vmatprep.subr.mxu0 0.0
    %1660 = vmatpush1.msra.mxu0 0.0
    %1661 = vmatprep.subr.mxu0 0.0
    %1662 = vmatpush1.msra.mxu0 0.0
    %1663 = vmatprep.subr.mxu0 0.0
    %1664 = vmatpush1.msra.mxu0 0.0
    %1665 = vmatprep.subr.mxu0 0.0
    %1666 = vmatpush1.msra.mxu0 0.0
    %1667 = vmatprep.subr.mxu0 0.0
    %1668 = vmatpush1.msra.mxu0 0.0
    %1669 = vmatprep.subr.mxu0 0.0
    %1670 = vmatpush1.msra.mxu0 0.0
    %1671 = vmatprep.subr.mxu0 0.0
    %1672 = vmatpush1.msra.mxu0 0.0
    %1673 = vmatprep.subr.mxu0 0.0
    %1674 = vmatpush1.msra.mxu0 0.0
    %1675 = vmatprep.subr.mxu0 0.0
    %1676 = vmatpush1.msra.mxu0 0.0
    %1677 = vmatprep.subr.mxu0 0.0
    %1678 = vmatpush1.msra.mxu0 0.0
    %1679 = vmatprep.mubr.f32.mxu0 0.0
    %1680 = vmatmul.mubr.f32.gmra.mrb[0].mxu0 %v1604
    %v1681 = vpop.f32.mrb[0].mxu0
    %v1682 = vadd.f32 0.0, %v1681
    %v1683 = vpop.f32.mrb[0].mxu0
    %1684 = vmatprep.mubr.f32.mxu0 0.0
    %1685 = vmatmul.mubr.f32.gmra.mrb[0].mxu0 %v1607
    %v1686 = vpop.f32.mrb[0].mxu0
    %v1687 = vadd.f32 0.0, %v1686
    %v1688 = vpop.f32.mrb[0].mxu0
    %1689 = vmatprep.mubr.f32.mxu0 0.0
    %1690 = vmatmul.mubr.f32.gmra.mrb[0].mxu0 %v1610
    %v1691 = vpop.f32.mrb[0].mxu0
    %v1692 = vadd.f32 0.0, %v1691
    %v1693 = vpop.f32.mrb[0].mxu0
    %1694 = vmatprep.mubr.f32.mxu0 0.0
    %1695 = vmatmul.mubr.f32.gmra.mrb[0].mxu0 %v1613
    %v1696 = vpop.f32.mrb[0].mxu0
    %v1697 = vadd.f32 0.0, %v1696
    %v1698 = vpop.f32.mrb[0].mxu0
    %1699 = vdwg.mxu0
    %v1700 = vld [vmem:[%s13] sm:$0xff]
    %v1701 = vld [vmem:[%s13 + $0x8] sm:$0xff]
    %v1702 = vld [vmem:[%s13 + $0x10] sm:$0xff]
    %v1703 = vld [vmem:[%s13 + $0x18] sm:$0xff]
    %1705 = vset.pattern.permute.xlu0 0
    %1706 = vperm.xlu0 %1705, %v1700
    %v1707 = vpop.permute.xlu0 %1706
    %1710 = vset.pattern.permute.xlu0 0
    %1711 = vperm.xlu0 %1710, %v1701
    %v1712 = vpop.permute.xlu0 %1711
    %1715 = vset.pattern.permute.xlu0 0
    %1716 = vperm.xlu0 %1715, %v1702
    %v1717 = vpop.permute.xlu0 %1716
    %1720 = vset.pattern.permute.xlu0 0
    %1721 = vperm.xlu0 %1720, %v1703
    %v1722 = vpop.permute.xlu0 %1721
    %v1724 = vmul.f32 %v1682, %v1707
    %v1725 = vmul.f32 %v1687, %v1712
    %v1726 = vmul.f32 %v1692, %v1717
    %v1727 = vmul.f32 %v1697, %v1722
    %v1728 = vld [vmem:[%s14] sm:$0xff]
    %v1729 = vld [vmem:[%s14 + $0x8] sm:$0xff]
    %v1730 = vld [vmem:[%s14 + $0x10] sm:$0xff]
    %v1731 = vld [vmem:[%s14 + $0x18] sm:$0xff]
    %1733 = vset.pattern.permute.xlu0 0
    %1734 = vperm.xlu0 %1733, %v1728
    %v1735 = vpop.permute.xlu0 %1734
    %1738 = vset.pattern.permute.xlu0 0
    %1739 = vperm.xlu0 %1738, %v1729
    %v1740 = vpop.permute.xlu0 %1739
    %1743 = vset.pattern.permute.xlu0 0
    %1744 = vperm.xlu0 %1743, %v1730
    %v1745 = vpop.permute.xlu0 %1744
    %1748 = vset.pattern.permute.xlu0 0
    %1749 = vperm.xlu0 %1748, %v1731
    %v1750 = vpop.permute.xlu0 %1749
    %v1752 = vadd.f32 %v1724, %v1735
    %v1753 = vadd.f32 %v1725, %v1740
    %v1754 = vadd.f32 %v1726, %v1745
    %v1755 = vadd.f32 %v1727, %v1750
    %v1756 = vmax.f32 %v1752, 0.0
    %v1757 = vmax.f32 %v1753, 0.0
    %v1758 = vmax.f32 %v1754, 0.0
    %v1759 = vmax.f32 %v1755, 0.0
    %vm1760 = vcmask 122880
    %1761 = vst.msk [vmem:[#allocation3] sm:$0x1] %vm1760, %v1756
    %v1764 = vunpack.c.l.s4 1983009808
    %v1765 = vunpack.c.0.s8 %v1764
    %v1766 = vlaneseq
    %v1767 = vshrl.u32 %v1766, 7
    %v1768 = vsub.s32 %v1765, %v1767
    %v1769 = vrot.slane %v1756, %v1768
    %1770 = vrot.lane.b32.xlu0 %v1769, 112
    %v1771 = vpop.permute.xlu0 %1770
    %1773 = vst.msk [vmem:[#allocation3 + $0x1] sm:$0x1] %vm1760, %v1771
    %v1774 = vrot.slane %v1769, 7
    %v1775 = vrot.slane %v1774, 2
    %1776 = vrot.lane.b32.xlu0 %v1775, 16
    %v1777 = vpop.permute.xlu0 %1776
    %vm1779 = vcmask 254080
    %1780 = vst.msk [vmem:[#allocation3] sm:$0x1] %vm1779, %v1777
    %1782 = vst.msk [vmem:[#allocation3 + $0x1] sm:$0x1] %vm1779, %v1775
    %v1783 = vcombine.high %v1769, %v1769
    %1784 = vrot.lane.b32.xlu0 %v1783, 32
    %v1785 = vpop.permute.xlu0 %1784
    %vm1787 = vcmask 385280
    %1788 = vst.msk [vmem:[#allocation3] sm:$0x1] %vm1787, %v1785
    %1789 = vrot.lane.b32.xlu0 %v1783, 16
    %v1790 = vpop.permute.xlu0 %1789
    %1792 = vst.msk [vmem:[#allocation3 + $0x1] sm:$0x1] %vm1787, %v1790
    %v1793 = vrot.slane %v1783, 7
    %v1794 = vrot.slane %v1793, 2
    %1795 = vrot.lane.b32.xlu0 %v1794, 48
    %v1796 = vpop.permute.xlu0 %1795
    %vm1798 = vcmask 516480
    %1799 = vst.msk [vmem:[#allocation3] sm:$0x1] %vm1798, %v1796
    %1800 = vrot.lane.b32.xlu0 %v1794, 32
    %v1801 = vpop.permute.xlu0 %1800
    %1803 = vst.msk [vmem:[#allocation3 + $0x1] sm:$0x1] %vm1798, %v1801
    %v1804 = vcombine.high %v1756, %v1756
    %v1806 = vunpack.c.l.s4 1983009808
    %v1807 = vunpack.c.0.s8 %v1806
    %v1808 = vlaneseq
    %v1809 = vshrl.u32 %v1808, 7
    %v1810 = vsub.s32 %v1807, %v1809
    %v1811 = vrot.slane %v1804, %v1810
    %1812 = vrot.lane.b32.xlu0 %v1811, 64
    %v1813 = vpop.permute.xlu0 %1812
    %vm1815 = vcmask 647680
    %1816 = vst.msk [vmem:[#allocation3] sm:$0x1] %vm1815, %v1813
    %1817 = vrot.lane.b32.xlu0 %v1811, 48
    %v1818 = vpop.permute.xlu0 %1817
    %1820 = vst.msk [vmem:[#allocation3 + $0x1] sm:$0x1] %vm1815, %v1818
    %v1821 = vrot.slane %v1811, 7
    %v1822 = vrot.slane %v1821, 2
    %1823 = vrot.lane.b32.xlu0 %v1822, 80
    %v1824 = vpop.permute.xlu0 %1823
    %vm1826 = vcmask 778880
    %1827 = vst.msk [vmem:[#allocation3] sm:$0x1] %vm1826, %v1824
    %1828 = vrot.lane.b32.xlu0 %v1822, 64
    %v1829 = vpop.permute.xlu0 %1828
    %1831 = vst.msk [vmem:[#allocation3 + $0x1] sm:$0x1] %vm1826, %v1829
    %v1832 = vcombine.high %v1811, %v1811
    %1833 = vrot.lane.b32.xlu0 %v1832, 96
    %v1834 = vpop.permute.xlu0 %1833
    %vm1836 = vcmask 910080
    %1837 = vst.msk [vmem:[#allocation3] sm:$0x1] %vm1836, %v1834
    %1838 = vrot.lane.b32.xlu0 %v1832, 80
    %v1839 = vpop.permute.xlu0 %1838
    %1841 = vst.msk [vmem:[#allocation3 + $0x1] sm:$0x1] %vm1836, %v1839
    %v1842 = vrot.slane %v1832, 7
    %v1843 = vrot.slane %v1842, 2
    %1844 = vrot.lane.b32.xlu0 %v1843, 112
    %v1845 = vpop.permute.xlu0 %1844
    %vm1847 = vcmask 1041280
    %1848 = vst.msk [vmem:[#allocation3] sm:$0x1] %vm1847, %v1845
    %1849 = vrot.lane.b32.xlu0 %v1843, 96
    %v1850 = vpop.permute.xlu0 %1849
    %1852 = vst.msk [vmem:[#allocation3 + $0x1] sm:$0x1] %vm1847, %v1850
    %1853 = vst.msk [vmem:[#allocation3 + $0x2] sm:$0x1] %vm1760, %v1757
    %v1856 = vunpack.c.l.s4 1983009808
    %v1857 = vunpack.c.0.s8 %v1856
    %v1858 = vlaneseq
    %v1859 = vshrl.u32 %v1858, 7
    %v1860 = vsub.s32 %v1857, %v1859
    %v1861 = vrot.slane %v1757, %v1860
    %1862 = vrot.lane.b32.xlu0 %v1861, 112
    %v1863 = vpop.permute.xlu0 %1862
    %1865 = vst.msk [vmem:[#allocation3 + $0x3] sm:$0x1] %vm1760, %v1863
    %v1866 = vrot.slane %v1861, 7
    %v1867 = vrot.slane %v1866, 2
    %1868 = vrot.lane.b32.xlu0 %v1867, 16
    %v1869 = vpop.permute.xlu0 %1868
    %1871 = vst.msk [vmem:[#allocation3 + $0x2] sm:$0x1] %vm1779, %v1869
    %1873 = vst.msk [vmem:[#allocation3 + $0x3] sm:$0x1] %vm1779, %v1867
    %v1874 = vcombine.high %v1861, %v1861
    %1875 = vrot.lane.b32.xlu0 %v1874, 32
    %v1876 = vpop.permute.xlu0 %1875
    %1878 = vst.msk [vmem:[#allocation3 + $0x2] sm:$0x1] %vm1787, %v1876
    %1879 = vrot.lane.b32.xlu0 %v1874, 16
    %v1880 = vpop.permute.xlu0 %1879
    %1882 = vst.msk [vmem:[#allocation3 + $0x3] sm:$0x1] %vm1787, %v1880
    %v1883 = vrot.slane %v1874, 7
    %v1884 = vrot.slane %v1883, 2
    %1885 = vrot.lane.b32.xlu0 %v1884, 48
    %v1886 = vpop.permute.xlu0 %1885
    %1888 = vst.msk [vmem:[#allocation3 + $0x2] sm:$0x1] %vm1798, %v1886
    %1889 = vrot.lane.b32.xlu0 %v1884, 32
    %v1890 = vpop.permute.xlu0 %1889
    %1892 = vst.msk [vmem:[#allocation3 + $0x3] sm:$0x1] %vm1798, %v1890
    %v1893 = vcombine.high %v1757, %v1757
    %v1895 = vunpack.c.l.s4 1983009808
    %v1896 = vunpack.c.0.s8 %v1895
    %v1897 = vlaneseq
    %v1898 = vshrl.u32 %v1897, 7
    %v1899 = vsub.s32 %v1896, %v1898
    %v1900 = vrot.slane %v1893, %v1899
    %1901 = vrot.lane.b32.xlu0 %v1900, 64
    %v1902 = vpop.permute.xlu0 %1901
    %1904 = vst.msk [vmem:[#allocation3 + $0x2] sm:$0x1] %vm1815, %v1902
    %1905 = vrot.lane.b32.xlu0 %v1900, 48
    %v1906 = vpop.permute.xlu0 %1905
    %1908 = vst.msk [vmem:[#allocation3 + $0x3] sm:$0x1] %vm1815, %v1906
    %v1909 = vrot.slane %v1900, 7
    %v1910 = vrot.slane %v1909, 2
    %1911 = vrot.lane.b32.xlu0 %v1910, 80
    %v1912 = vpop.permute.xlu0 %1911
    %1914 = vst.msk [vmem:[#allocation3 + $0x2] sm:$0x1] %vm1826, %v1912
    %1915 = vrot.lane.b32.xlu0 %v1910, 64
    %v1916 = vpop.permute.xlu0 %1915
    %1918 = vst.msk [vmem:[#allocation3 + $0x3] sm:$0x1] %vm1826, %v1916
    %v1919 = vcombine.high %v1900, %v1900
    %1920 = vrot.lane.b32.xlu0 %v1919, 96
    %v1921 = vpop.permute.xlu0 %1920
    %1923 = vst.msk [vmem:[#allocation3 + $0x2] sm:$0x1] %vm1836, %v1921
    %1924 = vrot.lane.b32.xlu0 %v1919, 80
    %v1925 = vpop.permute.xlu0 %1924
    %1927 = vst.msk [vmem:[#allocation3 + $0x3] sm:$0x1] %vm1836, %v1925
    %v1928 = vrot.slane %v1919, 7
    %v1929 = vrot.slane %v1928, 2
    %1930 = vrot.lane.b32.xlu0 %v1929, 112
    %v1931 = vpop.permute.xlu0 %1930
    %1933 = vst.msk [vmem:[#allocation3 + $0x2] sm:$0x1] %vm1847, %v1931
    %1934 = vrot.lane.b32.xlu0 %v1929, 96
    %v1935 = vpop.permute.xlu0 %1934
    %1937 = vst.msk [vmem:[#allocation3 + $0x3] sm:$0x1] %vm1847, %v1935
    %1938 = vst.msk [vmem:[#allocation3 + $0x4] sm:$0x1] %vm1760, %v1758
    %v1941 = vunpack.c.l.s4 1983009808
    %v1942 = vunpack.c.0.s8 %v1941
    %v1943 = vlaneseq
    %v1944 = vshrl.u32 %v1943, 7
    %v1945 = vsub.s32 %v1942, %v1944
    %v1946 = vrot.slane %v1758, %v1945
    %1947 = vrot.lane.b32.xlu0 %v1946, 112
    %v1948 = vpop.permute.xlu0 %1947
    %1950 = vst.msk [vmem:[#allocation3 + $0x5] sm:$0x1] %vm1760, %v1948
    %v1951 = vrot.slane %v1946, 7
    %v1952 = vrot.slane %v1951, 2
    %1953 = vrot.lane.b32.xlu0 %v1952, 16
    %v1954 = vpop.permute.xlu0 %1953
    %1956 = vst.msk [vmem:[#allocation3 + $0x4] sm:$0x1] %vm1779, %v1954
    %1958 = vst.msk [vmem:[#allocation3 + $0x5] sm:$0x1] %vm1779, %v1952
    %v1959 = vcombine.high %v1946, %v1946
    %1960 = vrot.lane.b32.xlu0 %v1959, 32
    %v1961 = vpop.permute.xlu0 %1960
    %1963 = vst.msk [vmem:[#allocation3 + $0x4] sm:$0x1] %vm1787, %v1961
    %1964 = vrot.lane.b32.xlu0 %v1959, 16
    %v1965 = vpop.permute.xlu0 %1964
    %1967 = vst.msk [vmem:[#allocation3 + $0x5] sm:$0x1] %vm1787, %v1965
    %v1968 = vrot.slane %v1959, 7
    %v1969 = vrot.slane %v1968, 2
    %1970 = vrot.lane.b32.xlu0 %v1969, 48
    %v1971 = vpop.permute.xlu0 %1970
    %1973 = vst.msk [vmem:[#allocation3 + $0x4] sm:$0x1] %vm1798, %v1971
    %1974 = vrot.lane.b32.xlu0 %v1969, 32
    %v1975 = vpop.permute.xlu0 %1974
    %1977 = vst.msk [vmem:[#allocation3 + $0x5] sm:$0x1] %vm1798, %v1975
    %v1978 = vcombine.high %v1758, %v1758
    %v1980 = vunpack.c.l.s4 1983009808
    %v1981 = vunpack.c.0.s8 %v1980
    %v1982 = vlaneseq
    %v1983 = vshrl.u32 %v1982, 7
    %v1984 = vsub.s32 %v1981, %v1983
    %v1985 = vrot.slane %v1978, %v1984
    %1986 = vrot.lane.b32.xlu0 %v1985, 64
    %v1987 = vpop.permute.xlu0 %1986
    %1989 = vst.msk [vmem:[#allocation3 + $0x4] sm:$0x1] %vm1815, %v1987
    %1990 = vrot.lane.b32.xlu0 %v1985, 48
    %v1991 = vpop.permute.xlu0 %1990
    %1993 = vst.msk [vmem:[#allocation3 + $0x5] sm:$0x1] %vm1815, %v1991
    %v1994 = vrot.slane %v1985, 7
    %v1995 = vrot.slane %v1994, 2
    %1996 = vrot.lane.b32.xlu0 %v1995, 80
    %v1997 = vpop.permute.xlu0 %1996
    %1999 = vst.msk [vmem:[#allocation3 + $0x4] sm:$0x1] %vm1826, %v1997
    %2000 = vrot.lane.b32.xlu0 %v1995, 64
    %v2001 = vpop.permute.xlu0 %2000
    %2003 = vst.msk [vmem:[#allocation3 + $0x5] sm:$0x1] %vm1826, %v2001
    %v2004 = vcombine.high %v1985, %v1985
    %2005 = vrot.lane.b32.xlu0 %v2004, 96
    %v2006 = vpop.permute.xlu0 %2005
    %2008 = vst.msk [vmem:[#allocation3 + $0x4] sm:$0x1] %vm1836, %v2006
    %2009 = vrot.lane.b32.xlu0 %v2004, 80
    %v2010 = vpop.permute.xlu0 %2009
    %2012 = vst.msk [vmem:[#allocation3 + $0x5] sm:$0x1] %vm1836, %v2010
    %v2013 = vrot.slane %v2004, 7
    %v2014 = vrot.slane %v2013, 2
    %2015 = vrot.lane.b32.xlu0 %v2014, 112
    %v2016 = vpop.permute.xlu0 %2015
    %2018 = vst.msk [vmem:[#allocation3 + $0x4] sm:$0x1] %vm1847, %v2016
    %2019 = vrot.lane.b32.xlu0 %v2014, 96
    %v2020 = vpop.permute.xlu0 %2019
    %2022 = vst.msk [vmem:[#allocation3 + $0x5] sm:$0x1] %vm1847, %v2020
    %2023 = vst.msk [vmem:[#allocation3 + $0x6] sm:$0x1] %vm1760, %v1759
    %v2026 = vunpack.c.l.s4 1983009808
    %v2027 = vunpack.c.0.s8 %v2026
    %v2028 = vlaneseq
    %v2029 = vshrl.u32 %v2028, 7
    %v2030 = vsub.s32 %v2027, %v2029
    %v2031 = vrot.slane %v1759, %v2030
    %2032 = vrot.lane.b32.xlu0 %v2031, 112
    %v2033 = vpop.permute.xlu0 %2032
    %2035 = vst.msk [vmem:[#allocation3 + $0x7] sm:$0x1] %vm1760, %v2033
    %v2036 = vrot.slane %v2031, 7
    %v2037 = vrot.slane %v2036, 2
    %2038 = vrot.lane.b32.xlu0 %v2037, 16
    %v2039 = vpop.permute.xlu0 %2038
    %2041 = vst.msk [vmem:[#allocation3 + $0x6] sm:$0x1] %vm1779, %v2039
    %2043 = vst.msk [vmem:[#allocation3 + $0x7] sm:$0x1] %vm1779, %v2037
    %v2044 = vcombine.high %v2031, %v2031
    %2045 = vrot.lane.b32.xlu0 %v2044, 32
    %v2046 = vpop.permute.xlu0 %2045
    %2048 = vst.msk [vmem:[#allocation3 + $0x6] sm:$0x1] %vm1787, %v2046
    %2049 = vrot.lane.b32.xlu0 %v2044, 16
    %v2050 = vpop.permute.xlu0 %2049
    %2052 = vst.msk [vmem:[#allocation3 + $0x7] sm:$0x1] %vm1787, %v2050
    %v2053 = vrot.slane %v2044, 7
    %v2054 = vrot.slane %v2053, 2
    %2055 = vrot.lane.b32.xlu0 %v2054, 48
    %v2056 = vpop.permute.xlu0 %2055
    %2058 = vst.msk [vmem:[#allocation3 + $0x6] sm:$0x1] %vm1798, %v2056
    %2059 = vrot.lane.b32.xlu0 %v2054, 32
    %v2060 = vpop.permute.xlu0 %2059
    %2062 = vst.msk [vmem:[#allocation3 + $0x7] sm:$0x1] %vm1798, %v2060
    %v2063 = vcombine.high %v1759, %v1759
    %v2065 = vunpack.c.l.s4 1983009808
    %v2066 = vunpack.c.0.s8 %v2065
    %v2067 = vlaneseq
    %v2068 = vshrl.u32 %v2067, 7
    %v2069 = vsub.s32 %v2066, %v2068
    %v2070 = vrot.slane %v2063, %v2069
    %2071 = vrot.lane.b32.xlu0 %v2070, 64
    %v2072 = vpop.permute.xlu0 %2071
    %2074 = vst.msk [vmem:[#allocation3 + $0x6] sm:$0x1] %vm1815, %v2072
    %2075 = vrot.lane.b32.xlu0 %v2070, 48
    %v2076 = vpop.permute.xlu0 %2075
    %2078 = vst.msk [vmem:[#allocation3 + $0x7] sm:$0x1] %vm1815, %v2076
    %v2079 = vrot.slane %v2070, 7
    %v2080 = vrot.slane %v2079, 2
    %2081 = vrot.lane.b32.xlu0 %v2080, 80
    %v2082 = vpop.permute.xlu0 %2081
    %2084 = vst.msk [vmem:[#allocation3 + $0x6] sm:$0x1] %vm1826, %v2082
    %2085 = vrot.lane.b32.xlu0 %v2080, 64
    %v2086 = vpop.permute.xlu0 %2085
    %2088 = vst.msk [vmem:[#allocation3 + $0x7] sm:$0x1] %vm1826, %v2086
    %v2089 = vcombine.high %v2070, %v2070
    %2090 = vrot.lane.b32.xlu0 %v2089, 96
    %v2091 = vpop.permute.xlu0 %2090
    %2093 = vst.msk [vmem:[#allocation3 + $0x6] sm:$0x1] %vm1836, %v2091
    %2094 = vrot.lane.b32.xlu0 %v2089, 80
    %v2095 = vpop.permute.xlu0 %2094
    %2097 = vst.msk [vmem:[#allocation3 + $0x7] sm:$0x1] %vm1836, %v2095
    %v2098 = vrot.slane %v2089, 7
    %v2099 = vrot.slane %v2098, 2
    %2100 = vrot.lane.b32.xlu0 %v2099, 112
    %v2101 = vpop.permute.xlu0 %2100
    %2103 = vst.msk [vmem:[#allocation3 + $0x6] sm:$0x1] %vm1847, %v2101
    %2104 = vrot.lane.b32.xlu0 %v2099, 96
    %v2105 = vpop.permute.xlu0 %2104
    %2107 = vst.msk [vmem:[#allocation3 + $0x7] sm:$0x1] %vm1847, %v2105
    %v2108 = vld [vmem:[#allocation3] sm:$0xff]
    %v2109 = vld [vmem:[%s15] sm:$0xff]
    %v2110 = vld [vmem:[%s15 + $0x8] sm:$0xff]
    %v2111 = vld [vmem:[%s15 + $0x10] sm:$0xff]
    %v2112 = vld [vmem:[%s15 + $0x18] sm:$0xff]
    %v2113 = vld [vmem:[%s15 + $0x20] sm:$0xff]
    %v2114 = vld [vmem:[%s15 + $0x28] sm:$0xff]
    %v2115 = vld [vmem:[%s15 + $0x30] sm:$0xff]
    %v2116 = vld [vmem:[%s15 + $0x38] sm:$0xff]
    %v2117 = vld [vmem:[%s15 + $0x40] sm:$0xff]
    %v2118 = vld [vmem:[%s15 + $0x48] sm:$0xff]
    %v2119 = vld [vmem:[%s15 + $0x50] sm:$0xff]
    %v2120 = vld [vmem:[%s15 + $0x58] sm:$0xff]
    %v2121 = vld [vmem:[%s15 + $0x60] sm:$0xff]
    %v2122 = vld [vmem:[%s15 + $0x68] sm:$0xff]
    %v2123 = vld [vmem:[%s15 + $0x70] sm:$0xff]
    %v2124 = vld [vmem:[%s15 + $0x78] sm:$0xff]
    %v2125 = vld [vmem:[%s15 + $0x80] sm:$0xff]
    %v2126 = vld [vmem:[%s15 + $0x88] sm:$0xff]
    %v2127 = vld [vmem:[%s15 + $0x90] sm:$0xff]
    %v2128 = vld [vmem:[%s15 + $0x98] sm:$0xff]
    %v2129 = vld [vmem:[%s15 + $0xa0] sm:$0xff]
    %v2130 = vld [vmem:[%s15 + $0xa8] sm:$0xff]
    %v2131 = vld [vmem:[%s15 + $0xb0] sm:$0xff]
    %v2132 = vld [vmem:[%s15 + $0xb8] sm:$0xff]
    %v2133 = vld [vmem:[%s15 + $0xc0] sm:$0xff]
    %v2134 = vld [vmem:[%s15 + $0xc8] sm:$0xff]
    %v2135 = vld [vmem:[%s15 + $0xd0] sm:$0xff]
    %v2136 = vld [vmem:[%s15 + $0xd8] sm:$0xff]
    %v2137 = vld [vmem:[%s15 + $0xe0] sm:$0xff]
    %v2138 = vld [vmem:[%s15 + $0xe8] sm:$0xff]
    %v2139 = vld [vmem:[%s15 + $0xf0] sm:$0xff]
    %v2140 = vld [vmem:[%s15 + $0xf8] sm:$0xff]
    %v2141 = vld [vmem:[%s15 + $0x100] sm:$0xff]
    %v2142 = vld [vmem:[%s15 + $0x108] sm:$0xff]
    %v2143 = vld [vmem:[%s15 + $0x110] sm:$0xff]
    %v2144 = vld [vmem:[%s15 + $0x118] sm:$0xff]
    %v2145 = vld [vmem:[%s15 + $0x120] sm:$0xff]
    %v2146 = vld [vmem:[%s15 + $0x128] sm:$0xff]
    %v2147 = vld [vmem:[%s15 + $0x130] sm:$0xff]
    %v2148 = vld [vmem:[%s15 + $0x138] sm:$0xff]
    %v2149 = vld [vmem:[%s15 + $0x140] sm:$0xff]
    %v2150 = vld [vmem:[%s15 + $0x148] sm:$0xff]
    %v2151 = vld [vmem:[%s15 + $0x150] sm:$0xff]
    %v2152 = vld [vmem:[%s15 + $0x158] sm:$0xff]
    %v2153 = vld [vmem:[%s15 + $0x160] sm:$0xff]
    %v2154 = vld [vmem:[%s15 + $0x168] sm:$0xff]
    %v2155 = vld [vmem:[%s15 + $0x170] sm:$0xff]
    %v2156 = vld [vmem:[%s15 + $0x178] sm:$0xff]
    %v2157 = vld [vmem:[%s15 + $0x180] sm:$0xff]
    %v2158 = vld [vmem:[%s15 + $0x188] sm:$0xff]
    %v2159 = vld [vmem:[%s15 + $0x190] sm:$0xff]
    %v2160 = vld [vmem:[%s15 + $0x198] sm:$0xff]
    %v2161 = vld [vmem:[%s15 + $0x1a0] sm:$0xff]
    %v2162 = vld [vmem:[%s15 + $0x1a8] sm:$0xff]
    %v2163 = vld [vmem:[%s15 + $0x1b0] sm:$0xff]
    %v2164 = vld [vmem:[%s15 + $0x1b8] sm:$0xff]
    %v2165 = vld [vmem:[%s15 + $0x1c0] sm:$0xff]
    %v2166 = vld [vmem:[%s15 + $0x1c8] sm:$0xff]
    %v2167 = vld [vmem:[%s15 + $0x1d0] sm:$0xff]
    %v2168 = vld [vmem:[%s15 + $0x1d8] sm:$0xff]
    %v2169 = vld [vmem:[%s15 + $0x1e0] sm:$0xff]
    %v2170 = vld [vmem:[%s15 + $0x1e8] sm:$0xff]
    %v2171 = vld [vmem:[%s15 + $0x1f0] sm:$0xff]
    %v2172 = vld [vmem:[%s15 + $0x1f8] sm:$0xff]
    %v2173 = vld [vmem:[%s16] sm:$0x1]
    %v2175 = vlaneseq
    %v2176 = vshrl.u32 %v2175, 7
    %v2177 = vsub.s32 0, %v2176
    %v2178 = vrot.slane %v2173, %v2177
    %v2181 = vcombine.high %v2108, %v2108
    %v2183 = vunpack.c.l.s4 1983009808
    %v2184 = vunpack.c.0.s8 %v2183
    %v2185 = vlaneseq
    %v2186 = vshrl.u32 %v2185, 7
    %v2187 = vsub.s32 %v2184, %v2186
    %v2188 = vrot.slane %v2108, %v2187
    %v2190 = vunpack.c.l.s4 1983009808
    %v2191 = vunpack.c.0.s8 %v2190
    %v2192 = vlaneseq
    %v2193 = vshrl.u32 %v2192, 7
    %v2194 = vsub.s32 %v2191, %v2193
    %v2195 = vrot.slane %v2181, %v2194
    %v2196 = vcombine.high %v2188, %v2188
    %v2197 = vcombine.high %v2195, %v2195
    %2202 = vmatprep.subr.mxu0 0.0
    %2203 = vmatpush1.msra.mxu0 %v2109
    %2204 = vmatprep.subr.mxu0 0.0
    %2205 = vmatpush1.msra.mxu0 %v2110
    %2206 = vmatprep.subr.mxu0 0.0
    %2207 = vmatpush1.msra.mxu0 %v2111
    %2208 = vmatprep.subr.mxu0 0.0
    %2209 = vmatpush1.msra.mxu0 %v2112
    %2210 = vmatprep.subr.mxu0 0.0
    %2211 = vmatpush1.msra.mxu0 %v2113
    %2212 = vmatprep.subr.mxu0 0.0
    %2213 = vmatpush1.msra.mxu0 %v2114
    %2214 = vmatprep.subr.mxu0 0.0
    %2215 = vmatpush1.msra.mxu0 %v2115
    %2216 = vmatprep.subr.mxu0 0.0
    %2217 = vmatpush1.msra.mxu0 %v2116
    %2218 = vmatprep.subr.mxu0 0.0
    %2219 = vmatpush1.msra.mxu0 %v2117
    %2220 = vmatprep.subr.mxu0 0.0
    %2221 = vmatpush1.msra.mxu0 %v2118
    %2222 = vmatprep.subr.mxu0 0.0
    %2223 = vmatpush1.msra.mxu0 %v2119
    %2224 = vmatprep.subr.mxu0 0.0
    %2225 = vmatpush1.msra.mxu0 %v2120
    %2226 = vmatprep.subr.mxu0 0.0
    %2227 = vmatpush1.msra.mxu0 %v2121
    %2228 = vmatprep.subr.mxu0 0.0
    %2229 = vmatpush1.msra.mxu0 %v2122
    %2230 = vmatprep.subr.mxu0 0.0
    %2231 = vmatpush1.msra.mxu0 %v2123
    %2232 = vmatprep.subr.mxu0 0.0
    %2233 = vmatpush1.msra.mxu0 %v2124
    %2234 = vmatprep.subr.mxu0 0.0
    %2235 = vmatpush1.msra.mxu0 %v2125
    %2236 = vmatprep.subr.mxu0 0.0
    %2237 = vmatpush1.msra.mxu0 %v2126
    %2238 = vmatprep.subr.mxu0 0.0
    %2239 = vmatpush1.msra.mxu0 %v2127
    %2240 = vmatprep.subr.mxu0 0.0
    %2241 = vmatpush1.msra.mxu0 %v2128
    %2242 = vmatprep.subr.mxu0 0.0
    %2243 = vmatpush1.msra.mxu0 %v2129
    %2244 = vmatprep.subr.mxu0 0.0
    %2245 = vmatpush1.msra.mxu0 %v2130
    %2246 = vmatprep.subr.mxu0 0.0
    %2247 = vmatpush1.msra.mxu0 %v2131
    %2248 = vmatprep.subr.mxu0 0.0
    %2249 = vmatpush1.msra.mxu0 %v2132
    %2250 = vmatprep.subr.mxu0 0.0
    %2251 = vmatpush1.msra.mxu0 %v2133
    %2252 = vmatprep.subr.mxu0 0.0
    %2253 = vmatpush1.msra.mxu0 %v2134
    %2254 = vmatprep.subr.mxu0 0.0
    %2255 = vmatpush1.msra.mxu0 %v2135
    %2256 = vmatprep.subr.mxu0 0.0
    %2257 = vmatpush1.msra.mxu0 %v2136
    %2258 = vmatprep.subr.mxu0 0.0
    %2259 = vmatpush1.msra.mxu0 %v2137
    %2260 = vmatprep.subr.mxu0 0.0
    %2261 = vmatpush1.msra.mxu0 %v2138
    %2262 = vmatprep.subr.mxu0 0.0
    %2263 = vmatpush1.msra.mxu0 %v2139
    %2264 = vmatprep.subr.mxu0 0.0
    %2265 = vmatpush1.msra.mxu0 %v2140
    %2266 = vmatprep.mubr.f32.mxu0 %v2196
    %2267 = vmatmul.mubr.f32.gmra.mrb[0].mxu0 %v2188
    %v2268 = vpop.f32.mrb[0].mxu0
    %v2269 = vadd.f32 %v2178, %v2268
    %v2270 = vpop.f32.mrb[0].mxu0
    %2271 = vdwg.mxu0
    %2272 = vmatprep.subr.mxu0 0.0
    %2273 = vmatpush1.msra.mxu0 %v2141
    %2274 = vmatprep.subr.mxu0 0.0
    %2275 = vmatpush1.msra.mxu0 %v2142
    %2276 = vmatprep.subr.mxu0 0.0
    %2277 = vmatpush1.msra.mxu0 %v2143
    %2278 = vmatprep.subr.mxu0 0.0
    %2279 = vmatpush1.msra.mxu0 %v2144
    %2280 = vmatprep.subr.mxu0 0.0
    %2281 = vmatpush1.msra.mxu0 %v2145
    %2282 = vmatprep.subr.mxu0 0.0
    %2283 = vmatpush1.msra.mxu0 %v2146
    %2284 = vmatprep.subr.mxu0 0.0
    %2285 = vmatpush1.msra.mxu0 %v2147
    %2286 = vmatprep.subr.mxu0 0.0
    %2287 = vmatpush1.msra.mxu0 %v2148
    %2288 = vmatprep.subr.mxu0 0.0
    %2289 = vmatpush1.msra.mxu0 %v2149
    %2290 = vmatprep.subr.mxu0 0.0
    %2291 = vmatpush1.msra.mxu0 %v2150
    %2292 = vmatprep.subr.mxu0 0.0
    %2293 = vmatpush1.msra.mxu0 %v2151
    %2294 = vmatprep.subr.mxu0 0.0
    %2295 = vmatpush1.msra.mxu0 %v2152
    %2296 = vmatprep.subr.mxu0 0.0
    %2297 = vmatpush1.msra.mxu0 %v2153
    %2298 = vmatprep.subr.mxu0 0.0
    %2299 = vmatpush1.msra.mxu0 %v2154
    %2300 = vmatprep.subr.mxu0 0.0
    %2301 = vmatpush1.msra.mxu0 %v2155
    %2302 = vmatprep.subr.mxu0 0.0
    %2303 = vmatpush1.msra.mxu0 %v2156
    %2304 = vmatprep.subr.mxu0 0.0
    %2305 = vmatpush1.msra.mxu0 %v2157
    %2306 = vmatprep.subr.mxu0 0.0
    %2307 = vmatpush1.msra.mxu0 %v2158
    %2308 = vmatprep.subr.mxu0 0.0
    %2309 = vmatpush1.msra.mxu0 %v2159
    %2310 = vmatprep.subr.mxu0 0.0
    %2311 = vmatpush1.msra.mxu0 %v2160
    %2312 = vmatprep.subr.mxu0 0.0
    %2313 = vmatpush1.msra.mxu0 %v2161
    %2314 = vmatprep.subr.mxu0 0.0
    %2315 = vmatpush1.msra.mxu0 %v2162
    %2316 = vmatprep.subr.mxu0 0.0
    %2317 = vmatpush1.msra.mxu0 %v2163
    %2318 = vmatprep.subr.mxu0 0.0
    %2319 = vmatpush1.msra.mxu0 %v2164
    %2320 = vmatprep.subr.mxu0 0.0
    %2321 = vmatpush1.msra.mxu0 %v2165
    %2322 = vmatprep.subr.mxu0 0.0
    %2323 = vmatpush1.msra.mxu0 %v2166
    %2324 = vmatprep.subr.mxu0 0.0
    %2325 = vmatpush1.msra.mxu0 %v2167
    %2326 = vmatprep.subr.mxu0 0.0
    %2327 = vmatpush1.msra.mxu0 %v2168
    %2328 = vmatprep.subr.mxu0 0.0
    %2329 = vmatpush1.msra.mxu0 %v2169
    %2330 = vmatprep.subr.mxu0 0.0
    %2331 = vmatpush1.msra.mxu0 %v2170
    %2332 = vmatprep.subr.mxu0 0.0
    %2333 = vmatpush1.msra.mxu0 %v2171
    %2334 = vmatprep.subr.mxu0 0.0
    %2335 = vmatpush1.msra.mxu0 %v2172
    %2336 = vmatprep.mubr.f32.mxu0 %v2197
    %2337 = vmatmul.mubr.f32.gmra.mrb[0].mxu0 %v2195
    %v2338 = vpop.f32.mrb[0].mxu0
    %v2339 = vadd.f32 %v2269, %v2338
    %v2340 = vpop.f32.mrb[0].mxu0
    %2341 = vdwg.mxu0
    %v2342 = vmax.f32 %v2339, 0.0
    %v2343 = vld [vmem:[%s17] sm:$0xff]
    %v2344 = vld [vmem:[%s17 + $0x8] sm:$0xff]
    %v2345 = vld [vmem:[%s17 + $0x10] sm:$0xff]
    %v2346 = vld [vmem:[%s17 + $0x18] sm:$0xff]
    %v2347 = vld [vmem:[%s17 + $0x20] sm:$0xff]
    %v2348 = vld [vmem:[%s17 + $0x28] sm:$0xff]
    %v2349 = vld [vmem:[%s17 + $0x30] sm:$0xff]
    %v2350 = vld [vmem:[%s17 + $0x38] sm:$0xff]
    %v2351 = vld [vmem:[%s18] sm:$0x1]
    %v2353 = vlaneseq
    %v2354 = vshrl.u32 %v2353, 7
    %v2355 = vsub.s32 0, %v2354
    %v2356 = vrot.slane %v2351, %v2355
    %v2359 = vsel %vm1349, %v2342, 0
    %2361 = vmatprep.subr.mxu0 0.0
    %2362 = vmatpush1.msra.mxu0 %v2343
    %2363 = vmatprep.subr.mxu0 0.0
    %2364 = vmatpush1.msra.mxu0 %v2344
    %2365 = vmatprep.subr.mxu0 0.0
    %2366 = vmatpush1.msra.mxu0 %v2345
    %2367 = vmatprep.subr.mxu0 0.0
    %2368 = vmatpush1.msra.mxu0 %v2346
    %2369 = vmatprep.subr.mxu0 0.0
    %2370 = vmatpush1.msra.mxu0 %v2347
    %2371 = vmatprep.subr.mxu0 0.0
    %2372 = vmatpush1.msra.mxu0 %v2348
    %2373 = vmatprep.subr.mxu0 0.0
    %2374 = vmatpush1.msra.mxu0 %v2349
    %2375 = vmatprep.subr.mxu0 0.0
    %2376 = vmatpush1.msra.mxu0 %v2350
    %2377 = vmatprep.subr.mxu0 0.0
    %2378 = vmatpush1.msra.mxu0 0.0
    %2379 = vmatprep.subr.mxu0 0.0
    %2380 = vmatpush1.msra.mxu0 0.0
    %2381 = vmatprep.subr.mxu0 0.0
    %2382 = vmatpush1.msra.mxu0 0.0
    %2383 = vmatprep.subr.mxu0 0.0
    %2384 = vmatpush1.msra.mxu0 0.0
    %2385 = vmatprep.subr.mxu0 0.0
    %2386 = vmatpush1.msra.mxu0 0.0
    %2387 = vmatprep.subr.mxu0 0.0
    %2388 = vmatpush1.msra.mxu0 0.0
    %2389 = vmatprep.subr.mxu0 0.0
    %2390 = vmatpush1.msra.mxu0 0.0
    %2391 = vmatprep.subr.mxu0 0.0
    %2392 = vmatpush1.msra.mxu0 0.0
    %2393 = vmatprep.subr.mxu0 0.0
    %2394 = vmatpush1.msra.mxu0 0.0
    %2395 = vmatprep.subr.mxu0 0.0
    %2396 = vmatpush1.msra.mxu0 0.0
    %2397 = vmatprep.subr.mxu0 0.0
    %2398 = vmatpush1.msra.mxu0 0.0
    %2399 = vmatprep.subr.mxu0 0.0
    %2400 = vmatpush1.msra.mxu0 0.0
    %2401 = vmatprep.subr.mxu0 0.0
    %2402 = vmatpush1.msra.mxu0 0.0
    %2403 = vmatprep.subr.mxu0 0.0
    %2404 = vmatpush1.msra.mxu0 0.0
    %2405 = vmatprep.subr.mxu0 0.0
    %2406 = vmatpush1.msra.mxu0 0.0
    %2407 = vmatprep.subr.mxu0 0.0
    %2408 = vmatpush1.msra.mxu0 0.0
    %2409 = vmatprep.subr.mxu0 0.0
    %2410 = vmatpush1.msra.mxu0 0.0
    %2411 = vmatprep.subr.mxu0 0.0
    %2412 = vmatpush1.msra.mxu0 0.0
    %2413 = vmatprep.subr.mxu0 0.0
    %2414 = vmatpush1.msra.mxu0 0.0
    %2415 = vmatprep.subr.mxu0 0.0
    %2416 = vmatpush1.msra.mxu0 0.0
    %2417 = vmatprep.subr.mxu0 0.0
    %2418 = vmatpush1.msra.mxu0 0.0
    %2419 = vmatprep.subr.mxu0 0.0
    %2420 = vmatpush1.msra.mxu0 0.0
    %2421 = vmatprep.subr.mxu0 0.0
    %2422 = vmatpush1.msra.mxu0 0.0
    %2423 = vmatprep.subr.mxu0 0.0
    %2424 = vmatpush1.msra.mxu0 0.0
    %2425 = vmatprep.mubr.f32.mxu0 0.0
    %2426 = vmatmul.mubr.f32.gmra.mrb[0].mxu0 %v2359
    %v2427 = vpop.f32.mrb[0].mxu0
    %v2428 = vadd.f32 %v2356, %v2427
    %v2429 = vpop.f32.mrb[0].mxu0
    %2430 = vdwg.mxu0
    %v2431 = vmax.f32 %v2428, 0.0
    %v2432 = vld [vmem:[%s19] sm:$0xff]
    %v2433 = vld [vmem:[%s19 + $0x8] sm:$0xff]
    %v2434 = vld [vmem:[%s19 + $0x10] sm:$0xff]
    %v2435 = vld [vmem:[%s19 + $0x18] sm:$0xff]
    %v2436 = vld [vmem:[%s20] sm:$0x1]
    %v2438 = vlaneseq
    %v2439 = vshrl.u32 %v2438, 7
    %v2440 = vsub.s32 0, %v2439
    %v2441 = vrot.slane %v2436, %v2440
    %v2444 = vsel %vm99, %v2431, 0
    %2446 = vmatprep.subr.mxu0 0.0
    %2447 = vmatpush1.msra.mxu0 %v2432
    %2448 = vmatprep.subr.mxu0 0.0
    %2449 = vmatpush1.msra.mxu0 %v2433
    %2450 = vmatprep.subr.mxu0 0.0
    %2451 = vmatpush1.msra.mxu0 %v2434
    %2452 = vmatprep.subr.mxu0 0.0
    %2453 = vmatpush1.msra.mxu0 %v2435
    %2454 = vmatprep.subr.mxu0 0.0
    %2455 = vmatpush1.msra.mxu0 0.0
    %2456 = vmatprep.subr.mxu0 0.0
    %2457 = vmatpush1.msra.mxu0 0.0
    %2458 = vmatprep.subr.mxu0 0.0
    %2459 = vmatpush1.msra.mxu0 0.0
    %2460 = vmatprep.subr.mxu0 0.0
    %2461 = vmatpush1.msra.mxu0 0.0
    %2462 = vmatprep.subr.mxu0 0.0
    %2463 = vmatpush1.msra.mxu0 0.0
    %2464 = vmatprep.subr.mxu0 0.0
    %2465 = vmatpush1.msra.mxu0 0.0
    %2466 = vmatprep.subr.mxu0 0.0
    %2467 = vmatpush1.msra.mxu0 0.0
    %2468 = vmatprep.subr.mxu0 0.0
    %2469 = vmatpush1.msra.mxu0 0.0
    %2470 = vmatprep.subr.mxu0 0.0
    %2471 = vmatpush1.msra.mxu0 0.0
    %2472 = vmatprep.subr.mxu0 0.0
    %2473 = vmatpush1.msra.mxu0 0.0
    %2474 = vmatprep.subr.mxu0 0.0
    %2475 = vmatpush1.msra.mxu0 0.0
    %2476 = vmatprep.subr.mxu0 0.0
    %2477 = vmatpush1.msra.mxu0 0.0
    %2478 = vmatprep.subr.mxu0 0.0
    %2479 = vmatpush1.msra.mxu0 0.0
    %2480 = vmatprep.subr.mxu0 0.0
    %2481 = vmatpush1.msra.mxu0 0.0
    %2482 = vmatprep.subr.mxu0 0.0
    %2483 = vmatpush1.msra.mxu0 0.0
    %2484 = vmatprep.subr.mxu0 0.0
    %2485 = vmatpush1.msra.mxu0 0.0
    %2486 = vmatprep.subr.mxu0 0.0
    %2487 = vmatpush1.msra.mxu0 0.0
    %2488 = vmatprep.subr.mxu0 0.0
    %2489 = vmatpush1.msra.mxu0 0.0
    %2490 = vmatprep.subr.mxu0 0.0
    %2491 = vmatpush1.msra.mxu0 0.0
    %2492 = vmatprep.subr.mxu0 0.0
    %2493 = vmatpush1.msra.mxu0 0.0
    %2494 = vmatprep.subr.mxu0 0.0
    %2495 = vmatpush1.msra.mxu0 0.0
    %2496 = vmatprep.subr.mxu0 0.0
    %2497 = vmatpush1.msra.mxu0 0.0
    %2498 = vmatprep.subr.mxu0 0.0
    %2499 = vmatpush1.msra.mxu0 0.0
    %2500 = vmatprep.subr.mxu0 0.0
    %2501 = vmatpush1.msra.mxu0 0.0
    %2502 = vmatprep.subr.mxu0 0.0
    %2503 = vmatpush1.msra.mxu0 0.0
    %2504 = vmatprep.subr.mxu0 0.0
    %2505 = vmatpush1.msra.mxu0 0.0
    %2506 = vmatprep.subr.mxu0 0.0
    %2507 = vmatpush1.msra.mxu0 0.0
    %2508 = vmatprep.subr.mxu0 0.0
    %2509 = vmatpush1.msra.mxu0 0.0
    %2510 = vmatprep.mubr.f32.mxu0 0.0
    %2511 = vmatmul.mubr.f32.gmra.mrb[0].mxu0 %v2444
    %v2512 = vpop.f32.mrb[0].mxu0
    %v2513 = vadd.f32 %v2441, %v2512
    %v2514 = vpop.f32.mrb[0].mxu0
    %2515 = vdwg.mxu0
    %v2516 = vmax.f32 %v2513, 0.0
    %v2517 = vld [vmem:[%s21] sm:$0xff]
    %v2518 = vld [vmem:[%s21 + $0x8] sm:$0xff]
    %v2519 = vld [vmem:[%s22] sm:$0x1]
    %v2521 = vlaneseq
    %v2522 = vshrl.u32 %v2521, 7
    %v2523 = vsub.s32 0, %v2522
    %v2524 = vrot.slane %v2519, %v2523
    %vm2526 = vcmask 130048
    %v2528 = vsel %vm2526, %v2516, 0
    %2530 = vmatprep.subr.mxu0 0.0
    %2531 = vmatpush1.msra.mxu0 %v2517
    %2532 = vmatprep.subr.mxu0 0.0
    %2533 = vmatpush1.msra.mxu0 %v2518
    %2534 = vmatprep.subr.mxu0 0.0
    %2535 = vmatpush1.msra.mxu0 0.0
    %2536 = vmatprep.subr.mxu0 0.0
    %2537 = vmatpush1.msra.mxu0 0.0
    %2538 = vmatprep.subr.mxu0 0.0
    %2539 = vmatpush1.msra.mxu0 0.0
    %2540 = vmatprep.subr.mxu0 0.0
    %2541 = vmatpush1.msra.mxu0 0.0
    %2542 = vmatprep.subr.mxu0 0.0
    %2543 = vmatpush1.msra.mxu0 0.0
    %2544 = vmatprep.subr.mxu0 0.0
    %2545 = vmatpush1.msra.mxu0 0.0
    %2546 = vmatprep.subr.mxu0 0.0
    %2547 = vmatpush1.msra.mxu0 0.0
    %2548 = vmatprep.subr.mxu0 0.0
    %2549 = vmatpush1.msra.mxu0 0.0
    %2550 = vmatprep.subr.mxu0 0.0
    %2551 = vmatpush1.msra.mxu0 0.0
    %2552 = vmatprep.subr.mxu0 0.0
    %2553 = vmatpush1.msra.mxu0 0.0
    %2554 = vmatprep.subr.mxu0 0.0
    %2555 = vmatpush1.msra.mxu0 0.0
    %2556 = vmatprep.subr.mxu0 0.0
    %2557 = vmatpush1.msra.mxu0 0.0
    %2558 = vmatprep.subr.mxu0 0.0
    %2559 = vmatpush1.msra.mxu0 0.0
    %2560 = vmatprep.subr.mxu0 0.0
    %2561 = vmatpush1.msra.mxu0 0.0
    %2562 = vmatprep.subr.mxu0 0.0
    %2563 = vmatpush1.msra.mxu0 0.0
    %2564 = vmatprep.subr.mxu0 0.0
    %2565 = vmatpush1.msra.mxu0 0.0
    %2566 = vmatprep.subr.mxu0 0.0
    %2567 = vmatpush1.msra.mxu0 0.0
    %2568 = vmatprep.subr.mxu0 0.0
    %2569 = vmatpush1.msra.mxu0 0.0
    %2570 = vmatprep.subr.mxu0 0.0
    %2571 = vmatpush1.msra.mxu0 0.0
    %2572 = vmatprep.subr.mxu0 0.0
    %2573 = vmatpush1.msra.mxu0 0.0
    %2574 = vmatprep.subr.mxu0 0.0
    %2575 = vmatpush1.msra.mxu0 0.0
    %2576 = vmatprep.subr.mxu0 0.0
    %2577 = vmatpush1.msra.mxu0 0.0
    %2578 = vmatprep.subr.mxu0 0.0
    %2579 = vmatpush1.msra.mxu0 0.0
    %2580 = vmatprep.subr.mxu0 0.0
    %2581 = vmatpush1.msra.mxu0 0.0
    %2582 = vmatprep.subr.mxu0 0.0
    %2583 = vmatpush1.msra.mxu0 0.0
    %2584 = vmatprep.subr.mxu0 0.0
    %2585 = vmatpush1.msra.mxu0 0.0
    %2586 = vmatprep.subr.mxu0 0.0
    %2587 = vmatpush1.msra.mxu0 0.0
    %2588 = vmatprep.subr.mxu0 0.0
    %2589 = vmatpush1.msra.mxu0 0.0
    %2590 = vmatprep.subr.mxu0 0.0
    %2591 = vmatpush1.msra.mxu0 0.0
    %2592 = vmatprep.subr.mxu0 0.0
    %2593 = vmatpush1.msra.mxu0 0.0
    %2594 = vmatprep.mubr.f32.mxu0 0.0
    %2595 = vmatmul.mubr.f32.gmra.mrb[0].mxu0 %v2528
    %v2596 = vpop.f32.mrb[0].mxu0
    %v2597 = vadd.f32 %v2524, %v2596
    %v2598 = vpop.f32.mrb[0].mxu0
    %2599 = vdwg.mxu0
    %vm2600 = vcmask 33792
    %2601 = vst.msk [vmem:[#allocation4] sm:$0x3] %vm2600, %v2597
    // Predicated region
    $region94: #{_mscnn_forward.1} parent=1 // pred_check
      _
    $region95: #{_mscnn_forward.1} parent=1 // pred_check_branch
      %2603 = sbr.rel (0) target = $region97
    $region96: #{_mscnn_forward.1} parent=1 // pred_region
      %s2605 = ssub.s32 32, 32
      %2606 = vsyncadd [#allocation5], %s2605
      %s2608 = sshll.u32 [#allocation4], 4
      %s2609 = int_to_ptr.vmem [resolvable:$true] %s2608
      %2611 = dma.vmem_to_hbm [thread:$0]  %s2609, 32, %s23, [#allocation5]
    $region97: #{_mscnn_forward.1} parent=1 // pred_fallthru
      _
    // Predicated region
    $region98: #{_mscnn_forward.1} parent=1 // pred_check
      _
    $region99: #{_mscnn_forward.1} parent=1 // pred_check_branch
      %2613 = sbr.rel (0) target = $region101
    $region100: #{_mscnn_forward.1} parent=1 // pred_region
      %2614 = dma.done [#allocation5], 32
    $region101: #{_mscnn_forward.1} parent=1 // pred_fallthru
      _
    %2615 = vsyncpa [#allocation5], 1

</llo_original>
